<compile_context>
chip_gen: v7x
topology: tpu7x:2x2x1
jax: 0.10.0
libtpu: 0.0.40
codegen_flags: <defaults>
</compile_context>

<pallas_src>
import functools
import math

import jax
import jax.numpy as jnp
from jax.experimental import pallas as pl
from jax.experimental.pallas import tpu as pltpu


def _swish(x):
    return x * jax.nn.sigmoid(x)


# ---------------------------------------------------------------------------
# Pallas kernels
# ---------------------------------------------------------------------------

def _gnn_stack_kernel(
    node_in_ref, g_src_ref, g_dst_ref, a_mean_ref, estat_ref, varp_ref, asig_ref,
    ew1_ref, eb1_ref, ew2_ref, eb2_ref,
    mw1_ref, mb1_ref, mw2_ref, mb2_ref,
    uw1_ref, ub1_ref, uw2_ref, ub2_ref,
    h_out_ref, h_scratch,
    *, num_graphs, nodes_per_graph,
):
    """One grid step == one GNN layer; h is carried in VMEM scratch across layers."""
    l = pl.program_id(0)

    # Layer 0: embedding MLP  h = swish(swish(node_in @ W1 + b1) @ W2 + b2)
    @pl.when(l == 0)
    def _():
        e0 = _swish(jnp.dot(node_in_ref[...], ew1_ref[...],
                            preferred_element_type=jnp.float32) + eb1_ref[...])
        h_scratch[...] = _swish(jnp.dot(e0, ew2_ref[...],
                                        preferred_element_type=jnp.float32) + eb2_ref[...])

    h = h_scratch[...]

    # ---- message: gather x_i (targets) / x_j (sources) as dense one-hot matmuls (MXU) ----
    x_i = jnp.dot(g_dst_ref[...], h, preferred_element_type=jnp.float32)     # (E_pad, H)
    x_j = jnp.dot(g_src_ref[...], h, preferred_element_type=jnp.float32)     # (E_pad, H)
    estat = estat_ref[...]                      # [pos_i-pos_j, var_i, u_i-u_j, 0...]
    edge_in = jnp.concatenate([x_i, x_j, estat], axis=-1)                    # (E_pad, 2H+128)

    m = _swish(jnp.dot(edge_in, mw1_ref[...],
                       preferred_element_type=jnp.float32) + mb1_ref[...])
    m = _swish(jnp.dot(m, mw2_ref[...],
                       preferred_element_type=jnp.float32) + mb2_ref[...])

    # gaussian kernel weight: a * exp(-||pos_i - pos_j||^2 / sigma)  (1-D positions)
    a = asig_ref[l, 0]
    sigma = asig_ref[l, 1]
    p_diff = estat[:, 0:1]
    kw = a * jnp.exp(-(p_diff * p_diff) / sigma)
    m = m * kw

    # ---- mean aggregation over incoming edges (dense normalized incidence matmul) ----
    agg = jnp.dot(a_mean_ref[...], m, preferred_element_type=jnp.float32)    # (N, H)

    # ---- update MLP + residual ----
    upd_in = jnp.concatenate([h, agg, varp_ref[...]], axis=-1)               # (N, 2H+128)
    up = _swish(jnp.dot(upd_in, uw1_ref[...],
                        preferred_element_type=jnp.float32) + ub1_ref[...])
    up = _swish(jnp.dot(up, uw2_ref[...],
                        preferred_element_type=jnp.float32) + ub2_ref[...])
    h_new = h + up

    # ---- InstanceNorm (affine=False) per graph; graphs are contiguous equal-size blocks.
    # TODO(synk): general PyG batches (variable-size / non-contiguous graphs) need a
    # per-node graph-id path instead of static slicing.
    for g in range(num_graphs):
        r0 = g * nodes_per_graph
        blk = h_new[r0:r0 + nodes_per_graph, :]
        mean = jnp.mean(blk, axis=0, keepdims=True)
        cen = blk - mean
        var = jnp.mean(cen * cen, axis=0, keepdims=True)       # biased variance (PyG)
        h_scratch[r0:r0 + nodes_per_graph, :] = cen * jax.lax.rsqrt(var + 1e-5)

    h_out_ref[...] = h_scratch[...]


def _output_head_kernel(h_ref, u_last_ref, dt_ref, w1e_ref, b1e_ref, w2e_ref, b2_ref,
                        out_ref):
    """Conv1d(1,8,12,s=2)+Swish+Conv1d(8,1,10) as two dense banded matmuls + fused epilogue."""
    y = _swish(jnp.dot(h_ref[...], w1e_ref[...],
                       preferred_element_type=jnp.float32) + b1e_ref[...])
    diff = jnp.dot(y, w2e_ref[...], preferred_element_type=jnp.float32) + b2_ref[...]
    out_ref[...] = u_last_ref[...] + dt_ref[...] * diff


# ---------------------------------------------------------------------------
# Parameter init (torch-native layouts, synthetic) and packing for the kernels
# ---------------------------------------------------------------------------

def _torch_linear(key, fan_in, fan_out):
    k1, k2 = jax.random.split(key)
    bound = 1.0 / math.sqrt(fan_in)
    w = jax.random.uniform(k1, (fan_out, fan_in), jnp.float32, -bound, bound)  # torch (out, in)
    b = jax.random.uniform(k2, (fan_out,), jnp.float32, -bound, bound)
    return w, b


def init_params(key, tw, hidden, n_layers, n_vars, sigma):
    H = hidden
    keys = jax.random.split(key, n_layers + 2)
    params = {}

    ke = jax.random.split(keys[0], 2)
    params["emb"] = (_torch_linear(ke[0], tw + 1 + n_vars, H),
                     _torch_linear(ke[1], H, H))

    layers = []
    for l in range(n_layers):
        kl = jax.random.split(keys[1 + l], 4)
        layers.append(dict(
            m1=_torch_linear(kl[0], 2 * H + tw + 1 + n_vars, H),
            m2=_torch_linear(kl[1], H, H),
            u1=_torch_linear(kl[2], H + H + n_vars, H),
            u2=_torch_linear(kl[3], H, H),
            a=jnp.float32(1.0),
            sigma=jnp.float32(sigma),
        ))
    params["gnn"] = layers

    # output_mlp for time_window == 50, torch Conv1d layouts: weight (out_ch, in_ch, k)
    kc = jax.random.split(keys[-1], 4)
    b1 = 1.0 / math.sqrt(1 * 12)
    b2 = 1.0 / math.sqrt(8 * 10)
    params["conv"] = dict(
        w1=jax.random.uniform(kc[0], (8, 1, 12), jnp.float32, -b1, b1),
        b1=jax.random.uniform(kc[1], (8,), jnp.float32, -b1, b1),
        w2=jax.random.uniform(kc[2], (1, 8, 10), jnp.float32, -b2, b2),
        b2=jax.random.uniform(kc[3], (1,), jnp.float32, -b2, b2),
    )
    return params


def _expand_conv_weights(conv, hidden, tw):
    """Expand the two Conv1d weights into dense, lane-aligned matmul operands."""
    oc1, k1, s1 = 8, 12, 2
    k2 = 10
    l1 = (hidden - k1) // s1 + 1          # 59
    l2 = l1 - k2 + 1                      # 50 == time_window
    assert l2 == tw, "hidden_features must make the Conv1d output length == time_window"
    w1 = conv["w1"].reshape(oc1, k1)
    w2 = conv["w2"].reshape(oc1, k2)

    # W1exp[j, p*oc1 + c] = w1[c, k]  where j = s1*p + k
    p = jnp.arange(l1); k = jnp.arange(k1); c = jnp.arange(oc1)
    rows = (s1 * p[:, None, None] + k[None, :, None] + 0 * c[None, None, :]).reshape(-1)
    cols = (oc1 * p[:, None, None] + 0 * k[None, :, None] + c[None, None, :]).reshape(-1)
    vals = jnp.broadcast_to(w1.T[None, :, :], (l1, k1, oc1)).reshape(-1)
    w1e = jnp.zeros((hidden, l1 * oc1), jnp.float32).at[rows, cols].set(vals)
    b1e = jnp.tile(conv["b1"], (l1,)).reshape(1, l1 * oc1)

    # W2exp[p*oc1 + c, q] = w2[c, p - q]   for 0 <= p - q < k2
    q = jnp.arange(l2); kk = jnp.arange(k2)
    rows2 = (oc1 * (q[:, None, None] + kk[None, :, None]) + c[None, None, :]).reshape(-1)
    cols2 = (q[:, None, None] + 0 * kk[None, :, None] + 0 * c[None, None, :]).reshape(-1)
    vals2 = jnp.broadcast_to(w2.T[None, :, :], (l2, k2, oc1)).reshape(-1)
    w2e = jnp.zeros((l1 * oc1, l2), jnp.float32).at[rows2, cols2].set(vals2)

    # pad the contraction width 472 -> 512 (multiple of 128)
    kexp = ((l1 * oc1 + 127) // 128) * 128
    w1e = jnp.pad(w1e, ((0, 0), (0, kexp - l1 * oc1)))
    b1e = jnp.pad(b1e, ((0, 0), (0, kexp - l1 * oc1)))
    w2e = jnp.pad(w2e, ((0, kexp - l1 * oc1), (0, 0)))
    b2row = jnp.broadcast_to(conv["b2"].reshape(1, 1), (1, l2))
    return w1e, b1e, w2e, b2row


def pack_params(params, *, tw, hidden, n_vars):
    """Re-layout torch-style weights into the padded / stacked arrays the kernels use."""
    H = hidden
    assert 1 + n_vars + tw <= 128
    km = 2 * H + tw + 1 + n_vars        # message_net_1 input width (308)
    ku = 2 * H + n_vars                 # update_net_1 input width  (257)
    ke = tw + 1 + n_vars                # embedding input width     (52)
    kpad = 2 * H + 128                  # padded concat width used in-kernel (384)

    (ew1, eb1), (ew2, eb2) = params["emb"]
    packed = dict(
        ew1=jnp.pad(ew1.T, ((0, 128 - ke), (0, 0))),
        eb1=eb1.reshape(1, H),
        ew2=ew2.T,
        eb2=eb2.reshape(1, H),
    )

    mw1, mb1, mw2, mb2 = [], [], [], []
    uw1, ub1, uw2, ub2 = [], [], [], []
    asig = []
    for layer in params["gnn"]:
        w1, b1 = layer["m1"]; w2, b2 = layer["m2"]
        wt = w1.T                                    # (km, H): [x_i | x_j | u | pos | var]
        # in-kernel edge layout: [x_i | x_j | pos_diff, var_i, u_diff, zero pad]
        reordered = jnp.concatenate(
            [wt[:2 * H],
             wt[2 * H + tw: 2 * H + tw + 1 + n_vars],
             wt[2 * H: 2 * H + tw]], axis=0)
        mw1.append(jnp.pad(reordered, ((0, kpad - km), (0, 0))))
        mb1.append(b1.reshape(1, H))
        mw2.append(w2.T)
        mb2.append(b2.reshape(1, H))

        w1u, b1u = layer["u1"]; w2u, b2u = layer["u2"]
        uw1.append(jnp.pad(w1u.T, ((0, kpad - ku), (0, 0))))
        ub1.append(b1u.reshape(1, H))
        uw2.append(w2u.T)
        ub2.append(b2u.reshape(1, H))
        asig.append(jnp.stack([layer["a"], layer["sigma"]]))

    packed.update(
        mw1=jnp.stack(mw1), mb1=jnp.stack(mb1), mw2=jnp.stack(mw2), mb2=jnp.stack(mb2),
        uw1=jnp.stack(uw1), ub1=jnp.stack(ub1), uw2=jnp.stack(uw2), ub2=jnp.stack(ub2),
        asig=jnp.stack(asig).astype(jnp.float32),
    )

    w1e, b1e, w2e, b2row = _expand_conv_weights(params["conv"], hidden, tw)
    packed.update(w1e=w1e, b1e=b1e, w2e=w2e, b2row=b2row)
    return packed


# ---------------------------------------------------------------------------
# Forward pass
# ---------------------------------------------------------------------------

def mp_pde_solver_forward(packed, u, pos, edge_index, *, pde, tw, hidden, n_vars,
                          n_layers, nodes_per_graph, num_graphs):
    n = u.shape[0]
    H = hidden
    assert n == num_graphs * nodes_per_graph

    pos_x = pos[:, 1:2] / pde["L"]
    pos_t = pos[:, 0:1] / pde["tmax"]
    variables = pos_t                          # eq_variables = {}  -> n_variables = 1

    node_in = jnp.concatenate([u, pos_x, variables], axis=-1)
    node_in = jnp.pad(node_in, ((0, 0), (0, 128 - node_in.shape[1])))
    varp = jnp.pad(variables, ((0, 0), (0, 128 - variables.shape[1])))

    # dense gather / mean-aggregation operators (small one-time XLA prep per forward)
    src = edge_index[0]
    dst = edge_index[1]
    n_edges = src.shape[0]
    e_pad = ((n_edges + 127) // 128) * 128
    g_src = jnp.pad(jax.nn.one_hot(src, n, dtype=jnp.float32),
                    ((0, e_pad - n_edges), (0, 0)))
    g_dst = jnp.pad(jax.nn.one_hot(dst, n, dtype=jnp.float32),
                    ((0, e_pad - n_edges), (0, 0)))
    deg = jnp.sum(g_dst, axis=0)
    a_mean = g_dst.T / jnp.maximum(deg, 1.0)[:, None]              # (N, E_pad)

    # static per-edge features: [pos_i - pos_j, variables_i, u_i - u_j, zero pad]
    u_diff = u[dst] - u[src]
    p_diff = pos_x[dst] - pos_x[src]
    var_i = variables[dst]
    estat = jnp.concatenate([p_diff, var_i, u_diff], axis=-1)
    estat = jnp.pad(estat, ((0, e_pad - n_edges), (0, 128 - estat.shape[1])))

    kpad = 2 * H + 128

    h = pl.pallas_call(
        functools.partial(_gnn_stack_kernel, num_graphs=num_graphs,
                          nodes_per_graph=nodes_per_graph),
        out_shape=jax.ShapeDtypeStruct((n, H), jnp.float32),
        grid=(n_layers,),
        in_specs=[
            pl.BlockSpec((n, 128), lambda l: (0, 0)),            # node_in (padded)
            pl.BlockSpec((e_pad, n), lambda l: (0, 0)),          # g_src
            pl.BlockSpec((e_pad, n), lambda l: (0, 0)),          # g_dst
            pl.BlockSpec((n, e_pad), lambda l: (0, 0)),          # a_mean
            pl.BlockSpec((e_pad, 128), lambda l: (0, 0)),        # edge static features
            pl.BlockSpec((n, 128), lambda l: (0, 0)),            # variables (padded)
            pl.BlockSpec(memory_space=pltpu.MemorySpace.SMEM),   # per-layer (a, sigma)
            pl.BlockSpec((128, H), lambda l: (0, 0)),            # embedding W1 (padded)
            pl.BlockSpec((1, H), lambda l: (0, 0)),              # embedding b1
            pl.BlockSpec((H, H), lambda l: (0, 0)),              # embedding W2
            pl.BlockSpec((1, H), lambda l: (0, 0)),              # embedding b2
            pl.BlockSpec((None, kpad, H), lambda l: (l, 0, 0)),  # message W1 (stacked)
            pl.BlockSpec((None, 1, H), lambda l: (l, 0, 0)),     # message b1
            pl.BlockSpec((None, H, H), lambda l: (l, 0, 0)),     # message W2
            pl.BlockSpec((None, 1, H), lambda l: (l, 0, 0)),     # message b2
            pl.BlockSpec((None, kpad, H), lambda l: (l, 0, 0)),  # update W1 (stacked)
            pl.BlockSpec((None, 1, H), lambda l: (l, 0, 0)),     # update b1
            pl.BlockSpec((None, H, H), lambda l: (l, 0, 0)),     # update W2
            pl.BlockSpec((None, 1, H), lambda l: (l, 0, 0)),     # update b2
        ],
        out_specs=pl.BlockSpec((n, H), lambda l: (0, 0)),
        scratch_shapes=[pltpu.VMEM((n, H), jnp.float32)],
        compiler_params=pltpu.CompilerParams(dimension_semantics=("arbitrary",)),
    )(node_in, g_src, g_dst, a_mean, estat, varp, packed["asig"],
      packed["ew1"], packed["eb1"], packed["ew2"], packed["eb2"],
      packed["mw1"], packed["mb1"], packed["mw2"], packed["mb2"],
      packed["uw1"], packed["ub1"], packed["uw2"], packed["ub2"])

    # output head: conv stack as dense matmuls + fused u[:, -1] + cumsum(dt)*diff epilogue
    u_last = u[:, -1:]
    dt_row = (pde["dt"] * jnp.arange(1, tw + 1, dtype=jnp.float32)).reshape(1, tw)
    kexp = packed["w1e"].shape[1]
    out = pl.pallas_call(
        _output_head_kernel,
        out_shape=jax.ShapeDtypeStruct((n, tw), jnp.float32),
        grid=(1,),
        in_specs=[
            pl.BlockSpec((n, H), lambda i: (0, 0)),
            pl.BlockSpec((n, 1), lambda i: (0, 0)),
            pl.BlockSpec((1, tw), lambda i: (0, 0)),
            pl.BlockSpec((H, kexp), lambda i: (0, 0)),
            pl.BlockSpec((1, kexp), lambda i: (0, 0)),
            pl.BlockSpec((kexp, tw), lambda i: (0, 0)),
            pl.BlockSpec((1, tw), lambda i: (0, 0)),
        ],
        out_specs=pl.BlockSpec((n, tw), lambda i: (0, 0)),
        compiler_params=pltpu.CompilerParams(dimension_semantics=("arbitrary",)),
    )(h, u_last, dt_row, packed["w1e"], packed["b1e"], packed["w2e"], packed["b2row"])
    return out


# ---------------------------------------------------------------------------
# Example
# ---------------------------------------------------------------------------

if __name__ == "__main__":
    TW = 50            # time_window (50 pairs with hidden=128 for the conv head)
    HIDDEN = 128       # hidden_features
    N_LAYERS = 6       # hidden_layer
    NUM_GRAPHS = 2
    NODES_PER_GRAPH = 32
    N = NUM_GRAPHS * NODES_PER_GRAPH
    SIGMA = 0.1
    PDE = dict(L=16.0, tmax=4.0, dt=0.08)

    key = jax.random.PRNGKey(0)
    ku, kt, kparam = jax.random.split(key, 3)

    u = jax.random.normal(ku, (N, TW), jnp.float32)
    x_coord = jnp.tile(jnp.linspace(0.0, PDE["L"], NODES_PER_GRAPH), NUM_GRAPHS)
    t_coord = jax.random.uniform(kt, (N,), jnp.float32, 0.0, PDE["tmax"])
    pos = jnp.stack([t_coord, x_coord], axis=-1).astype(jnp.float32)  # [:,0]=t, [:,1]=x

    # bidirectional neighbour edges (offsets +-1, +-2) within each graph
    src_list, dst_list = [], []
    for g in range(NUM_GRAPHS):
        off = g * NODES_PER_GRAPH
        for i in range(NODES_PER_GRAPH):
            for d in (-2, -1, 1, 2):
                j = i + d
                if 0 <= j < NODES_PER_GRAPH:
                    src_list.append(off + j)   # source (x_j)
                    dst_list.append(off + i)   # target (x_i)
    edge_index = jnp.array([src_list, dst_list], dtype=jnp.int32)

    params = init_params(kparam, TW, HIDDEN, N_LAYERS, n_vars=1, sigma=SIGMA)
    packed = pack_params(params, tw=TW, hidden=HIDDEN, n_vars=1)   # once, outside jit

    fwd = jax.jit(lambda p, uu, pp, ei: mp_pde_solver_forward(
        p, uu, pp, ei, pde=PDE, tw=TW, hidden=HIDDEN, n_vars=1,
        n_layers=N_LAYERS, nodes_per_graph=NODES_PER_GRAPH, num_graphs=NUM_GRAPHS))

    out = fwd(packed, u, pos, edge_index)
    jax.block_until_ready(out)
    assert out.shape == (N, TW), out.shape
    assert bool(jnp.all(jnp.isfinite(out)))
    print("KERNEL_OK")
</pallas_src>

<mosaic_0001>
module attributes {stable_mosaic.version = 11 : i64} {
  func.func @_gnn_stack_kernel(%arg0: i32, %arg1: memref<64x128xf32, #tpu.memory_space<vmem>>, %arg2: memref<256x64xf32, #tpu.memory_space<vmem>>, %arg3: memref<256x64xf32, #tpu.memory_space<vmem>>, %arg4: memref<64x256xf32, #tpu.memory_space<vmem>>, %arg5: memref<256x128xf32, #tpu.memory_space<vmem>>, %arg6: memref<64x128xf32, #tpu.memory_space<vmem>>, %arg7: memref<6x2xf32, #tpu.memory_space<smem>>, %arg8: memref<128x128xf32, #tpu.memory_space<vmem>>, %arg9: memref<1x128xf32, #tpu.memory_space<vmem>>, %arg10: memref<128x128xf32, #tpu.memory_space<vmem>>, %arg11: memref<1x128xf32, #tpu.memory_space<vmem>>, %arg12: memref<1x384x128xf32, #tpu.memory_space<vmem>>, %arg13: memref<1x1x128xf32, #tpu.memory_space<vmem>>, %arg14: memref<1x128x128xf32, #tpu.memory_space<vmem>>, %arg15: memref<1x1x128xf32, #tpu.memory_space<vmem>>, %arg16: memref<1x384x128xf32, #tpu.memory_space<vmem>>, %arg17: memref<1x1x128xf32, #tpu.memory_space<vmem>>, %arg18: memref<1x128x128xf32, #tpu.memory_space<vmem>>, %arg19: memref<1x1x128xf32, #tpu.memory_space<vmem>>, %arg20: memref<64x128xf32, #tpu.memory_space<vmem>>, %arg21: memref<64x128xf32, #tpu.memory_space<vmem>>) attributes {dimension_semantics = [#tpu.dimension_semantics<arbitrary>], iteration_bounds = array<i64: 6>, scalar_prefetch = 0 : i64, scratch_operands = 1 : i64, tpu.core_type = #tpu.core_type<tc>, window_params = [{pipeline_mode = #tpu.pipeline_mode<synchronous>, transform_indices = @transform_0, window_bounds = array<i64: 64, 128>}, {pipeline_mode = #tpu.pipeline_mode<synchronous>, transform_indices = @transform_1, window_bounds = array<i64: 256, 64>}, {pipeline_mode = #tpu.pipeline_mode<synchronous>, transform_indices = @transform_2, window_bounds = array<i64: 256, 64>}, {pipeline_mode = #tpu.pipeline_mode<synchronous>, transform_indices = @transform_3, window_bounds = array<i64: 64, 256>}, {pipeline_mode = #tpu.pipeline_mode<synchronous>, transform_indices = @transform_4, window_bounds = array<i64: 256, 128>}, {pipeline_mode = #tpu.pipeline_mode<synchronous>, transform_indices = @transform_5, window_bounds = array<i64: 64, 128>}, {transform_indices = @transform_6, window_bounds = array<i64: 6, 2>}, {pipeline_mode = #tpu.pipeline_mode<synchronous>, transform_indices = @transform_7, window_bounds = array<i64: 128, 128>}, {pipeline_mode = #tpu.pipeline_mode<synchronous>, transform_indices = @transform_8, window_bounds = array<i64: 1, 128>}, {pipeline_mode = #tpu.pipeline_mode<synchronous>, transform_indices = @transform_9, window_bounds = array<i64: 128, 128>}, {pipeline_mode = #tpu.pipeline_mode<synchronous>, transform_indices = @transform_10, window_bounds = array<i64: 1, 128>}, {transform_indices = @transform_11, window_bounds = array<i64: 1, 384, 128>}, {transform_indices = @transform_12, window_bounds = array<i64: 1, 1, 128>}, {transform_indices = @transform_13, window_bounds = array<i64: 1, 128, 128>}, {transform_indices = @transform_14, window_bounds = array<i64: 1, 1, 128>}, {transform_indices = @transform_15, window_bounds = array<i64: 1, 384, 128>}, {transform_indices = @transform_16, window_bounds = array<i64: 1, 1, 128>}, {transform_indices = @transform_17, window_bounds = array<i64: 1, 128, 128>}, {transform_indices = @transform_18, window_bounds = array<i64: 1, 1, 128>}, {pipeline_mode = #tpu.pipeline_mode<synchronous>, transform_indices = @transform_19, window_bounds = array<i64: 64, 128>}]} {
    %c0_i32 = arith.constant 0 : i32
    %0 = arith.cmpi eq, %arg0, %c0_i32 : i32
    %1 = arith.extui %0 : i1 to i32
    %c0_i32_0 = arith.constant 0 : i32
    %2 = arith.cmpi ne, %1, %c0_i32_0 : i32
    scf.if %2 {
      %c0_65 = arith.constant 0 : index
      %c0_66 = arith.constant 0 : index
      %120 = vector.load %arg1[%c0_65, %c0_66] : memref<64x128xf32, #tpu.memory_space<vmem>>, vector<64x128xf32>
      %c0_67 = arith.constant 0 : index
      %c0_68 = arith.constant 0 : index
      %121 = vector.load %arg8[%c0_67, %c0_68] : memref<128x128xf32, #tpu.memory_space<vmem>>, vector<128x128xf32>
      %cst_69 = arith.constant dense<0.000000e+00> : vector<64x128xf32>
      %122 = tpu.matmul %120, %121, %cst_69 {dimension_numbers = #tpu.dot_dimension_numbers<[1], [0], [0], [1], [0, 0, 1, 1], [], []>} : vector<64x128xf32>, vector<128x128xf32>, vector<64x128xf32> -> vector<64x128xf32>
      %c0_70 = arith.constant 0 : index
      %c0_71 = arith.constant 0 : index
      %123 = vector.load %arg9[%c0_70, %c0_71] : memref<1x128xf32, #tpu.memory_space<vmem>>, vector<1x128xf32>
      %124 = vector.broadcast %123 : vector<1x128xf32> to vector<64x128xf32>
      %125 = arith.addf %122, %124 : vector<64x128xf32>
      %126 = arith.negf %125 : vector<64x128xf32>
      %127 = math.exp %126 : vector<64x128xf32>
      %cst_72 = arith.constant 1.000000e+00 : f32
      %128 = vector.broadcast %cst_72 : f32 to vector<64x128xf32>
      %129 = arith.addf %128, %127 : vector<64x128xf32>
      %130 = arith.divf %128, %129 : vector<64x128xf32>
      %131 = arith.mulf %125, %130 : vector<64x128xf32>
      %c0_73 = arith.constant 0 : index
      %c0_74 = arith.constant 0 : index
      %132 = vector.load %arg10[%c0_73, %c0_74] : memref<128x128xf32, #tpu.memory_space<vmem>>, vector<128x128xf32>
      %cst_75 = arith.constant dense<0.000000e+00> : vector<64x128xf32>
      %133 = tpu.matmul %131, %132, %cst_75 {dimension_numbers = #tpu.dot_dimension_numbers<[1], [0], [0], [1], [0, 0, 1, 1], [], []>} : vector<64x128xf32>, vector<128x128xf32>, vector<64x128xf32> -> vector<64x128xf32>
      %c0_76 = arith.constant 0 : index
      %c0_77 = arith.constant 0 : index
      %134 = vector.load %arg11[%c0_76, %c0_77] : memref<1x128xf32, #tpu.memory_space<vmem>>, vector<1x128xf32>
      %135 = vector.broadcast %134 : vector<1x128xf32> to vector<64x128xf32>
      %136 = arith.addf %133, %135 : vector<64x128xf32>
      %137 = arith.negf %136 : vector<64x128xf32>
      %138 = math.exp %137 : vector<64x128xf32>
      %cst_78 = arith.constant 1.000000e+00 : f32
      %139 = vector.broadcast %cst_78 : f32 to vector<64x128xf32>
      %140 = arith.addf %139, %138 : vector<64x128xf32>
      %141 = arith.divf %139, %140 : vector<64x128xf32>
      %142 = arith.mulf %136, %141 : vector<64x128xf32>
      %c0_79 = arith.constant 0 : index
      %c0_80 = arith.constant 0 : index
      %143 = vector.load %arg21[%c0_79, %c0_80] : memref<64x128xf32, #tpu.memory_space<vmem>>, vector<64x128xf32>
      tpu.vector_store %arg21[%c0_79, %c0_80], %142 {strides = array<i32>} : memref<64x128xf32, #tpu.memory_space<vmem>>, vector<64x128xf32>,
    } else {
    }
    %c0 = arith.constant 0 : index
    %c0_1 = arith.constant 0 : index
    %3 = vector.load %arg21[%c0, %c0_1] : memref<64x128xf32, #tpu.memory_space<vmem>>, vector<64x128xf32>
    %c0_2 = arith.constant 0 : index
    %c0_3 = arith.constant 0 : index
    %4 = vector.load %arg3[%c0_2, %c0_3] : memref<256x64xf32, #tpu.memory_space<vmem>>, vector<256x64xf32>
    %cst = arith.constant dense<0.000000e+00> : vector<256x128xf32>
    %5 = tpu.matmul %4, %3, %cst {dimension_numbers = #tpu.dot_dimension_numbers<[1], [0], [0], [1], [0, 0, 1, 1], [], []>} : vector<256x64xf32>, vector<64x128xf32>, vector<256x128xf32> -> vector<256x128xf32>
    %c0_4 = arith.constant 0 : index
    %c0_5 = arith.constant 0 : index
    %6 = vector.load %arg2[%c0_4, %c0_5] : memref<256x64xf32, #tpu.memory_space<vmem>>, vector<256x64xf32>
    %cst_6 = arith.constant dense<0.000000e+00> : vector<256x128xf32>
    %7 = tpu.matmul %6, %3, %cst_6 {dimension_numbers = #tpu.dot_dimension_numbers<[1], [0], [0], [1], [0, 0, 1, 1], [], []>} : vector<256x64xf32>, vector<64x128xf32>, vector<256x128xf32> -> vector<256x128xf32>
    %c0_7 = arith.constant 0 : index
    %c0_8 = arith.constant 0 : index
    %8 = vector.load %arg5[%c0_7, %c0_8] : memref<256x128xf32, #tpu.memory_space<vmem>>, vector<256x128xf32>
    %9 = tpu.concatenate %5, %7, %8 in 1 : vector<256x128xf32>, vector<256x128xf32>, vector<256x128xf32> -> vector<256x384xf32>
    %c0_9 = arith.constant 0 : index
    %c0_10 = arith.constant 0 : index
    %c0_11 = arith.constant 0 : index
    %10 = vector.load %arg12[%c0_9, %c0_10, %c0_11] : memref<1x384x128xf32, #tpu.memory_space<vmem>>, vector<1x384x128xf32>
    %11 = vector.shape_cast %10 : vector<1x384x128xf32> to vector<384x128xf32>
    %cst_12 = arith.constant dense<0.000000e+00> : vector<256x128xf32>
    %12 = tpu.matmul %9, %11, %cst_12 {dimension_numbers = #tpu.dot_dimension_numbers<[1], [0], [0], [1], [0, 0, 1, 1], [], []>} : vector<256x384xf32>, vector<384x128xf32>, vector<256x128xf32> -> vector<256x128xf32>
    %c0_13 = arith.constant 0 : index
    %c0_14 = arith.constant 0 : index
    %c0_15 = arith.constant 0 : index
    %13 = vector.load %arg13[%c0_13, %c0_14, %c0_15] : memref<1x1x128xf32, #tpu.memory_space<vmem>>, vector<1x1x128xf32>
    %14 = vector.shape_cast %13 : vector<1x1x128xf32> to vector<1x128xf32>
    %15 = vector.broadcast %14 : vector<1x128xf32> to vector<256x128xf32>
    %16 = arith.addf %12, %15 : vector<256x128xf32>
    %17 = arith.negf %16 : vector<256x128xf32>
    %18 = math.exp %17 : vector<256x128xf32>
    %cst_16 = arith.constant 1.000000e+00 : f32
    %19 = vector.broadcast %cst_16 : f32 to vector<256x128xf32>
    %20 = arith.addf %19, %18 : vector<256x128xf32>
    %21 = arith.divf %19, %20 : vector<256x128xf32>
    %22 = arith.mulf %16, %21 : vector<256x128xf32>
    %c0_17 = arith.constant 0 : index
    %c0_18 = arith.constant 0 : index
    %c0_19 = arith.constant 0 : index
    %23 = vector.load %arg14[%c0_17, %c0_18, %c0_19] : memref<1x128x128xf32, #tpu.memory_space<vmem>>, vector<1x128x128xf32>
    %24 = vector.shape_cast %23 : vector<1x128x128xf32> to vector<128x128xf32>
    %cst_20 = arith.constant dense<0.000000e+00> : vector<256x128xf32>
    %25 = tpu.matmul %22, %24, %cst_20 {dimension_numbers = #tpu.dot_dimension_numbers<[1], [0], [0], [1], [0, 0, 1, 1], [], []>} : vector<256x128xf32>, vector<128x128xf32>, vector<256x128xf32> -> vector<256x128xf32>
    %c0_21 = arith.constant 0 : index
    %c0_22 = arith.constant 0 : index
    %c0_23 = arith.constant 0 : index
    %26 = vector.load %arg15[%c0_21, %c0_22, %c0_23] : memref<1x1x128xf32, #tpu.memory_space<vmem>>, vector<1x1x128xf32>
    %27 = vector.shape_cast %26 : vector<1x1x128xf32> to vector<1x128xf32>
    %28 = vector.broadcast %27 : vector<1x128xf32> to vector<256x128xf32>
    %29 = arith.addf %25, %28 : vector<256x128xf32>
    %30 = arith.negf %29 : vector<256x128xf32>
    %31 = math.exp %30 : vector<256x128xf32>
    %cst_24 = arith.constant 1.000000e+00 : f32
    %32 = vector.broadcast %cst_24 : f32 to vector<256x128xf32>
    %33 = arith.addf %32, %31 : vector<256x128xf32>
    %34 = arith.divf %32, %33 : vector<256x128xf32>
    %35 = arith.mulf %29, %34 : vector<256x128xf32>
    %36 = arith.index_cast %arg0 : i32 to index
    %c0_25 = arith.constant 0 : index
    %37 = memref.load %arg7[%36, %c0_25] : memref<6x2xf32, #tpu.memory_space<smem>>
    %38 = arith.index_cast %arg0 : i32 to index
    %c1 = arith.constant 1 : index
    %39 = memref.load %arg7[%38, %c1] : memref<6x2xf32, #tpu.memory_space<smem>>
    %40 = vector.extract_strided_slice %8 {offsets = [0, 0], sizes = [256, 1], strides = [1, 1]} : vector<256x128xf32> to vector<256x1xf32>
    %41 = arith.mulf %40, %40 : vector<256x1xf32>
    %cst_26 = arith.constant 0.000000e+00 : f32
    %42 = vector.broadcast %cst_26 : f32 to vector<256x1xf32>
    %43 = arith.subf %42, %41 : vector<256x1xf32>
    %44 = vector.broadcast %39 : f32 to vector<256x1xf32>
    %45 = arith.divf %43, %44 : vector<256x1xf32>
    %46 = math.exp %45 : vector<256x1xf32>
    %47 = vector.broadcast %37 : f32 to vector<256x1xf32>
    %48 = arith.mulf %47, %46 : vector<256x1xf32>
    %49 = vector.broadcast %48 : vector<256x1xf32> to vector<256x128xf32>
    %50 = arith.mulf %35, %49 : vector<256x128xf32>
    %c0_27 = arith.constant 0 : index
    %c0_28 = arith.constant 0 : index
    %51 = vector.load %arg4[%c0_27, %c0_28] : memref<64x256xf32, #tpu.memory_space<vmem>>, vector<64x256xf32>
    %cst_29 = arith.constant dense<0.000000e+00> : vector<64x128xf32>
    %52 = tpu.matmul %51, %50, %cst_29 {dimension_numbers = #tpu.dot_dimension_numbers<[1], [0], [0], [1], [0, 0, 1, 1], [], []>} : vector<64x256xf32>, vector<256x128xf32>, vector<64x128xf32> -> vector<64x128xf32>
    %c0_30 = arith.constant 0 : index
    %c0_31 = arith.constant 0 : index
    %53 = vector.load %arg6[%c0_30, %c0_31] : memref<64x128xf32, #tpu.memory_space<vmem>>, vector<64x128xf32>
    %54 = tpu.concatenate %3, %52, %53 in 1 : vector<64x128xf32>, vector<64x128xf32>, vector<64x128xf32> -> vector<64x384xf32>
    %c0_32 = arith.constant 0 : index
    %c0_33 = arith.constant 0 : index
    %c0_34 = arith.constant 0 : index
    %55 = vector.load %arg16[%c0_32, %c0_33, %c0_34] : memref<1x384x128xf32, #tpu.memory_space<vmem>>, vector<1x384x128xf32>
    %56 = vector.shape_cast %55 : vector<1x384x128xf32> to vector<384x128xf32>
    %cst_35 = arith.constant dense<0.000000e+00> : vector<64x128xf32>
    %57 = tpu.matmul %54, %56, %cst_35 {dimension_numbers = #tpu.dot_dimension_numbers<[1], [0], [0], [1], [0, 0, 1, 1], [], []>} : vector<64x384xf32>, vector<384x128xf32>, vector<64x128xf32> -> vector<64x128xf32>
    %c0_36 = arith.constant 0 : index
    %c0_37 = arith.constant 0 : index
    %c0_38 = arith.constant 0 : index
    %58 = vector.load %arg17[%c0_36, %c0_37, %c0_38] : memref<1x1x128xf32, #tpu.memory_space<vmem>>, vector<1x1x128xf32>
    %59 = vector.shape_cast %58 : vector<1x1x128xf32> to vector<1x128xf32>
    %60 = vector.broadcast %59 : vector<1x128xf32> to vector<64x128xf32>
    %61 = arith.addf %57, %60 : vector<64x128xf32>
    %62 = arith.negf %61 : vector<64x128xf32>
    %63 = math.exp %62 : vector<64x128xf32>
    %cst_39 = arith.constant 1.000000e+00 : f32
    %64 = vector.broadcast %cst_39 : f32 to vector<64x128xf32>
    %65 = arith.addf %64, %63 : vector<64x128xf32>
    %66 = arith.divf %64, %65 : vector<64x128xf32>
    %67 = arith.mulf %61, %66 : vector<64x128xf32>
    %c0_40 = arith.constant 0 : index
    %c0_41 = arith.constant 0 : index
    %c0_42 = arith.constant 0 : index
    %68 = vector.load %arg18[%c0_40, %c0_41, %c0_42] : memref<1x128x128xf32, #tpu.memory_space<vmem>>, vector<1x128x128xf32>
    %69 = vector.shape_cast %68 : vector<1x128x128xf32> to vector<128x128xf32>
    %cst_43 = arith.constant dense<0.000000e+00> : vector<64x128xf32>
    %70 = tpu.matmul %67, %69, %cst_43 {dimension_numbers = #tpu.dot_dimension_numbers<[1], [0], [0], [1], [0, 0, 1, 1], [], []>} : vector<64x128xf32>, vector<128x128xf32>, vector<64x128xf32> -> vector<64x128xf32>
    %c0_44 = arith.constant 0 : index
    %c0_45 = arith.constant 0 : index
    %c0_46 = arith.constant 0 : index
    %71 = vector.load %arg19[%c0_44, %c0_45, %c0_46] : memref<1x1x128xf32, #tpu.memory_space<vmem>>, vector<1x1x128xf32>
    %72 = vector.shape_cast %71 : vector<1x1x128xf32> to vector<1x128xf32>
    %73 = vector.broadcast %72 : vector<1x128xf32> to vector<64x128xf32>
    %74 = arith.addf %70, %73 : vector<64x128xf32>
    %75 = arith.negf %74 : vector<64x128xf32>
    %76 = math.exp %75 : vector<64x128xf32>
    %cst_47 = arith.constant 1.000000e+00 : f32
    %77 = vector.broadcast %cst_47 : f32 to vector<64x128xf32>
    %78 = arith.addf %77, %76 : vector<64x128xf32>
    %79 = arith.divf %77, %78 : vector<64x128xf32>
    %80 = arith.mulf %74, %79 : vector<64x128xf32>
    %81 = arith.addf %3, %80 : vector<64x128xf32>
    %82 = vector.extract_strided_slice %81 {offsets = [0, 0], sizes = [32, 128], strides = [1, 1]} : vector<64x128xf32> to vector<32x128xf32>
    %cst_48 = arith.constant dense<0.000000e+00> : vector<128xf32>
    %83 = vector.multi_reduction <add>, %82, %cst_48 [0] : vector<32x128xf32> to vector<128xf32>
    %84 = vector.shape_cast %83 : vector<128xf32> to vector<1x128xf32>
    %cst_49 = arith.constant 3.200000e+01 : f32
    %85 = vector.broadcast %cst_49 : f32 to vector<1x128xf32>
    %86 = arith.divf %84, %85 : vector<1x128xf32>
    %87 = vector.broadcast %86 : vector<1x128xf32> to vector<32x128xf32>
    %88 = arith.subf %82, %87 : vector<32x128xf32>
    %89 = arith.mulf %88, %88 : vector<32x128xf32>
    %cst_50 = arith.constant dense<0.000000e+00> : vector<128xf32>
    %90 = vector.multi_reduction <add>, %89, %cst_50 [0] : vector<32x128xf32> to vector<128xf32>
    %91 = vector.shape_cast %90 : vector<128xf32> to vector<1x128xf32>
    %cst_51 = arith.constant 3.200000e+01 : f32
    %92 = vector.broadcast %cst_51 : f32 to vector<1x128xf32>
    %93 = arith.divf %91, %92 : vector<1x128xf32>
    %cst_52 = arith.constant 9.99999974E-6 : f32
    %94 = vector.broadcast %cst_52 : f32 to vector<1x128xf32>
    %95 = arith.addf %93, %94 : vector<1x128xf32>
    %96 = math.rsqrt %95 : vector<1x128xf32>
    %97 = vector.broadcast %96 : vector<1x128xf32> to vector<32x128xf32>
    %98 = arith.mulf %88, %97 : vector<32x128xf32>
    %c0_53 = arith.constant 0 : index
    %c0_54 = arith.constant 0 : index
    %99 = vector.load %arg21[%c0_53, %c0_54] : memref<64x128xf32, #tpu.memory_space<vmem>>, vector<32x128xf32>
    tpu.vector_store %arg21[%c0_53, %c0_54], %98 {strides = array<i32>} : memref<64x128xf32, #tpu.memory_space<vmem>>, vector<32x128xf32>,
    %100 = vector.extract_strided_slice %81 {offsets = [32, 0], sizes = [32, 128], strides = [1, 1]} : vector<64x128xf32> to vector<32x128xf32>
    %cst_55 = arith.constant dense<0.000000e+00> : vector<128xf32>
    %101 = vector.multi_reduction <add>, %100, %cst_55 [0] : vector<32x128xf32> to vector<128xf32>
    %102 = vector.shape_cast %101 : vector<128xf32> to vector<1x128xf32>
    %cst_56 = arith.constant 3.200000e+01 : f32
    %103 = vector.broadcast %cst_56 : f32 to vector<1x128xf32>
    %104 = arith.divf %102, %103 : vector<1x128xf32>
    %105 = vector.broadcast %104 : vector<1x128xf32> to vector<32x128xf32>
    %106 = arith.subf %100, %105 : vector<32x128xf32>
    %107 = arith.mulf %106, %106 : vector<32x128xf32>
    %cst_57 = arith.constant dense<0.000000e+00> : vector<128xf32>
    %108 = vector.multi_reduction <add>, %107, %cst_57 [0] : vector<32x128xf32> to vector<128xf32>
    %109 = vector.shape_cast %108 : vector<128xf32> to vector<1x128xf32>
    %cst_58 = arith.constant 3.200000e+01 : f32
    %110 = vector.broadcast %cst_58 : f32 to vector<1x128xf32>
    %111 = arith.divf %109, %110 : vector<1x128xf32>
    %cst_59 = arith.constant 9.99999974E-6 : f32
    %112 = vector.broadcast %cst_59 : f32 to vector<1x128xf32>
    %113 = arith.addf %111, %112 : vector<1x128xf32>
    %114 = math.rsqrt %113 : vector<1x128xf32>
    %115 = vector.broadcast %114 : vector<1x128xf32> to vector<32x128xf32>
    %116 = arith.mulf %106, %115 : vector<32x128xf32>
    %c32 = arith.constant 32 : index
    %c0_60 = arith.constant 0 : index
    %117 = vector.load %arg21[%c32, %c0_60] : memref<64x128xf32, #tpu.memory_space<vmem>>, vector<32x128xf32>
    tpu.vector_store %arg21[%c32, %c0_60], %116 {strides = array<i32>} : memref<64x128xf32, #tpu.memory_space<vmem>>, vector<32x128xf32>,
    %c0_61 = arith.constant 0 : index
    %c0_62 = arith.constant 0 : index
    %118 = vector.load %arg21[%c0_61, %c0_62] : memref<64x128xf32, #tpu.memory_space<vmem>>, vector<64x128xf32>
    %c0_63 = arith.constant 0 : index
    %c0_64 = arith.constant 0 : index
    %119 = vector.load %arg20[%c0_63, %c0_64] : memref<64x128xf32, #tpu.memory_space<vmem>>, vector<64x128xf32>
    tpu.vector_store %arg20[%c0_63, %c0_64], %118 {strides = array<i32>} : memref<64x128xf32, #tpu.memory_space<vmem>>, vector<64x128xf32>,
    return
  }
  func.func @transform_0(%arg0: i32) -> (i32, i32) {
    %c0_i32 = arith.constant 0 : i32
    %c0_i32_0 = arith.constant 0 : i32
    %c0_i32_1 = arith.constant 0 : i32
    return %c0_i32, %c0_i32_0 : i32, i32
  }
  func.func @transform_1(%arg0: i32) -> (i32, i32) {
    %c0_i32 = arith.constant 0 : i32
    %c0_i32_0 = arith.constant 0 : i32
    %c0_i32_1 = arith.constant 0 : i32
    return %c0_i32, %c0_i32_0 : i32, i32
  }
  func.func @transform_2(%arg0: i32) -> (i32, i32) {
    %c0_i32 = arith.constant 0 : i32
    %c0_i32_0 = arith.constant 0 : i32
    %c0_i32_1 = arith.constant 0 : i32
    return %c0_i32, %c0_i32_0 : i32, i32
  }
  func.func @transform_3(%arg0: i32) -> (i32, i32) {
    %c0_i32 = arith.constant 0 : i32
    %c0_i32_0 = arith.constant 0 : i32
    %c0_i32_1 = arith.constant 0 : i32
    return %c0_i32, %c0_i32_0 : i32, i32
  }
  func.func @transform_4(%arg0: i32) -> (i32, i32) {
    %c0_i32 = arith.constant 0 : i32
    %c0_i32_0 = arith.constant 0 : i32
    %c0_i32_1 = arith.constant 0 : i32
    return %c0_i32, %c0_i32_0 : i32, i32
  }
  func.func @transform_5(%arg0: i32) -> (i32, i32) {
    %c0_i32 = arith.constant 0 : i32
    %c0_i32_0 = arith.constant 0 : i32
    %c0_i32_1 = arith.constant 0 : i32
    return %c0_i32, %c0_i32_0 : i32, i32
  }
  func.func @transform_6(%arg0: i32) -> (i32, i32) {
    %c0_i32 = arith.constant 0 : i32
    %c0_i32_0 = arith.constant 0 : i32
    %c0_i32_1 = arith.constant 0 : i32
    return %c0_i32, %c0_i32_0 : i32, i32
  }
  func.func @transform_7(%arg0: i32) -> (i32, i32) {
    %c0_i32 = arith.constant 0 : i32
    %c0_i32_0 = arith.constant 0 : i32
    %c0_i32_1 = arith.constant 0 : i32
    return %c0_i32, %c0_i32_0 : i32, i32
  }
  func.func @transform_8(%arg0: i32) -> (i32, i32) {
    %c0_i32 = arith.constant 0 : i32
    %c0_i32_0 = arith.constant 0 : i32
    %c0_i32_1 = arith.constant 0 : i32
    return %c0_i32, %c0_i32_0 : i32, i32
  }
  func.func @transform_9(%arg0: i32) -> (i32, i32) {
    %c0_i32 = arith.constant 0 : i32
    %c0_i32_0 = arith.constant 0 : i32
    %c0_i32_1 = arith.constant 0 : i32
    return %c0_i32, %c0_i32_0 : i32, i32
  }
  func.func @transform_10(%arg0: i32) -> (i32, i32) {
    %c0_i32 = arith.constant 0 : i32
    %c0_i32_0 = arith.constant 0 : i32
    %c0_i32_1 = arith.constant 0 : i32
    return %c0_i32, %c0_i32_0 : i32, i32
  }
  func.func @transform_11(%arg0: i32) -> (i32, i32, i32) {
    %c0_i32 = arith.constant 0 : i32
    %c0_i32_0 = arith.constant 0 : i32
    %c0_i32_1 = arith.constant 0 : i32
    return %arg0, %c0_i32, %c0_i32_0 : i32, i32, i32
  }
  func.func @transform_12(%arg0: i32) -> (i32, i32, i32) {
    %c0_i32 = arith.constant 0 : i32
    %c0_i32_0 = arith.constant 0 : i32
    %c0_i32_1 = arith.constant 0 : i32
    return %arg0, %c0_i32, %c0_i32_0 : i32, i32, i32
  }
  func.func @transform_13(%arg0: i32) -> (i32, i32, i32) {
    %c0_i32 = arith.constant 0 : i32
    %c0_i32_0 = arith.constant 0 : i32
    %c0_i32_1 = arith.constant 0 : i32
    return %arg0, %c0_i32, %c0_i32_0 : i32, i32, i32
  }
  func.func @transform_14(%arg0: i32) -> (i32, i32, i32) {
    %c0_i32 = arith.constant 0 : i32
    %c0_i32_0 = arith.constant 0 : i32
    %c0_i32_1 = arith.constant 0 : i32
    return %arg0, %c0_i32, %c0_i32_0 : i32, i32, i32
  }
  func.func @transform_15(%arg0: i32) -> (i32, i32, i32) {
    %c0_i32 = arith.constant 0 : i32
    %c0_i32_0 = arith.constant 0 : i32
    %c0_i32_1 = arith.constant 0 : i32
    return %arg0, %c0_i32, %c0_i32_0 : i32, i32, i32
  }
  func.func @transform_16(%arg0: i32) -> (i32, i32, i32) {
    %c0_i32 = arith.constant 0 : i32
    %c0_i32_0 = arith.constant 0 : i32
    %c0_i32_1 = arith.constant 0 : i32
    return %arg0, %c0_i32, %c0_i32_0 : i32, i32, i32
  }
  func.func @transform_17(%arg0: i32) -> (i32, i32, i32) {
    %c0_i32 = arith.constant 0 : i32
    %c0_i32_0 = arith.constant 0 : i32
    %c0_i32_1 = arith.constant 0 : i32
    return %arg0, %c0_i32, %c0_i32_0 : i32, i32, i32
  }
  func.func @transform_18(%arg0: i32) -> (i32, i32, i32) {
    %c0_i32 = arith.constant 0 : i32
    %c0_i32_0 = arith.constant 0 : i32
    %c0_i32_1 = arith.constant 0 : i32
    return %arg0, %c0_i32, %c0_i32_0 : i32, i32, i32
  }
  func.func @transform_19(%arg0: i32) -> (i32, i32) {
    %c0_i32 = arith.constant 0 : i32
    %c0_i32_0 = arith.constant 0 : i32
    %c0_i32_1 = arith.constant 0 : i32
    return %c0_i32, %c0_i32_0 : i32, i32
  }
}

module attributes {stable_mosaic.version = 11 : i64} {
  func.func @_output_head_kernel(%arg0: i32, %arg1: memref<64x128xf32, #tpu.memory_space<vmem>>, %arg2: memref<64x1xf32, #tpu.memory_space<vmem>>, %arg3: memref<1x50xf32, #tpu.memory_space<vmem>>, %arg4: memref<128x512xf32, #tpu.memory_space<vmem>>, %arg5: memref<1x512xf32, #tpu.memory_space<vmem>>, %arg6: memref<512x50xf32, #tpu.memory_space<vmem>>, %arg7: memref<1x50xf32, #tpu.memory_space<vmem>>, %arg8: memref<64x50xf32, #tpu.memory_space<vmem>>) attributes {dimension_semantics = [#tpu.dimension_semantics<arbitrary>], iteration_bounds = array<i64: 1>, scalar_prefetch = 0 : i64, scratch_operands = 0 : i64, tpu.core_type = #tpu.core_type<tc>, window_params = [{pipeline_mode = #tpu.pipeline_mode<synchronous>, transform_indices = @transform_0, window_bounds = array<i64: 64, 128>}, {pipeline_mode = #tpu.pipeline_mode<synchronous>, transform_indices = @transform_1, window_bounds = array<i64: 64, 1>}, {pipeline_mode = #tpu.pipeline_mode<synchronous>, transform_indices = @transform_2, window_bounds = array<i64: 1, 50>}, {pipeline_mode = #tpu.pipeline_mode<synchronous>, transform_indices = @transform_3, window_bounds = array<i64: 128, 512>}, {pipeline_mode = #tpu.pipeline_mode<synchronous>, transform_indices = @transform_4, window_bounds = array<i64: 1, 512>}, {pipeline_mode = #tpu.pipeline_mode<synchronous>, transform_indices = @transform_5, window_bounds = array<i64: 512, 50>}, {pipeline_mode = #tpu.pipeline_mode<synchronous>, transform_indices = @transform_6, window_bounds = array<i64: 1, 50>}, {pipeline_mode = #tpu.pipeline_mode<synchronous>, transform_indices = @transform_7, window_bounds = array<i64: 64, 50>}]} {
    %c0 = arith.constant 0 : index
    %c0_0 = arith.constant 0 : index
    %0 = vector.load %arg1[%c0, %c0_0] : memref<64x128xf32, #tpu.memory_space<vmem>>, vector<64x128xf32>
    %c0_1 = arith.constant 0 : index
    %c0_2 = arith.constant 0 : index
    %1 = vector.load %arg4[%c0_1, %c0_2] : memref<128x512xf32, #tpu.memory_space<vmem>>, vector<128x512xf32>
    %cst = arith.constant dense<0.000000e+00> : vector<64x512xf32>
    %2 = tpu.matmul %0, %1, %cst {dimension_numbers = #tpu.dot_dimension_numbers<[1], [0], [0], [1], [0, 0, 1, 1], [], []>} : vector<64x128xf32>, vector<128x512xf32>, vector<64x512xf32> -> vector<64x512xf32>
    %c0_3 = arith.constant 0 : index
    %c0_4 = arith.constant 0 : index
    %3 = vector.load %arg5[%c0_3, %c0_4] : memref<1x512xf32, #tpu.memory_space<vmem>>, vector<1x512xf32>
    %4 = vector.broadcast %3 : vector<1x512xf32> to vector<64x512xf32>
    %5 = arith.addf %2, %4 : vector<64x512xf32>
    %6 = arith.negf %5 : vector<64x512xf32>
    %7 = math.exp %6 : vector<64x512xf32>
    %cst_5 = arith.constant 1.000000e+00 : f32
    %8 = vector.broadcast %cst_5 : f32 to vector<64x512xf32>
    %9 = arith.addf %8, %7 : vector<64x512xf32>
    %10 = arith.divf %8, %9 : vector<64x512xf32>
    %11 = arith.mulf %5, %10 : vector<64x512xf32>
    %c0_6 = arith.constant 0 : index
    %c0_7 = arith.constant 0 : index
    %12 = vector.load %arg6[%c0_6, %c0_7] : memref<512x50xf32, #tpu.memory_space<vmem>>, vector<512x50xf32>
    %cst_8 = arith.constant dense<0.000000e+00> : vector<64x50xf32>
    %13 = tpu.matmul %11, %12, %cst_8 {dimension_numbers = #tpu.dot_dimension_numbers<[1], [0], [0], [1], [0, 0, 1, 1], [], []>} : vector<64x512xf32>, vector<512x50xf32>, vector<64x50xf32> -> vector<64x50xf32>
    %c0_9 = arith.constant 0 : index
    %c0_10 = arith.constant 0 : index
    %14 = vector.load %arg7[%c0_9, %c0_10] : memref<1x50xf32, #tpu.memory_space<vmem>>, vector<1x50xf32>
    %15 = vector.broadcast %14 : vector<1x50xf32> to vector<64x50xf32>
    %16 = arith.addf %13, %15 : vector<64x50xf32>
    %c0_11 = arith.constant 0 : index
    %c0_12 = arith.constant 0 : index
    %17 = vector.load %arg2[%c0_11, %c0_12] : memref<64x1xf32, #tpu.memory_space<vmem>>, vector<64x1xf32>
    %c0_13 = arith.constant 0 : index
    %c0_14 = arith.constant 0 : index
    %18 = vector.load %arg3[%c0_13, %c0_14] : memref<1x50xf32, #tpu.memory_space<vmem>>, vector<1x50xf32>
    %19 = vector.broadcast %18 : vector<1x50xf32> to vector<64x50xf32>
    %20 = arith.mulf %19, %16 : vector<64x50xf32>
    %21 = vector.broadcast %17 : vector<64x1xf32> to vector<64x50xf32>
    %22 = arith.addf %21, %20 : vector<64x50xf32>
    %c0_15 = arith.constant 0 : index
    %c0_16 = arith.constant 0 : index
    %23 = vector.load %arg8[%c0_15, %c0_16] : memref<64x50xf32, #tpu.memory_space<vmem>>, vector<64x50xf32>
    tpu.vector_store %arg8[%c0_15, %c0_16], %22 {strides = array<i32>} : memref<64x50xf32, #tpu.memory_space<vmem>>, vector<64x50xf32>,
    return
  }
  func.func @transform_0(%arg0: i32) -> (i32, i32) {
    %c0_i32 = arith.constant 0 : i32
    %c0_i32_0 = arith.constant 0 : i32
    %c0_i32_1 = arith.constant 0 : i32
    return %c0_i32, %c0_i32_0 : i32, i32
  }
  func.func @transform_1(%arg0: i32) -> (i32, i32) {
    %c0_i32 = arith.constant 0 : i32
    %c0_i32_0 = arith.constant 0 : i32
    %c0_i32_1 = arith.constant 0 : i32
    return %c0_i32, %c0_i32_0 : i32, i32
  }
  func.func @transform_2(%arg0: i32) -> (i32, i32) {
    %c0_i32 = arith.constant 0 : i32
    %c0_i32_0 = arith.constant 0 : i32
    %c0_i32_1 = arith.constant 0 : i32
    return %c0_i32, %c0_i32_0 : i32, i32
  }
  func.func @transform_3(%arg0: i32) -> (i32, i32) {
    %c0_i32 = arith.constant 0 : i32
    %c0_i32_0 = arith.constant 0 : i32
    %c0_i32_1 = arith.constant 0 : i32
    return %c0_i32, %c0_i32_0 : i32, i32
  }
  func.func @transform_4(%arg0: i32) -> (i32, i32) {
    %c0_i32 = arith.constant 0 : i32
    %c0_i32_0 = arith.constant 0 : i32
    %c0_i32_1 = arith.constant 0 : i32
    return %c0_i32, %c0_i32_0 : i32, i32
  }
  func.func @transform_5(%arg0: i32) -> (i32, i32) {
    %c0_i32 = arith.constant 0 : i32
    %c0_i32_0 = arith.constant 0 : i32
    %c0_i32_1 = arith.constant 0 : i32
    return %c0_i32, %c0_i32_0 : i32, i32
  }
  func.func @transform_6(%arg0: i32) -> (i32, i32) {
    %c0_i32 = arith.constant 0 : i32
    %c0_i32_0 = arith.constant 0 : i32
    %c0_i32_1 = arith.constant 0 : i32
    return %c0_i32, %c0_i32_0 : i32, i32
  }
  func.func @transform_7(%arg0: i32) -> (i32, i32) {
    %c0_i32 = arith.constant 0 : i32
    %c0_i32_0 = arith.constant 0 : i32
    %c0_i32_1 = arith.constant 0 : i32
    return %c0_i32, %c0_i32_0 : i32, i32
  }
}

</mosaic_0001>

<llo_original>
// kernel: sub.10
$region0: #{sub.10}
  #allocation0 [shape = 's32[1]{0}', space=sflag, size = 0x4, scoped, tag = 'scoped memory for sub.10']
  %s0 = inlined_call_operand.vmem [shape: f32[244], index: 0, kind: input, shape index: {}]
  %s1 = inlined_call_operand.vmem [shape: f32[244], index: 1, kind: input, shape index: {}]
  %s2 = inlined_call_operand.vmem [shape: f32[244], index: 2, kind: output, shape index: {}]
  %v3 = vld [vmem:[%s0] sm:$0x3]
  %v4 = vld [vmem:[%s1] sm:$0x3]
  %5 = xla_tuple %v3, %v4
  %6 = xla_tuple %5
  %v7 = vsub.f32 %v3, %v4
  %8 = xla_tuple %v7
  %9 = vst [vmem:[%s2] sm:$0x3] %v7

// kernel: sub.2
$region0: #{sub.2}
  #allocation0 [shape = 's32[1]{0}', space=sflag, size = 0x4, scoped, tag = 'scoped memory for sub.2']
  %s0 = inlined_call_operand.vmem [shape: f32[244,50], index: 0, kind: input, shape index: {}]
  %s1 = inlined_call_operand.vmem [shape: f32[244,50], index: 1, kind: input, shape index: {}]
  %s2 = inlined_call_operand.vmem [shape: f32[244,50], index: 2, kind: output, shape index: {}]
  %v3 = vld [vmem:[%s0] sm:$0xff]
  %v4 = vld [vmem:[%s1] sm:$0xff]
  %5 = xla_tuple %v3, %v4
  %6 = xla_tuple %5
  %v7 = vsub.f32 %v3, %v4
  %8 = xla_tuple %v7
  %9 = vst [vmem:[%s2] sm:$0xff] %v7
  %s10 = scalar_lea.vmem %s0, 8
  %v11 = vld [vmem:[%s10] sm:$0xff]
  %s12 = scalar_lea.vmem %s1, 8
  %v13 = vld [vmem:[%s12] sm:$0xff]
  %14 = xla_tuple %v11, %v13
  %15 = xla_tuple %14
  %v16 = vsub.f32 %v11, %v13
  %17 = xla_tuple %v16
  %s18 = scalar_lea.vmem %s2, 8
  %19 = vst [vmem:[%s18] sm:$0xff] %v16
  %s20 = scalar_lea.vmem %s0, 16
  %v21 = vld [vmem:[%s20] sm:$0xff]
  %s22 = scalar_lea.vmem %s1, 16
  %v23 = vld [vmem:[%s22] sm:$0xff]
  %24 = xla_tuple %v21, %v23
  %25 = xla_tuple %24
  %v26 = vsub.f32 %v21, %v23
  %27 = xla_tuple %v26
  %s28 = scalar_lea.vmem %s2, 16
  %29 = vst [vmem:[%s28] sm:$0xff] %v26
  %s30 = scalar_lea.vmem %s0, 24
  %v31 = vld [vmem:[%s30] sm:$0xff]
  %s32 = scalar_lea.vmem %s1, 24
  %v33 = vld [vmem:[%s32] sm:$0xff]
  %34 = xla_tuple %v31, %v33
  %35 = xla_tuple %34
  %v36 = vsub.f32 %v31, %v33
  %37 = xla_tuple %v36
  %s38 = scalar_lea.vmem %s2, 24
  %39 = vst [vmem:[%s38] sm:$0xff] %v36
  %s40 = scalar_lea.vmem %s0, 32
  %v41 = vld [vmem:[%s40] sm:$0xff]
  %s42 = scalar_lea.vmem %s1, 32
  %v43 = vld [vmem:[%s42] sm:$0xff]
  %44 = xla_tuple %v41, %v43
  %45 = xla_tuple %44
  %v46 = vsub.f32 %v41, %v43
  %47 = xla_tuple %v46
  %s48 = scalar_lea.vmem %s2, 32
  %49 = vst [vmem:[%s48] sm:$0xff] %v46
  %s50 = scalar_lea.vmem %s0, 40
  %v51 = vld [vmem:[%s50] sm:$0xff]
  %s52 = scalar_lea.vmem %s1, 40
  %v53 = vld [vmem:[%s52] sm:$0xff]
  %54 = xla_tuple %v51, %v53
  %55 = xla_tuple %54
  %v56 = vsub.f32 %v51, %v53
  %57 = xla_tuple %v56
  %s58 = scalar_lea.vmem %s2, 40
  %59 = vst [vmem:[%s58] sm:$0xff] %v56
  %s60 = scalar_lea.vmem %s0, 48
  %v61 = vld [vmem:[%s60] sm:$0xff]
  %s62 = scalar_lea.vmem %s1, 48
  %v63 = vld [vmem:[%s62] sm:$0xff]
  %64 = xla_tuple %v61, %v63
  %65 = xla_tuple %64
  %v66 = vsub.f32 %v61, %v63
  %67 = xla_tuple %v66
  %s68 = scalar_lea.vmem %s2, 48
  %69 = vst [vmem:[%s68] sm:$0xff] %v66
  %s70 = scalar_lea.vmem %s0, 56
  %v71 = vld [vmem:[%s70] sm:$0xff]
  %s72 = scalar_lea.vmem %s1, 56
  %v73 = vld [vmem:[%s72] sm:$0xff]
  %74 = xla_tuple %v71, %v73
  %75 = xla_tuple %74
  %v76 = vsub.f32 %v71, %v73
  %77 = xla_tuple %v76
  %s78 = scalar_lea.vmem %s2, 56
  %79 = vst [vmem:[%s78] sm:$0xff] %v76
  %s80 = scalar_lea.vmem %s0, 64
  %v81 = vld [vmem:[%s80] sm:$0xff]
  %s82 = scalar_lea.vmem %s1, 64
  %v83 = vld [vmem:[%s82] sm:$0xff]
  %84 = xla_tuple %v81, %v83
  %85 = xla_tuple %84
  %v86 = vsub.f32 %v81, %v83
  %87 = xla_tuple %v86
  %s88 = scalar_lea.vmem %s2, 64
  %89 = vst [vmem:[%s88] sm:$0xff] %v86
  %s90 = scalar_lea.vmem %s0, 72
  %v91 = vld [vmem:[%s90] sm:$0xff]
  %s92 = scalar_lea.vmem %s1, 72
  %v93 = vld [vmem:[%s92] sm:$0xff]
  %94 = xla_tuple %v91, %v93
  %95 = xla_tuple %94
  %v96 = vsub.f32 %v91, %v93
  %97 = xla_tuple %v96
  %s98 = scalar_lea.vmem %s2, 72
  %99 = vst [vmem:[%s98] sm:$0xff] %v96
  %s100 = scalar_lea.vmem %s0, 80
  %v101 = vld [vmem:[%s100] sm:$0xff]
  %s102 = scalar_lea.vmem %s1, 80
  %v103 = vld [vmem:[%s102] sm:$0xff]
  %104 = xla_tuple %v101, %v103
  %105 = xla_tuple %104
  %v106 = vsub.f32 %v101, %v103
  %107 = xla_tuple %v106
  %s108 = scalar_lea.vmem %s2, 80
  %109 = vst [vmem:[%s108] sm:$0xff] %v106
  %s110 = scalar_lea.vmem %s0, 88
  %v111 = vld [vmem:[%s110] sm:$0xff]
  %s112 = scalar_lea.vmem %s1, 88
  %v113 = vld [vmem:[%s112] sm:$0xff]
  %114 = xla_tuple %v111, %v113
  %115 = xla_tuple %114
  %v116 = vsub.f32 %v111, %v113
  %117 = xla_tuple %v116
  %s118 = scalar_lea.vmem %s2, 88
  %119 = vst [vmem:[%s118] sm:$0xff] %v116
  %s120 = scalar_lea.vmem %s0, 96
  %v121 = vld [vmem:[%s120] sm:$0xff]
  %s122 = scalar_lea.vmem %s1, 96
  %v123 = vld [vmem:[%s122] sm:$0xff]
  %124 = xla_tuple %v121, %v123
  %125 = xla_tuple %124
  %v126 = vsub.f32 %v121, %v123
  %127 = xla_tuple %v126
  %s128 = scalar_lea.vmem %s2, 96
  %129 = vst [vmem:[%s128] sm:$0xff] %v126
  %s130 = scalar_lea.vmem %s0, 104
  %v131 = vld [vmem:[%s130] sm:$0xff]
  %s132 = scalar_lea.vmem %s1, 104
  %v133 = vld [vmem:[%s132] sm:$0xff]
  %134 = xla_tuple %v131, %v133
  %135 = xla_tuple %134
  %v136 = vsub.f32 %v131, %v133
  %137 = xla_tuple %v136
  %s138 = scalar_lea.vmem %s2, 104
  %139 = vst [vmem:[%s138] sm:$0xff] %v136
  %s140 = scalar_lea.vmem %s0, 112
  %v141 = vld [vmem:[%s140] sm:$0xff]
  %s142 = scalar_lea.vmem %s1, 112
  %v143 = vld [vmem:[%s142] sm:$0xff]
  %144 = xla_tuple %v141, %v143
  %145 = xla_tuple %144
  %v146 = vsub.f32 %v141, %v143
  %147 = xla_tuple %v146
  %s148 = scalar_lea.vmem %s2, 112
  %149 = vst [vmem:[%s148] sm:$0xff] %v146
  %s150 = scalar_lea.vmem %s0, 120
  %v151 = vld [vmem:[%s150] sm:$0xff]
  %s152 = scalar_lea.vmem %s1, 120
  %v153 = vld [vmem:[%s152] sm:$0xff]
  %154 = xla_tuple %v151, %v153
  %155 = xla_tuple %154
  %v156 = vsub.f32 %v151, %v153
  %157 = xla_tuple %v156
  %s158 = scalar_lea.vmem %s2, 120
  %159 = vst [vmem:[%s158] sm:$0xff] %v156
  %s160 = scalar_lea.vmem %s0, 128
  %v161 = vld [vmem:[%s160] sm:$0xff]
  %s162 = scalar_lea.vmem %s1, 128
  %v163 = vld [vmem:[%s162] sm:$0xff]
  %164 = xla_tuple %v161, %v163
  %165 = xla_tuple %164
  %v166 = vsub.f32 %v161, %v163
  %167 = xla_tuple %v166
  %s168 = scalar_lea.vmem %s2, 128
  %169 = vst [vmem:[%s168] sm:$0xff] %v166
  %s170 = scalar_lea.vmem %s0, 136
  %v171 = vld [vmem:[%s170] sm:$0xff]
  %s172 = scalar_lea.vmem %s1, 136
  %v173 = vld [vmem:[%s172] sm:$0xff]
  %174 = xla_tuple %v171, %v173
  %175 = xla_tuple %174
  %v176 = vsub.f32 %v171, %v173
  %177 = xla_tuple %v176
  %s178 = scalar_lea.vmem %s2, 136
  %179 = vst [vmem:[%s178] sm:$0xff] %v176
  %s180 = scalar_lea.vmem %s0, 144
  %v181 = vld [vmem:[%s180] sm:$0xff]
  %s182 = scalar_lea.vmem %s1, 144
  %v183 = vld [vmem:[%s182] sm:$0xff]
  %184 = xla_tuple %v181, %v183
  %185 = xla_tuple %184
  %v186 = vsub.f32 %v181, %v183
  %187 = xla_tuple %v186
  %s188 = scalar_lea.vmem %s2, 144
  %189 = vst [vmem:[%s188] sm:$0xff] %v186
  %s190 = scalar_lea.vmem %s0, 152
  %v191 = vld [vmem:[%s190] sm:$0xff]
  %s192 = scalar_lea.vmem %s1, 152
  %v193 = vld [vmem:[%s192] sm:$0xff]
  %194 = xla_tuple %v191, %v193
  %195 = xla_tuple %194
  %v196 = vsub.f32 %v191, %v193
  %197 = xla_tuple %v196
  %s198 = scalar_lea.vmem %s2, 152
  %199 = vst [vmem:[%s198] sm:$0xff] %v196
  %s200 = scalar_lea.vmem %s0, 160
  %v201 = vld [vmem:[%s200] sm:$0xff]
  %s202 = scalar_lea.vmem %s1, 160
  %v203 = vld [vmem:[%s202] sm:$0xff]
  %204 = xla_tuple %v201, %v203
  %205 = xla_tuple %204
  %v206 = vsub.f32 %v201, %v203
  %207 = xla_tuple %v206
  %s208 = scalar_lea.vmem %s2, 160
  %209 = vst [vmem:[%s208] sm:$0xff] %v206
  %s210 = scalar_lea.vmem %s0, 168
  %v211 = vld [vmem:[%s210] sm:$0xff]
  %s212 = scalar_lea.vmem %s1, 168
  %v213 = vld [vmem:[%s212] sm:$0xff]
  %214 = xla_tuple %v211, %v213
  %215 = xla_tuple %214
  %v216 = vsub.f32 %v211, %v213
  %217 = xla_tuple %v216
  %s218 = scalar_lea.vmem %s2, 168
  %219 = vst [vmem:[%s218] sm:$0xff] %v216
  %s220 = scalar_lea.vmem %s0, 176
  %v221 = vld [vmem:[%s220] sm:$0xff]
  %s222 = scalar_lea.vmem %s1, 176
  %v223 = vld [vmem:[%s222] sm:$0xff]
  %224 = xla_tuple %v221, %v223
  %225 = xla_tuple %224
  %v226 = vsub.f32 %v221, %v223
  %227 = xla_tuple %v226
  %s228 = scalar_lea.vmem %s2, 176
  %229 = vst [vmem:[%s228] sm:$0xff] %v226
  %s230 = scalar_lea.vmem %s0, 184
  %v231 = vld [vmem:[%s230] sm:$0xff]
  %s232 = scalar_lea.vmem %s1, 184
  %v233 = vld [vmem:[%s232] sm:$0xff]
  %234 = xla_tuple %v231, %v233
  %235 = xla_tuple %234
  %v236 = vsub.f32 %v231, %v233
  %237 = xla_tuple %v236
  %s238 = scalar_lea.vmem %s2, 184
  %239 = vst [vmem:[%s238] sm:$0xff] %v236
  %s240 = scalar_lea.vmem %s0, 192
  %v241 = vld [vmem:[%s240] sm:$0xff]
  %s242 = scalar_lea.vmem %s1, 192
  %v243 = vld [vmem:[%s242] sm:$0xff]
  %244 = xla_tuple %v241, %v243
  %245 = xla_tuple %244
  %v246 = vsub.f32 %v241, %v243
  %247 = xla_tuple %v246
  %s248 = scalar_lea.vmem %s2, 192
  %249 = vst [vmem:[%s248] sm:$0xff] %v246
  %s250 = scalar_lea.vmem %s0, 200
  %v251 = vld [vmem:[%s250] sm:$0xff]
  %s252 = scalar_lea.vmem %s1, 200
  %v253 = vld [vmem:[%s252] sm:$0xff]
  %254 = xla_tuple %v251, %v253
  %255 = xla_tuple %254
  %v256 = vsub.f32 %v251, %v253
  %257 = xla_tuple %v256
  %s258 = scalar_lea.vmem %s2, 200
  %259 = vst [vmem:[%s258] sm:$0xff] %v256
  %s260 = scalar_lea.vmem %s0, 208
  %v261 = vld [vmem:[%s260] sm:$0xff]
  %s262 = scalar_lea.vmem %s1, 208
  %v263 = vld [vmem:[%s262] sm:$0xff]
  %264 = xla_tuple %v261, %v263
  %265 = xla_tuple %264
  %v266 = vsub.f32 %v261, %v263
  %267 = xla_tuple %v266
  %s268 = scalar_lea.vmem %s2, 208
  %269 = vst [vmem:[%s268] sm:$0xff] %v266
  %s270 = scalar_lea.vmem %s0, 216
  %v271 = vld [vmem:[%s270] sm:$0xff]
  %s272 = scalar_lea.vmem %s1, 216
  %v273 = vld [vmem:[%s272] sm:$0xff]
  %274 = xla_tuple %v271, %v273
  %275 = xla_tuple %274
  %v276 = vsub.f32 %v271, %v273
  %277 = xla_tuple %v276
  %s278 = scalar_lea.vmem %s2, 216
  %279 = vst [vmem:[%s278] sm:$0xff] %v276
  %s280 = scalar_lea.vmem %s0, 224
  %v281 = vld [vmem:[%s280] sm:$0xff]
  %s282 = scalar_lea.vmem %s1, 224
  %v283 = vld [vmem:[%s282] sm:$0xff]
  %284 = xla_tuple %v281, %v283
  %285 = xla_tuple %284
  %v286 = vsub.f32 %v281, %v283
  %287 = xla_tuple %v286
  %s288 = scalar_lea.vmem %s2, 224
  %289 = vst [vmem:[%s288] sm:$0xff] %v286
  %s290 = scalar_lea.vmem %s0, 232
  %v291 = vld [vmem:[%s290] sm:$0xff]
  %s292 = scalar_lea.vmem %s1, 232
  %v293 = vld [vmem:[%s292] sm:$0xff]
  %294 = xla_tuple %v291, %v293
  %295 = xla_tuple %294
  %v296 = vsub.f32 %v291, %v293
  %297 = xla_tuple %v296
  %s298 = scalar_lea.vmem %s2, 232
  %299 = vst [vmem:[%s298] sm:$0xff] %v296
  %s300 = scalar_lea.vmem %s0, 240
  %v301 = vld [vmem:[%s300] sm:$0xff]
  %s302 = scalar_lea.vmem %s1, 240
  %v303 = vld [vmem:[%s302] sm:$0xff]
  %304 = xla_tuple %v301, %v303
  %305 = xla_tuple %304
  %v306 = vsub.f32 %v301, %v303
  %307 = xla_tuple %v306
  %s308 = scalar_lea.vmem %s2, 240
  %309 = vst [vmem:[%s308] sm:$0xff] %v306

// kernel: _lambda_.3
$region0: #{_lambda_.3}
  #allocation0 [shape = 'u32[]', space=smem, size = 0x4, offset = 0x4, fixed_abs, tag = 'smem constant byte address 0x4 - core index']
  #allocation1 [shape = 'u32[144,128]{1,0:T(1,128)}', space=vmem, size = 0x12000, scoped, tag = 'internal scratch']
  %s0 = inlined_call_operand.vmem [shape: f32[64,128], index: 0, kind: input, shape index: {}]
  %s1 = inlined_call_operand.vmem [shape: f32[64,1], index: 1, kind: input, shape index: {}]
  %s2 = inlined_call_operand.vmem [shape: f32[1,50], index: 2, kind: input, shape index: {}]
  %s3 = inlined_call_operand.vmem [shape: f32[128,512], index: 3, kind: input, shape index: {}]
  %s4 = inlined_call_operand.vmem [shape: f32[1,512], index: 4, kind: input, shape index: {}]
  %s5 = inlined_call_operand.vmem [shape: f32[512,50], index: 5, kind: input, shape index: {}]
  %s6 = inlined_call_operand.vmem [shape: f32[1,50], index: 6, kind: input, shape index: {}]
  %s7 = inlined_call_operand.vmem [shape: f32[64,50], index: 7, kind: output, shape index: {}]
  %s8 = sld [smem:[#allocation0]]
  $region38: #{_lambda_.3} parent=0
    _
  %s10 = ssub.s32 1, %s8
  %s11 = scalar_select 0, %s10, %s8
  // Predicated region
  $region2: #{_lambda_.3} parent=0 // pred_check
    _
  $region3: #{_lambda_.3} parent=0 // pred_check_branch
    %13 = sbr.rel (0) target = $region5
  $region4: #{_lambda_.3} parent=0 // pred_region
    _
  $region5: #{_lambda_.3} parent=0 // pred_fallthru
    _
  // Predicated region
  $region6: #{_lambda_.3} parent=0 // pred_check
    _
  $region7: #{_lambda_.3} parent=0 // pred_check_branch
    %15 = sbr.rel (0) target = $region9
  $region8: #{_lambda_.3} parent=0 // pred_region
    _
  $region9: #{_lambda_.3} parent=0 // pred_fallthru
    _
  // Predicated region
  $region10: #{_lambda_.3} parent=0 // pred_check
    _
  $region11: #{_lambda_.3} parent=0 // pred_check_branch
    %17 = sbr.rel (0) target = $region13
  $region12: #{_lambda_.3} parent=0 // pred_region
    _
  $region13: #{_lambda_.3} parent=0 // pred_fallthru
    _
  // Predicated region
  $region14: #{_lambda_.3} parent=0 // pred_check
    _
  $region15: #{_lambda_.3} parent=0 // pred_check_branch
    %19 = sbr.rel (0) target = $region17
  $region16: #{_lambda_.3} parent=0 // pred_region
    _
  $region17: #{_lambda_.3} parent=0 // pred_fallthru
    _
  // Predicated region
  $region18: #{_lambda_.3} parent=0 // pred_check
    _
  $region19: #{_lambda_.3} parent=0 // pred_check_branch
    %21 = sbr.rel (0) target = $region21
  $region20: #{_lambda_.3} parent=0 // pred_region
    _
  $region21: #{_lambda_.3} parent=0 // pred_fallthru
    _
  // Predicated region
  $region22: #{_lambda_.3} parent=0 // pred_check
    _
  $region23: #{_lambda_.3} parent=0 // pred_check_branch
    %23 = sbr.rel (0) target = $region25
  $region24: #{_lambda_.3} parent=0 // pred_region
    _
  $region25: #{_lambda_.3} parent=0 // pred_fallthru
    _
  // Predicated region
  $region26: #{_lambda_.3} parent=0 // pred_check
    _
  $region27: #{_lambda_.3} parent=0 // pred_check_branch
    %25 = sbr.rel (0) target = $region29
  $region28: #{_lambda_.3} parent=0 // pred_region
    _
  $region29: #{_lambda_.3} parent=0 // pred_fallthru
    _
  %v26 = vld [vmem:[%s0] sm:$0xff]
  %v27 = vld [vmem:[%s0 + $0x8] sm:$0xff]
  %v28 = vld [vmem:[%s0 + $0x10] sm:$0xff]
  %v29 = vld [vmem:[%s0 + $0x18] sm:$0xff]
  %v30 = vld [vmem:[%s0 + $0x20] sm:$0xff]
  %v31 = vld [vmem:[%s0 + $0x28] sm:$0xff]
  %v32 = vld [vmem:[%s0 + $0x30] sm:$0xff]
  %v33 = vld [vmem:[%s0 + $0x38] sm:$0xff]
  %v34 = vld [vmem:[%s3] sm:$0xff]
  %v35 = vld [vmem:[%s3 + $0x8] sm:$0xff]
  %v36 = vld [vmem:[%s3 + $0x10] sm:$0xff]
  %v37 = vld [vmem:[%s3 + $0x18] sm:$0xff]
  %v38 = vld [vmem:[%s3 + $0x20] sm:$0xff]
  %v39 = vld [vmem:[%s3 + $0x28] sm:$0xff]
  %v40 = vld [vmem:[%s3 + $0x30] sm:$0xff]
  %v41 = vld [vmem:[%s3 + $0x38] sm:$0xff]
  %v42 = vld [vmem:[%s3 + $0x40] sm:$0xff]
  %v43 = vld [vmem:[%s3 + $0x48] sm:$0xff]
  %v44 = vld [vmem:[%s3 + $0x50] sm:$0xff]
  %v45 = vld [vmem:[%s3 + $0x58] sm:$0xff]
  %v46 = vld [vmem:[%s3 + $0x60] sm:$0xff]
  %v47 = vld [vmem:[%s3 + $0x68] sm:$0xff]
  %v48 = vld [vmem:[%s3 + $0x70] sm:$0xff]
  %v49 = vld [vmem:[%s3 + $0x78] sm:$0xff]
  %v50 = vld [vmem:[%s3 + $0x80] sm:$0xff]
  %v51 = vld [vmem:[%s3 + $0x88] sm:$0xff]
  %v52 = vld [vmem:[%s3 + $0x90] sm:$0xff]
  %v53 = vld [vmem:[%s3 + $0x98] sm:$0xff]
  %v54 = vld [vmem:[%s3 + $0xa0] sm:$0xff]
  %v55 = vld [vmem:[%s3 + $0xa8] sm:$0xff]
  %v56 = vld [vmem:[%s3 + $0xb0] sm:$0xff]
  %v57 = vld [vmem:[%s3 + $0xb8] sm:$0xff]
  %v58 = vld [vmem:[%s3 + $0xc0] sm:$0xff]
  %v59 = vld [vmem:[%s3 + $0xc8] sm:$0xff]
  %v60 = vld [vmem:[%s3 + $0xd0] sm:$0xff]
  %v61 = vld [vmem:[%s3 + $0xd8] sm:$0xff]
  %v62 = vld [vmem:[%s3 + $0xe0] sm:$0xff]
  %v63 = vld [vmem:[%s3 + $0xe8] sm:$0xff]
  %v64 = vld [vmem:[%s3 + $0xf0] sm:$0xff]
  %v65 = vld [vmem:[%s3 + $0xf8] sm:$0xff]
  %v66 = vld [vmem:[%s3 + $0x100] sm:$0xff]
  %v67 = vld [vmem:[%s3 + $0x108] sm:$0xff]
  %v68 = vld [vmem:[%s3 + $0x110] sm:$0xff]
  %v69 = vld [vmem:[%s3 + $0x118] sm:$0xff]
  %v70 = vld [vmem:[%s3 + $0x120] sm:$0xff]
  %v71 = vld [vmem:[%s3 + $0x128] sm:$0xff]
  %v72 = vld [vmem:[%s3 + $0x130] sm:$0xff]
  %v73 = vld [vmem:[%s3 + $0x138] sm:$0xff]
  %v74 = vld [vmem:[%s3 + $0x140] sm:$0xff]
  %v75 = vld [vmem:[%s3 + $0x148] sm:$0xff]
  %v76 = vld [vmem:[%s3 + $0x150] sm:$0xff]
  %v77 = vld [vmem:[%s3 + $0x158] sm:$0xff]
  %v78 = vld [vmem:[%s3 + $0x160] sm:$0xff]
  %v79 = vld [vmem:[%s3 + $0x168] sm:$0xff]
  %v80 = vld [vmem:[%s3 + $0x170] sm:$0xff]
  %v81 = vld [vmem:[%s3 + $0x178] sm:$0xff]
  %v82 = vld [vmem:[%s3 + $0x180] sm:$0xff]
  %v83 = vld [vmem:[%s3 + $0x188] sm:$0xff]
  %v84 = vld [vmem:[%s3 + $0x190] sm:$0xff]
  %v85 = vld [vmem:[%s3 + $0x198] sm:$0xff]
  %v86 = vld [vmem:[%s3 + $0x1a0] sm:$0xff]
  %v87 = vld [vmem:[%s3 + $0x1a8] sm:$0xff]
  %v88 = vld [vmem:[%s3 + $0x1b0] sm:$0xff]
  %v89 = vld [vmem:[%s3 + $0x1b8] sm:$0xff]
  %v90 = vld [vmem:[%s3 + $0x1c0] sm:$0xff]
  %v91 = vld [vmem:[%s3 + $0x1c8] sm:$0xff]
  %v92 = vld [vmem:[%s3 + $0x1d0] sm:$0xff]
  %v93 = vld [vmem:[%s3 + $0x1d8] sm:$0xff]
  %v94 = vld [vmem:[%s3 + $0x1e0] sm:$0xff]
  %v95 = vld [vmem:[%s3 + $0x1e8] sm:$0xff]
  %v96 = vld [vmem:[%s3 + $0x1f0] sm:$0xff]
  %v97 = vld [vmem:[%s3 + $0x1f8] sm:$0xff]
  %v98 = vld [vmem:[%s4] sm:$0xf]
  %v100 = vlaneseq
  %v101 = vshrl.u32 %v100, 7
  %v102 = vsub.s32 0, %v101
  %v103 = vrot.slane %v98, %v102
  %v104 = vlaneseq
  %v105 = vshrl.u32 %v104, 7
  %v106 = vsub.s32 1, %v105
  %v107 = vrot.slane %v98, %v106
  %v108 = vlaneseq
  %v109 = vshrl.u32 %v108, 7
  %v110 = vsub.s32 2, %v109
  %v111 = vrot.slane %v98, %v110
  %v112 = vlaneseq
  %v113 = vshrl.u32 %v112, 7
  %v114 = vsub.s32 3, %v113
  %v115 = vrot.slane %v98, %v114
  %120 = vmatprep.subr.mxu0 %v35
  %121 = vmatpush1.msra.mxu0 %v34
  %122 = vmatprep.subr.mxu0 %v39
  %123 = vmatpush1.msra.mxu0 %v38
  %124 = vmatprep.subr.mxu0 %v43
  %125 = vmatpush1.msra.mxu0 %v42
  %126 = vmatprep.subr.mxu0 %v47
  %127 = vmatpush1.msra.mxu0 %v46
  %128 = vmatprep.subr.mxu0 %v51
  %129 = vmatpush1.msra.mxu0 %v50
  %130 = vmatprep.subr.mxu0 %v55
  %131 = vmatpush1.msra.mxu0 %v54
  %132 = vmatprep.subr.mxu0 %v59
  %133 = vmatpush1.msra.mxu0 %v58
  %134 = vmatprep.subr.mxu0 %v63
  %135 = vmatpush1.msra.mxu0 %v62
  %136 = vmatprep.subr.mxu0 %v67
  %137 = vmatpush1.msra.mxu0 %v66
  %138 = vmatprep.subr.mxu0 %v71
  %139 = vmatpush1.msra.mxu0 %v70
  %140 = vmatprep.subr.mxu0 %v75
  %141 = vmatpush1.msra.mxu0 %v74
  %142 = vmatprep.subr.mxu0 %v79
  %143 = vmatpush1.msra.mxu0 %v78
  %144 = vmatprep.subr.mxu0 %v83
  %145 = vmatpush1.msra.mxu0 %v82
  %146 = vmatprep.subr.mxu0 %v87
  %147 = vmatpush1.msra.mxu0 %v86
  %148 = vmatprep.subr.mxu0 %v91
  %149 = vmatpush1.msra.mxu0 %v90
  %150 = vmatprep.subr.mxu0 %v95
  %151 = vmatpush1.msra.mxu0 %v94
  %152 = vmatprep.subr.mxu0 0.0
  %153 = vmatpush1.msra.mxu0 0.0
  %154 = vmatprep.subr.mxu0 0.0
  %155 = vmatpush1.msra.mxu0 0.0
  %156 = vmatprep.subr.mxu0 0.0
  %157 = vmatpush1.msra.mxu0 0.0
  %158 = vmatprep.subr.mxu0 0.0
  %159 = vmatpush1.msra.mxu0 0.0
  %160 = vmatprep.subr.mxu0 0.0
  %161 = vmatpush1.msra.mxu0 0.0
  %162 = vmatprep.subr.mxu0 0.0
  %163 = vmatpush1.msra.mxu0 0.0
  %164 = vmatprep.subr.mxu0 0.0
  %165 = vmatpush1.msra.mxu0 0.0
  %166 = vmatprep.subr.mxu0 0.0
  %167 = vmatpush1.msra.mxu0 0.0
  %168 = vmatprep.subr.mxu0 0.0
  %169 = vmatpush1.msra.mxu0 0.0
  %170 = vmatprep.subr.mxu0 0.0
  %171 = vmatpush1.msra.mxu0 0.0
  %172 = vmatprep.subr.mxu0 0.0
  %173 = vmatpush1.msra.mxu0 0.0
  %174 = vmatprep.subr.mxu0 0.0
  %175 = vmatpush1.msra.mxu0 0.0
  %176 = vmatprep.subr.mxu0 0.0
  %177 = vmatpush1.msra.mxu0 0.0
  %178 = vmatprep.subr.mxu0 0.0
  %179 = vmatpush1.msra.mxu0 0.0
  %180 = vmatprep.subr.mxu0 0.0
  %181 = vmatpush1.msra.mxu0 0.0
  %182 = vmatprep.subr.mxu0 0.0
  %183 = vmatpush1.msra.mxu0 0.0
  %184 = vmatprep.mubr.f32.mxu0 0.0
  %185 = vmatmul.mubr.f32.gmra.mrb[0].mxu0 %v26
  %v186 = vpop.f32.mrb[0].mxu0
  %v187 = vadd.f32 %v103, %v186
  %v188 = vpop.f32.mrb[0].mxu0
  %v189 = vadd.f32 %v107, %v188
  %190 = vmatprep.mubr.f32.mxu0 0.0
  %191 = vmatmul.mubr.f32.gmra.mrb[0].mxu0 %v27
  %v192 = vpop.f32.mrb[0].mxu0
  %v193 = vadd.f32 %v103, %v192
  %v194 = vpop.f32.mrb[0].mxu0
  %v195 = vadd.f32 %v107, %v194
  %196 = vmatprep.mubr.f32.mxu0 0.0
  %197 = vmatmul.mubr.f32.gmra.mrb[0].mxu0 %v28
  %v198 = vpop.f32.mrb[0].mxu0
  %v199 = vadd.f32 %v103, %v198
  %v200 = vpop.f32.mrb[0].mxu0
  %v201 = vadd.f32 %v107, %v200
  %202 = vmatprep.mubr.f32.mxu0 0.0
  %203 = vmatmul.mubr.f32.gmra.mrb[0].mxu0 %v29
  %v204 = vpop.f32.mrb[0].mxu0
  %v205 = vadd.f32 %v103, %v204
  %v206 = vpop.f32.mrb[0].mxu0
  %v207 = vadd.f32 %v107, %v206
  %208 = vmatprep.mubr.f32.mxu0 0.0
  %209 = vmatmul.mubr.f32.gmra.mrb[0].mxu0 %v30
  %v210 = vpop.f32.mrb[0].mxu0
  %v211 = vadd.f32 %v103, %v210
  %v212 = vpop.f32.mrb[0].mxu0
  %v213 = vadd.f32 %v107, %v212
  %214 = vmatprep.mubr.f32.mxu0 0.0
  %215 = vmatmul.mubr.f32.gmra.mrb[0].mxu0 %v31
  %v216 = vpop.f32.mrb[0].mxu0
  %v217 = vadd.f32 %v103, %v216
  %v218 = vpop.f32.mrb[0].mxu0
  %v219 = vadd.f32 %v107, %v218
  %220 = vmatprep.mubr.f32.mxu0 0.0
  %221 = vmatmul.mubr.f32.gmra.mrb[0].mxu0 %v32
  %v222 = vpop.f32.mrb[0].mxu0
  %v223 = vadd.f32 %v103, %v222
  %v224 = vpop.f32.mrb[0].mxu0
  %v225 = vadd.f32 %v107, %v224
  %226 = vmatprep.mubr.f32.mxu0 0.0
  %227 = vmatmul.mubr.f32.gmra.mrb[0].mxu0 %v33
  %v228 = vpop.f32.mrb[0].mxu0
  %v229 = vadd.f32 %v103, %v228
  %v230 = vpop.f32.mrb[0].mxu0
  %v231 = vadd.f32 %v107, %v230
  %232 = vdwg.mxu0
  %233 = vmatprep.subr.mxu0 %v37
  %234 = vmatpush1.msra.mxu0 %v36
  %235 = vmatprep.subr.mxu0 %v41
  %236 = vmatpush1.msra.mxu0 %v40
  %237 = vmatprep.subr.mxu0 %v45
  %238 = vmatpush1.msra.mxu0 %v44
  %239 = vmatprep.subr.mxu0 %v49
  %240 = vmatpush1.msra.mxu0 %v48
  %241 = vmatprep.subr.mxu0 %v53
  %242 = vmatpush1.msra.mxu0 %v52
  %243 = vmatprep.subr.mxu0 %v57
  %244 = vmatpush1.msra.mxu0 %v56
  %245 = vmatprep.subr.mxu0 %v61
  %246 = vmatpush1.msra.mxu0 %v60
  %247 = vmatprep.subr.mxu0 %v65
  %248 = vmatpush1.msra.mxu0 %v64
  %249 = vmatprep.subr.mxu0 %v69
  %250 = vmatpush1.msra.mxu0 %v68
  %251 = vmatprep.subr.mxu0 %v73
  %252 = vmatpush1.msra.mxu0 %v72
  %253 = vmatprep.subr.mxu0 %v77
  %254 = vmatpush1.msra.mxu0 %v76
  %255 = vmatprep.subr.mxu0 %v81
  %256 = vmatpush1.msra.mxu0 %v80
  %257 = vmatprep.subr.mxu0 %v85
  %258 = vmatpush1.msra.mxu0 %v84
  %259 = vmatprep.subr.mxu0 %v89
  %260 = vmatpush1.msra.mxu0 %v88
  %261 = vmatprep.subr.mxu0 %v93
  %262 = vmatpush1.msra.mxu0 %v92
  %263 = vmatprep.subr.mxu0 %v97
  %264 = vmatpush1.msra.mxu0 %v96
  %265 = vmatprep.subr.mxu0 0.0
  %266 = vmatpush1.msra.mxu0 0.0
  %267 = vmatprep.subr.mxu0 0.0
  %268 = vmatpush1.msra.mxu0 0.0
  %269 = vmatprep.subr.mxu0 0.0
  %270 = vmatpush1.msra.mxu0 0.0
  %271 = vmatprep.subr.mxu0 0.0
  %272 = vmatpush1.msra.mxu0 0.0
  %273 = vmatprep.subr.mxu0 0.0
  %274 = vmatpush1.msra.mxu0 0.0
  %275 = vmatprep.subr.mxu0 0.0
  %276 = vmatpush1.msra.mxu0 0.0
  %277 = vmatprep.subr.mxu0 0.0
  %278 = vmatpush1.msra.mxu0 0.0
  %279 = vmatprep.subr.mxu0 0.0
  %280 = vmatpush1.msra.mxu0 0.0
  %281 = vmatprep.subr.mxu0 0.0
  %282 = vmatpush1.msra.mxu0 0.0
  %283 = vmatprep.subr.mxu0 0.0
  %284 = vmatpush1.msra.mxu0 0.0
  %285 = vmatprep.subr.mxu0 0.0
  %286 = vmatpush1.msra.mxu0 0.0
  %287 = vmatprep.subr.mxu0 0.0
  %288 = vmatpush1.msra.mxu0 0.0
  %289 = vmatprep.subr.mxu0 0.0
  %290 = vmatpush1.msra.mxu0 0.0
  %291 = vmatprep.subr.mxu0 0.0
  %292 = vmatpush1.msra.mxu0 0.0
  %293 = vmatprep.subr.mxu0 0.0
  %294 = vmatpush1.msra.mxu0 0.0
  %295 = vmatprep.subr.mxu0 0.0
  %296 = vmatpush1.msra.mxu0 0.0
  %297 = vmatprep.mubr.f32.mxu0 0.0
  %298 = vmatmul.mubr.f32.gmra.mrb[0].mxu0 %v26
  %v299 = vpop.f32.mrb[0].mxu0
  %v300 = vadd.f32 %v111, %v299
  %v301 = vpop.f32.mrb[0].mxu0
  %v302 = vadd.f32 %v115, %v301
  %303 = vmatprep.mubr.f32.mxu0 0.0
  %304 = vmatmul.mubr.f32.gmra.mrb[0].mxu0 %v27
  %v305 = vpop.f32.mrb[0].mxu0
  %v306 = vadd.f32 %v111, %v305
  %v307 = vpop.f32.mrb[0].mxu0
  %v308 = vadd.f32 %v115, %v307
  %309 = vmatprep.mubr.f32.mxu0 0.0
  %310 = vmatmul.mubr.f32.gmra.mrb[0].mxu0 %v28
  %v311 = vpop.f32.mrb[0].mxu0
  %v312 = vadd.f32 %v111, %v311
  %v313 = vpop.f32.mrb[0].mxu0
  %v314 = vadd.f32 %v115, %v313
  %315 = vmatprep.mubr.f32.mxu0 0.0
  %316 = vmatmul.mubr.f32.gmra.mrb[0].mxu0 %v29
  %v317 = vpop.f32.mrb[0].mxu0
  %v318 = vadd.f32 %v111, %v317
  %v319 = vpop.f32.mrb[0].mxu0
  %v320 = vadd.f32 %v115, %v319
  %321 = vmatprep.mubr.f32.mxu0 0.0
  %322 = vmatmul.mubr.f32.gmra.mrb[0].mxu0 %v30
  %v323 = vpop.f32.mrb[0].mxu0
  %v324 = vadd.f32 %v111, %v323
  %v325 = vpop.f32.mrb[0].mxu0
  %v326 = vadd.f32 %v115, %v325
  %327 = vmatprep.mubr.f32.mxu0 0.0
  %328 = vmatmul.mubr.f32.gmra.mrb[0].mxu0 %v31
  %v329 = vpop.f32.mrb[0].mxu0
  %v330 = vadd.f32 %v111, %v329
  %v331 = vpop.f32.mrb[0].mxu0
  %v332 = vadd.f32 %v115, %v331
  %333 = vmatprep.mubr.f32.mxu0 0.0
  %334 = vmatmul.mubr.f32.gmra.mrb[0].mxu0 %v32
  %v335 = vpop.f32.mrb[0].mxu0
  %v336 = vadd.f32 %v111, %v335
  %v337 = vpop.f32.mrb[0].mxu0
  %v338 = vadd.f32 %v115, %v337
  %339 = vmatprep.mubr.f32.mxu0 0.0
  %340 = vmatmul.mubr.f32.gmra.mrb[0].mxu0 %v33
  %v341 = vpop.f32.mrb[0].mxu0
  %v342 = vadd.f32 %v111, %v341
  %v343 = vpop.f32.mrb[0].mxu0
  %v344 = vadd.f32 %v115, %v343
  %345 = vdwg.mxu0
  %v346 = vxor.u32 %v187, 2147483648
  %v347 = vxor.u32 %v189, 2147483648
  %v348 = vxor.u32 %v300, 2147483648
  %v349 = vxor.u32 %v302, 2147483648
  %v350 = vxor.u32 %v193, 2147483648
  %v351 = vxor.u32 %v195, 2147483648
  %v352 = vxor.u32 %v306, 2147483648
  %v353 = vxor.u32 %v308, 2147483648
  %v354 = vxor.u32 %v199, 2147483648
  %v355 = vxor.u32 %v201, 2147483648
  %v356 = vxor.u32 %v312, 2147483648
  %v357 = vxor.u32 %v314, 2147483648
  %v358 = vxor.u32 %v205, 2147483648
  %v359 = vxor.u32 %v207, 2147483648
  %v360 = vxor.u32 %v318, 2147483648
  %v361 = vxor.u32 %v320, 2147483648
  %v362 = vxor.u32 %v211, 2147483648
  %v363 = vxor.u32 %v213, 2147483648
  %v364 = vxor.u32 %v324, 2147483648
  %v365 = vxor.u32 %v326, 2147483648
  %v366 = vxor.u32 %v217, 2147483648
  %v367 = vxor.u32 %v219, 2147483648
  %v368 = vxor.u32 %v330, 2147483648
  %v369 = vxor.u32 %v332, 2147483648
  %v370 = vxor.u32 %v223, 2147483648
  %v371 = vxor.u32 %v225, 2147483648
  %v372 = vxor.u32 %v336, 2147483648
  %v373 = vxor.u32 %v338, 2147483648
  %v374 = vxor.u32 %v229, 2147483648
  %v375 = vxor.u32 %v231, 2147483648
  %v376 = vxor.u32 %v342, 2147483648
  %v377 = vxor.u32 %v344, 2147483648
  %v378 = vmul.f32 %v346, 1.442695
  %v379 = vpow.pop %v378
  %v380 = vmul.f32 %v347, 1.442695
  %v381 = vpow.pop %v380
  %v382 = vmul.f32 %v348, 1.442695
  %v383 = vpow.pop %v382
  %v384 = vmul.f32 %v349, 1.442695
  %v385 = vpow.pop %v384
  %v386 = vmul.f32 %v350, 1.442695
  %v387 = vpow.pop %v386
  %v388 = vmul.f32 %v351, 1.442695
  %v389 = vpow.pop %v388
  %v390 = vmul.f32 %v352, 1.442695
  %v391 = vpow.pop %v390
  %v392 = vmul.f32 %v353, 1.442695
  %v393 = vpow.pop %v392
  %v394 = vmul.f32 %v354, 1.442695
  %v395 = vpow.pop %v394
  %v396 = vmul.f32 %v355, 1.442695
  %v397 = vpow.pop %v396
  %v398 = vmul.f32 %v356, 1.442695
  %v399 = vpow.pop %v398
  %v400 = vmul.f32 %v357, 1.442695
  %v401 = vpow.pop %v400
  %v402 = vmul.f32 %v358, 1.442695
  %v403 = vpow.pop %v402
  %v404 = vmul.f32 %v359, 1.442695
  %v405 = vpow.pop %v404
  %v406 = vmul.f32 %v360, 1.442695
  %v407 = vpow.pop %v406
  %v408 = vmul.f32 %v361, 1.442695
  %v409 = vpow.pop %v408
  %v410 = vmul.f32 %v362, 1.442695
  %v411 = vpow.pop %v410
  %v412 = vmul.f32 %v363, 1.442695
  %v413 = vpow.pop %v412
  %v414 = vmul.f32 %v364, 1.442695
  %v415 = vpow.pop %v414
  %v416 = vmul.f32 %v365, 1.442695
  %v417 = vpow.pop %v416
  %v418 = vmul.f32 %v366, 1.442695
  %v419 = vpow.pop %v418
  %v420 = vmul.f32 %v367, 1.442695
  %v421 = vpow.pop %v420
  %v422 = vmul.f32 %v368, 1.442695
  %v423 = vpow.pop %v422
  %v424 = vmul.f32 %v369, 1.442695
  %v425 = vpow.pop %v424
  %v426 = vmul.f32 %v370, 1.442695
  %v427 = vpow.pop %v426
  %v428 = vmul.f32 %v371, 1.442695
  %v429 = vpow.pop %v428
  %v430 = vmul.f32 %v372, 1.442695
  %v431 = vpow.pop %v430
  %v432 = vmul.f32 %v373, 1.442695
  %v433 = vpow.pop %v432
  %v434 = vmul.f32 %v374, 1.442695
  %v435 = vpow.pop %v434
  %v436 = vmul.f32 %v375, 1.442695
  %v437 = vpow.pop %v436
  %v438 = vmul.f32 %v376, 1.442695
  %v439 = vpow.pop %v438
  %v440 = vmul.f32 %v377, 1.442695
  %v441 = vpow.pop %v440
  %v442 = vadd.f32 %v379, 1.0
  %v443 = vadd.f32 %v381, 1.0
  %v444 = vadd.f32 %v383, 1.0
  %v445 = vadd.f32 %v385, 1.0
  %v446 = vadd.f32 %v387, 1.0
  %v447 = vadd.f32 %v389, 1.0
  %v448 = vadd.f32 %v391, 1.0
  %v449 = vadd.f32 %v393, 1.0
  %v450 = vadd.f32 %v395, 1.0
  %v451 = vadd.f32 %v397, 1.0
  %v452 = vadd.f32 %v399, 1.0
  %v453 = vadd.f32 %v401, 1.0
  %v454 = vadd.f32 %v403, 1.0
  %v455 = vadd.f32 %v405, 1.0
  %v456 = vadd.f32 %v407, 1.0
  %v457 = vadd.f32 %v409, 1.0
  %v458 = vadd.f32 %v411, 1.0
  %v459 = vadd.f32 %v413, 1.0
  %v460 = vadd.f32 %v415, 1.0
  %v461 = vadd.f32 %v417, 1.0
  %v462 = vadd.f32 %v419, 1.0
  %v463 = vadd.f32 %v421, 1.0
  %v464 = vadd.f32 %v423, 1.0
  %v465 = vadd.f32 %v425, 1.0
  %v466 = vadd.f32 %v427, 1.0
  %v467 = vadd.f32 %v429, 1.0
  %v468 = vadd.f32 %v431, 1.0
  %v469 = vadd.f32 %v433, 1.0
  %v470 = vadd.f32 %v435, 1.0
  %v471 = vadd.f32 %v437, 1.0
  %v472 = vadd.f32 %v439, 1.0
  %v473 = vadd.f32 %v441, 1.0
  %v474 = vrcp.pop %v442
  %v475 = vmul.f32 1.0, %v474
  %v476 = vrcp.pop %v443
  %v477 = vmul.f32 1.0, %v476
  %v478 = vrcp.pop %v444
  %v479 = vmul.f32 1.0, %v478
  %v480 = vrcp.pop %v445
  %v481 = vmul.f32 1.0, %v480
  %v482 = vrcp.pop %v446
  %v483 = vmul.f32 1.0, %v482
  %v484 = vrcp.pop %v447
  %v485 = vmul.f32 1.0, %v484
  %v486 = vrcp.pop %v448
  %v487 = vmul.f32 1.0, %v486
  %v488 = vrcp.pop %v449
  %v489 = vmul.f32 1.0, %v488
  %v490 = vrcp.pop %v450
  %v491 = vmul.f32 1.0, %v490
  %v492 = vrcp.pop %v451
  %v493 = vmul.f32 1.0, %v492
  %v494 = vrcp.pop %v452
  %v495 = vmul.f32 1.0, %v494
  %v496 = vrcp.pop %v453
  %v497 = vmul.f32 1.0, %v496
  %v498 = vrcp.pop %v454
  %v499 = vmul.f32 1.0, %v498
  %v500 = vrcp.pop %v455
  %v501 = vmul.f32 1.0, %v500
  %v502 = vrcp.pop %v456
  %v503 = vmul.f32 1.0, %v502
  %v504 = vrcp.pop %v457
  %v505 = vmul.f32 1.0, %v504
  %v506 = vrcp.pop %v458
  %v507 = vmul.f32 1.0, %v506
  %v508 = vrcp.pop %v459
  %v509 = vmul.f32 1.0, %v508
  %v510 = vrcp.pop %v460
  %v511 = vmul.f32 1.0, %v510
  %v512 = vrcp.pop %v461
  %v513 = vmul.f32 1.0, %v512
  %v514 = vrcp.pop %v462
  %v515 = vmul.f32 1.0, %v514
  %v516 = vrcp.pop %v463
  %v517 = vmul.f32 1.0, %v516
  %v518 = vrcp.pop %v464
  %v519 = vmul.f32 1.0, %v518
  %v520 = vrcp.pop %v465
  %v521 = vmul.f32 1.0, %v520
  %v522 = vrcp.pop %v466
  %v523 = vmul.f32 1.0, %v522
  %v524 = vrcp.pop %v467
  %v525 = vmul.f32 1.0, %v524
  %v526 = vrcp.pop %v468
  %v527 = vmul.f32 1.0, %v526
  %v528 = vrcp.pop %v469
  %v529 = vmul.f32 1.0, %v528
  %v530 = vrcp.pop %v470
  %v531 = vmul.f32 1.0, %v530
  %v532 = vrcp.pop %v471
  %v533 = vmul.f32 1.0, %v532
  %v534 = vrcp.pop %v472
  %v535 = vmul.f32 1.0, %v534
  %v536 = vrcp.pop %v473
  %v537 = vmul.f32 1.0, %v536
  %v538 = vmul.f32 %v187, %v475
  %v539 = vmul.f32 %v189, %v477
  %v540 = vmul.f32 %v300, %v479
  %v541 = vmul.f32 %v302, %v481
  %v542 = vmul.f32 %v193, %v483
  %v543 = vmul.f32 %v195, %v485
  %v544 = vmul.f32 %v306, %v487
  %v545 = vmul.f32 %v308, %v489
  %v546 = vmul.f32 %v199, %v491
  %v547 = vmul.f32 %v201, %v493
  %v548 = vmul.f32 %v312, %v495
  %v549 = vmul.f32 %v314, %v497
  %v550 = vmul.f32 %v205, %v499
  %v551 = vmul.f32 %v207, %v501
  %v552 = vmul.f32 %v318, %v503
  %v553 = vmul.f32 %v320, %v505
  %v554 = vmul.f32 %v211, %v507
  %v555 = vmul.f32 %v213, %v509
  %v556 = vmul.f32 %v324, %v511
  %v557 = vmul.f32 %v326, %v513
  %v558 = vmul.f32 %v217, %v515
  %v559 = vmul.f32 %v219, %v517
  %v560 = vmul.f32 %v330, %v519
  %v561 = vmul.f32 %v332, %v521
  %v562 = vmul.f32 %v223, %v523
  %v563 = vmul.f32 %v225, %v525
  %v564 = vmul.f32 %v336, %v527
  %v565 = vmul.f32 %v338, %v529
  %v566 = vmul.f32 %v229, %v531
  %v567 = vmul.f32 %v231, %v533
  %v568 = vmul.f32 %v342, %v535
  %v569 = vmul.f32 %v344, %v537
  %v570 = vld [vmem:[%s5] sm:$0xff]
  %v571 = vld [vmem:[%s5 + $0x8] sm:$0xff]
  %v572 = vld [vmem:[%s5 + $0x10] sm:$0xff]
  %v573 = vld [vmem:[%s5 + $0x18] sm:$0xff]
  %v574 = vld [vmem:[%s5 + $0x20] sm:$0xff]
  %v575 = vld [vmem:[%s5 + $0x28] sm:$0xff]
  %v576 = vld [vmem:[%s5 + $0x30] sm:$0xff]
  %v577 = vld [vmem:[%s5 + $0x38] sm:$0xff]
  %v578 = vld [vmem:[%s5 + $0x40] sm:$0xff]
  %v579 = vld [vmem:[%s5 + $0x48] sm:$0xff]
  %v580 = vld [vmem:[%s5 + $0x50] sm:$0xff]
  %v581 = vld [vmem:[%s5 + $0x58] sm:$0xff]
  %v582 = vld [vmem:[%s5 + $0x60] sm:$0xff]
  %v583 = vld [vmem:[%s5 + $0x68] sm:$0xff]
  %v584 = vld [vmem:[%s5 + $0x70] sm:$0xff]
  %v585 = vld [vmem:[%s5 + $0x78] sm:$0xff]
  %v586 = vld [vmem:[%s5 + $0x80] sm:$0xff]
  %v587 = vld [vmem:[%s5 + $0x88] sm:$0xff]
  %v588 = vld [vmem:[%s5 + $0x90] sm:$0xff]
  %v589 = vld [vmem:[%s5 + $0x98] sm:$0xff]
  %v590 = vld [vmem:[%s5 + $0xa0] sm:$0xff]
  %v591 = vld [vmem:[%s5 + $0xa8] sm:$0xff]
  %v592 = vld [vmem:[%s5 + $0xb0] sm:$0xff]
  %v593 = vld [vmem:[%s5 + $0xb8] sm:$0xff]
  %v594 = vld [vmem:[%s5 + $0xc0] sm:$0xff]
  %v595 = vld [vmem:[%s5 + $0xc8] sm:$0xff]
  %v596 = vld [vmem:[%s5 + $0xd0] sm:$0xff]
  %v597 = vld [vmem:[%s5 + $0xd8] sm:$0xff]
  %v598 = vld [vmem:[%s5 + $0xe0] sm:$0xff]
  %v599 = vld [vmem:[%s5 + $0xe8] sm:$0xff]
  %v600 = vld [vmem:[%s5 + $0xf0] sm:$0xff]
  %v601 = vld [vmem:[%s5 + $0xf8] sm:$0xff]
  %v602 = vld [vmem:[%s5 + $0x100] sm:$0xff]
  %v603 = vld [vmem:[%s5 + $0x108] sm:$0xff]
  %v604 = vld [vmem:[%s5 + $0x110] sm:$0xff]
  %v605 = vld [vmem:[%s5 + $0x118] sm:$0xff]
  %v606 = vld [vmem:[%s5 + $0x120] sm:$0xff]
  %v607 = vld [vmem:[%s5 + $0x128] sm:$0xff]
  %v608 = vld [vmem:[%s5 + $0x130] sm:$0xff]
  %v609 = vld [vmem:[%s5 + $0x138] sm:$0xff]
  %v610 = vld [vmem:[%s5 + $0x140] sm:$0xff]
  %v611 = vld [vmem:[%s5 + $0x148] sm:$0xff]
  %v612 = vld [vmem:[%s5 + $0x150] sm:$0xff]
  %v613 = vld [vmem:[%s5 + $0x158] sm:$0xff]
  %v614 = vld [vmem:[%s5 + $0x160] sm:$0xff]
  %v615 = vld [vmem:[%s5 + $0x168] sm:$0xff]
  %v616 = vld [vmem:[%s5 + $0x170] sm:$0xff]
  %v617 = vld [vmem:[%s5 + $0x178] sm:$0xff]
  %v618 = vld [vmem:[%s5 + $0x180] sm:$0xff]
  %v619 = vld [vmem:[%s5 + $0x188] sm:$0xff]
  %v620 = vld [vmem:[%s5 + $0x190] sm:$0xff]
  %v621 = vld [vmem:[%s5 + $0x198] sm:$0xff]
  %v622 = vld [vmem:[%s5 + $0x1a0] sm:$0xff]
  %v623 = vld [vmem:[%s5 + $0x1a8] sm:$0xff]
  %v624 = vld [vmem:[%s5 + $0x1b0] sm:$0xff]
  %v625 = vld [vmem:[%s5 + $0x1b8] sm:$0xff]
  %v626 = vld [vmem:[%s5 + $0x1c0] sm:$0xff]
  %v627 = vld [vmem:[%s5 + $0x1c8] sm:$0xff]
  %v628 = vld [vmem:[%s5 + $0x1d0] sm:$0xff]
  %v629 = vld [vmem:[%s5 + $0x1d8] sm:$0xff]
  %v630 = vld [vmem:[%s5 + $0x1e0] sm:$0xff]
  %v631 = vld [vmem:[%s5 + $0x1e8] sm:$0xff]
  %v632 = vld [vmem:[%s5 + $0x1f0] sm:$0xff]
  %v633 = vld [vmem:[%s5 + $0x1f8] sm:$0xff]
  %v634 = vld [vmem:[%s6] sm:$0x1]
  %v636 = vlaneseq
  %v637 = vshrl.u32 %v636, 7
  %v638 = vsub.s32 0, %v637
  %v639 = vrot.slane %v634, %v638
  %641 = vmatprep.subr.mxu0 0.0
  %642 = vmatpush1.msra.mxu0 %v570
  %643 = vmatprep.subr.mxu0 0.0
  %644 = vmatpush1.msra.mxu0 %v571
  %645 = vmatprep.subr.mxu0 0.0
  %646 = vmatpush1.msra.mxu0 %v572
  %647 = vmatprep.subr.mxu0 0.0
  %648 = vmatpush1.msra.mxu0 %v573
  %649 = vmatprep.subr.mxu0 0.0
  %650 = vmatpush1.msra.mxu0 %v574
  %651 = vmatprep.subr.mxu0 0.0
  %652 = vmatpush1.msra.mxu0 %v575
  %653 = vmatprep.subr.mxu0 0.0
  %654 = vmatpush1.msra.mxu0 %v576
  %655 = vmatprep.subr.mxu0 0.0
  %656 = vmatpush1.msra.mxu0 %v577
  %657 = vmatprep.subr.mxu0 0.0
  %658 = vmatpush1.msra.mxu0 %v578
  %659 = vmatprep.subr.mxu0 0.0
  %660 = vmatpush1.msra.mxu0 %v579
  %661 = vmatprep.subr.mxu0 0.0
  %662 = vmatpush1.msra.mxu0 %v580
  %663 = vmatprep.subr.mxu0 0.0
  %664 = vmatpush1.msra.mxu0 %v581
  %665 = vmatprep.subr.mxu0 0.0
  %666 = vmatpush1.msra.mxu0 %v582
  %667 = vmatprep.subr.mxu0 0.0
  %668 = vmatpush1.msra.mxu0 %v583
  %669 = vmatprep.subr.mxu0 0.0
  %670 = vmatpush1.msra.mxu0 %v584
  %671 = vmatprep.subr.mxu0 0.0
  %672 = vmatpush1.msra.mxu0 %v585
  %673 = vmatprep.subr.mxu0 0.0
  %674 = vmatpush1.msra.mxu0 %v586
  %675 = vmatprep.subr.mxu0 0.0
  %676 = vmatpush1.msra.mxu0 %v587
  %677 = vmatprep.subr.mxu0 0.0
  %678 = vmatpush1.msra.mxu0 %v588
  %679 = vmatprep.subr.mxu0 0.0
  %680 = vmatpush1.msra.mxu0 %v589
  %681 = vmatprep.subr.mxu0 0.0
  %682 = vmatpush1.msra.mxu0 %v590
  %683 = vmatprep.subr.mxu0 0.0
  %684 = vmatpush1.msra.mxu0 %v591
  %685 = vmatprep.subr.mxu0 0.0
  %686 = vmatpush1.msra.mxu0 %v592
  %687 = vmatprep.subr.mxu0 0.0
  %688 = vmatpush1.msra.mxu0 %v593
  %689 = vmatprep.subr.mxu0 0.0
  %690 = vmatpush1.msra.mxu0 %v594
  %691 = vmatprep.subr.mxu0 0.0
  %692 = vmatpush1.msra.mxu0 %v595
  %693 = vmatprep.subr.mxu0 0.0
  %694 = vmatpush1.msra.mxu0 %v596
  %695 = vmatprep.subr.mxu0 0.0
  %696 = vmatpush1.msra.mxu0 %v597
  %697 = vmatprep.subr.mxu0 0.0
  %698 = vmatpush1.msra.mxu0 %v598
  %699 = vmatprep.subr.mxu0 0.0
  %700 = vmatpush1.msra.mxu0 %v599
  %701 = vmatprep.subr.mxu0 0.0
  %702 = vmatpush1.msra.mxu0 %v600
  %703 = vmatprep.subr.mxu0 0.0
  %704 = vmatpush1.msra.mxu0 %v601
  %705 = vmatprep.mubr.f32.mxu0 %v539
  %706 = vmatmul.mubr.f32.gmra.mrb[0].mxu0 %v538
  %v707 = vpop.f32.mrb[0].mxu0
  %v708 = vadd.f32 %v639, %v707
  %v709 = vpop.f32.mrb[0].mxu0
  %710 = vmatprep.mubr.f32.mxu0 %v543
  %711 = vmatmul.mubr.f32.gmra.mrb[0].mxu0 %v542
  %v712 = vpop.f32.mrb[0].mxu0
  %v713 = vadd.f32 %v639, %v712
  %v714 = vpop.f32.mrb[0].mxu0
  %715 = vmatprep.mubr.f32.mxu0 %v547
  %716 = vmatmul.mubr.f32.gmra.mrb[0].mxu0 %v546
  %v717 = vpop.f32.mrb[0].mxu0
  %v718 = vadd.f32 %v639, %v717
  %v719 = vpop.f32.mrb[0].mxu0
  %720 = vmatprep.mubr.f32.mxu0 %v551
  %721 = vmatmul.mubr.f32.gmra.mrb[0].mxu0 %v550
  %v722 = vpop.f32.mrb[0].mxu0
  %v723 = vadd.f32 %v639, %v722
  %v724 = vpop.f32.mrb[0].mxu0
  %725 = vmatprep.mubr.f32.mxu0 %v555
  %726 = vmatmul.mubr.f32.gmra.mrb[0].mxu0 %v554
  %v727 = vpop.f32.mrb[0].mxu0
  %v728 = vadd.f32 %v639, %v727
  %v729 = vpop.f32.mrb[0].mxu0
  %730 = vmatprep.mubr.f32.mxu0 %v559
  %731 = vmatmul.mubr.f32.gmra.mrb[0].mxu0 %v558
  %v732 = vpop.f32.mrb[0].mxu0
  %v733 = vadd.f32 %v639, %v732
  %v734 = vpop.f32.mrb[0].mxu0
  %735 = vmatprep.mubr.f32.mxu0 %v563
  %736 = vmatmul.mubr.f32.gmra.mrb[0].mxu0 %v562
  %v737 = vpop.f32.mrb[0].mxu0
  %v738 = vadd.f32 %v639, %v737
  %v739 = vpop.f32.mrb[0].mxu0
  %740 = vmatprep.mubr.f32.mxu0 %v567
  %741 = vmatmul.mubr.f32.gmra.mrb[0].mxu0 %v566
  %v742 = vpop.f32.mrb[0].mxu0
  %v743 = vadd.f32 %v639, %v742
  %v744 = vpop.f32.mrb[0].mxu0
  %745 = vdwg.mxu0
  %746 = vmatprep.subr.mxu0 0.0
  %747 = vmatpush1.msra.mxu0 %v602
  %748 = vmatprep.subr.mxu0 0.0
  %749 = vmatpush1.msra.mxu0 %v603
  %750 = vmatprep.subr.mxu0 0.0
  %751 = vmatpush1.msra.mxu0 %v604
  %752 = vmatprep.subr.mxu0 0.0
  %753 = vmatpush1.msra.mxu0 %v605
  %754 = vmatprep.subr.mxu0 0.0
  %755 = vmatpush1.msra.mxu0 %v606
  %756 = vmatprep.subr.mxu0 0.0
  %757 = vmatpush1.msra.mxu0 %v607
  %758 = vmatprep.subr.mxu0 0.0
  %759 = vmatpush1.msra.mxu0 %v608
  %760 = vmatprep.subr.mxu0 0.0
  %761 = vmatpush1.msra.mxu0 %v609
  %762 = vmatprep.subr.mxu0 0.0
  %763 = vmatpush1.msra.mxu0 %v610
  %764 = vmatprep.subr.mxu0 0.0
  %765 = vmatpush1.msra.mxu0 %v611
  %766 = vmatprep.subr.mxu0 0.0
  %767 = vmatpush1.msra.mxu0 %v612
  %768 = vmatprep.subr.mxu0 0.0
  %769 = vmatpush1.msra.mxu0 %v613
  %770 = vmatprep.subr.mxu0 0.0
  %771 = vmatpush1.msra.mxu0 %v614
  %772 = vmatprep.subr.mxu0 0.0
  %773 = vmatpush1.msra.mxu0 %v615
  %774 = vmatprep.subr.mxu0 0.0
  %775 = vmatpush1.msra.mxu0 %v616
  %776 = vmatprep.subr.mxu0 0.0
  %777 = vmatpush1.msra.mxu0 %v617
  %778 = vmatprep.subr.mxu0 0.0
  %779 = vmatpush1.msra.mxu0 %v618
  %780 = vmatprep.subr.mxu0 0.0
  %781 = vmatpush1.msra.mxu0 %v619
  %782 = vmatprep.subr.mxu0 0.0
  %783 = vmatpush1.msra.mxu0 %v620
  %784 = vmatprep.subr.mxu0 0.0
  %785 = vmatpush1.msra.mxu0 %v621
  %786 = vmatprep.subr.mxu0 0.0
  %787 = vmatpush1.msra.mxu0 %v622
  %788 = vmatprep.subr.mxu0 0.0
  %789 = vmatpush1.msra.mxu0 %v623
  %790 = vmatprep.subr.mxu0 0.0
  %791 = vmatpush1.msra.mxu0 %v624
  %792 = vmatprep.subr.mxu0 0.0
  %793 = vmatpush1.msra.mxu0 %v625
  %794 = vmatprep.subr.mxu0 0.0
  %795 = vmatpush1.msra.mxu0 %v626
  %796 = vmatprep.subr.mxu0 0.0
  %797 = vmatpush1.msra.mxu0 %v627
  %798 = vmatprep.subr.mxu0 0.0
  %799 = vmatpush1.msra.mxu0 %v628
  %800 = vmatprep.subr.mxu0 0.0
  %801 = vmatpush1.msra.mxu0 %v629
  %802 = vmatprep.subr.mxu0 0.0
  %803 = vmatpush1.msra.mxu0 %v630
  %804 = vmatprep.subr.mxu0 0.0
  %805 = vmatpush1.msra.mxu0 %v631
  %806 = vmatprep.subr.mxu0 0.0
  %807 = vmatpush1.msra.mxu0 %v632
  %808 = vmatprep.subr.mxu0 0.0
  %809 = vmatpush1.msra.mxu0 %v633
  %810 = vmatprep.mubr.f32.mxu0 %v541
  %811 = vmatmul.mubr.f32.gmra.mrb[0].mxu0 %v540
  %v812 = vpop.f32.mrb[0].mxu0
  %v813 = vadd.f32 %v708, %v812
  %v814 = vpop.f32.mrb[0].mxu0
  %815 = vmatprep.mubr.f32.mxu0 %v545
  %816 = vmatmul.mubr.f32.gmra.mrb[0].mxu0 %v544
  %v817 = vpop.f32.mrb[0].mxu0
  %v818 = vadd.f32 %v713, %v817
  %v819 = vpop.f32.mrb[0].mxu0
  %820 = vmatprep.mubr.f32.mxu0 %v549
  %821 = vmatmul.mubr.f32.gmra.mrb[0].mxu0 %v548
  %v822 = vpop.f32.mrb[0].mxu0
  %v823 = vadd.f32 %v718, %v822
  %v824 = vpop.f32.mrb[0].mxu0
  %825 = vmatprep.mubr.f32.mxu0 %v553
  %826 = vmatmul.mubr.f32.gmra.mrb[0].mxu0 %v552
  %v827 = vpop.f32.mrb[0].mxu0
  %v828 = vadd.f32 %v723, %v827
  %v829 = vpop.f32.mrb[0].mxu0
  %830 = vmatprep.mubr.f32.mxu0 %v557
  %831 = vmatmul.mubr.f32.gmra.mrb[0].mxu0 %v556
  %v832 = vpop.f32.mrb[0].mxu0
  %v833 = vadd.f32 %v728, %v832
  %v834 = vpop.f32.mrb[0].mxu0
  %835 = vmatprep.mubr.f32.mxu0 %v561
  %836 = vmatmul.mubr.f32.gmra.mrb[0].mxu0 %v560
  %v837 = vpop.f32.mrb[0].mxu0
  %v838 = vadd.f32 %v733, %v837
  %v839 = vpop.f32.mrb[0].mxu0
  %840 = vmatprep.mubr.f32.mxu0 %v565
  %841 = vmatmul.mubr.f32.gmra.mrb[0].mxu0 %v564
  %v842 = vpop.f32.mrb[0].mxu0
  %v843 = vadd.f32 %v738, %v842
  %v844 = vpop.f32.mrb[0].mxu0
  %845 = vmatprep.mubr.f32.mxu0 %v569
  %846 = vmatmul.mubr.f32.gmra.mrb[0].mxu0 %v568
  %v847 = vpop.f32.mrb[0].mxu0
  %v848 = vadd.f32 %v743, %v847
  %v849 = vpop.f32.mrb[0].mxu0
  %850 = vdwg.mxu0
  %v851 = vld [vmem:[%s1] sm:$0xff]
  %v852 = vld [vmem:[%s1 + $0x8] sm:$0xff]
  %v853 = vld [vmem:[%s1 + $0x10] sm:$0xff]
  %v854 = vld [vmem:[%s1 + $0x18] sm:$0xff]
  %v855 = vld [vmem:[%s1 + $0x20] sm:$0xff]
  %v856 = vld [vmem:[%s1 + $0x28] sm:$0xff]
  %v857 = vld [vmem:[%s1 + $0x30] sm:$0xff]
  %v858 = vld [vmem:[%s1 + $0x38] sm:$0xff]
  %v859 = vld [vmem:[%s2] sm:$0x1]
  %v861 = vlaneseq
  %v862 = vshrl.u32 %v861, 7
  %v863 = vsub.s32 0, %v862
  %v864 = vrot.slane %v859, %v863
  %v866 = vmul.f32 %v864, %v813
  %v867 = vmul.f32 %v864, %v818
  %v868 = vmul.f32 %v864, %v823
  %v869 = vmul.f32 %v864, %v828
  %v870 = vmul.f32 %v864, %v833
  %v871 = vmul.f32 %v864, %v838
  %v872 = vmul.f32 %v864, %v843
  %v873 = vmul.f32 %v864, %v848
  %875 = vset.pattern.permute.xlu0 0
  %876 = vperm.xlu0 %875, %v851
  %v877 = vpop.permute.xlu0 %876
  %880 = vset.pattern.permute.xlu0 0
  %881 = vperm.xlu0 %880, %v852
  %v882 = vpop.permute.xlu0 %881
  %885 = vset.pattern.permute.xlu0 0
  %886 = vperm.xlu0 %885, %v853
  %v887 = vpop.permute.xlu0 %886
  %890 = vset.pattern.permute.xlu0 0
  %891 = vperm.xlu0 %890, %v854
  %v892 = vpop.permute.xlu0 %891
  %895 = vset.pattern.permute.xlu0 0
  %896 = vperm.xlu0 %895, %v855
  %v897 = vpop.permute.xlu0 %896
  %900 = vset.pattern.permute.xlu0 0
  %901 = vperm.xlu0 %900, %v856
  %v902 = vpop.permute.xlu0 %901
  %905 = vset.pattern.permute.xlu0 0
  %906 = vperm.xlu0 %905, %v857
  %v907 = vpop.permute.xlu0 %906
  %910 = vset.pattern.permute.xlu0 0
  %911 = vperm.xlu0 %910, %v858
  %v912 = vpop.permute.xlu0 %911
  %v914 = vadd.f32 %v877, %v866
  %v915 = vadd.f32 %v882, %v867
  %v916 = vadd.f32 %v887, %v868
  %v917 = vadd.f32 %v892, %v869
  %v918 = vadd.f32 %v897, %v870
  %v919 = vadd.f32 %v902, %v871
  %v920 = vadd.f32 %v907, %v872
  %v921 = vadd.f32 %v912, %v873
  %vm922 = vcmask 408576
  %923 = vst.msk [vmem:[%s7] sm:$0xff] %vm922, %v914
  %924 = vst.msk [vmem:[%s7 + $0x8] sm:$0xff] %vm922, %v915
  %925 = vst.msk [vmem:[%s7 + $0x10] sm:$0xff] %vm922, %v916
  %926 = vst.msk [vmem:[%s7 + $0x18] sm:$0xff] %vm922, %v917
  %927 = vst.msk [vmem:[%s7 + $0x20] sm:$0xff] %vm922, %v918
  %928 = vst.msk [vmem:[%s7 + $0x28] sm:$0xff] %vm922, %v919
  %929 = vst.msk [vmem:[%s7 + $0x30] sm:$0xff] %vm922, %v920
  %930 = vst.msk [vmem:[%s7 + $0x38] sm:$0xff] %vm922, %v921
  // Predicated region
  $region30: #{_lambda_.3} parent=0 // pred_check
    _
  $region31: #{_lambda_.3} parent=0 // pred_check_branch
    %932 = sbr.rel (0) target = $region33
  $region32: #{_lambda_.3} parent=0 // pred_region
    _
  $region33: #{_lambda_.3} parent=0 // pred_fallthru
    _
  // Predicated region
  $region34: #{_lambda_.3} parent=0 // pred_check
    _
  $region35: #{_lambda_.3} parent=0 // pred_check_branch
    %934 = sbr.rel (0) target = $region37
  $region36: #{_lambda_.3} parent=0 // pred_region
    _
  $region37: #{_lambda_.3} parent=0 // pred_fallthru
    _

// kernel: _lambda_.2
$region0: #{_lambda_.2}
  #allocation0 [shape = 'u32[]', space=smem, size = 0x4, offset = 0x4, fixed_abs, tag = 'smem constant byte address 0x4 - core index']
  #allocation1 [shape = 'u32[144,128]{1,0:T(1,128)}', space=vmem, size = 0x12000, scoped, tag = 'internal scratch']
  #allocation2 [shape = 'f32[64,128]{1,0:T(8,128)}', space=vmem, size = 0x8000, scoped, tag = 'scratch operand']
  %s0 = inlined_call_operand.vmem [shape: f32[64,128], index: 0, kind: input, shape index: {}]
  %s1 = inlined_call_operand.vmem [shape: f32[256,64], index: 1, kind: input, shape index: {}]
  %s2 = inlined_call_operand.vmem [shape: f32[256,64], index: 2, kind: input, shape index: {}]
  %s3 = inlined_call_operand.vmem [shape: f32[64,256], index: 3, kind: input, shape index: {}]
  %s4 = inlined_call_operand.vmem [shape: f32[256,128], index: 4, kind: input, shape index: {}]
  %s5 = inlined_call_operand.vmem [shape: f32[64,128], index: 5, kind: input, shape index: {}]
  %s6 = inlined_call_operand.vmem [shape: f32[6,2], index: 6, kind: input, shape index: {}]
  %s7 = inlined_call_operand.vmem [shape: f32[128,128], index: 7, kind: input, shape index: {}]
  %s8 = inlined_call_operand.vmem [shape: f32[1,128], index: 8, kind: input, shape index: {}]
  %s9 = inlined_call_operand.vmem [shape: f32[128,128], index: 9, kind: input, shape index: {}]
  %s10 = inlined_call_operand.vmem [shape: f32[1,128], index: 10, kind: input, shape index: {}]
  %s11 = inlined_call_operand.vmem [shape: f32[6,384,128], index: 11, kind: input, shape index: {}]
  %s12 = inlined_call_operand.vmem [shape: f32[6,1,128], index: 12, kind: input, shape index: {}]
  %s13 = inlined_call_operand.vmem [shape: f32[6,128,128], index: 13, kind: input, shape index: {}]
  %s14 = inlined_call_operand.vmem [shape: f32[6,1,128], index: 14, kind: input, shape index: {}]
  %s15 = inlined_call_operand.vmem [shape: f32[6,384,128], index: 15, kind: input, shape index: {}]
  %s16 = inlined_call_operand.vmem [shape: f32[6,1,128], index: 16, kind: input, shape index: {}]
  %s17 = inlined_call_operand.vmem [shape: f32[6,128,128], index: 17, kind: input, shape index: {}]
  %s18 = inlined_call_operand.vmem [shape: f32[6,1,128], index: 18, kind: input, shape index: {}]
  %s19 = inlined_call_operand.vmem [shape: f32[64,128], index: 19, kind: output, shape index: {}]
  %s20 = sld [smem:[#allocation0]]
  $region117: #{_lambda_.2} parent=0
    _
  %s22 = ssub.s32 1, %s20
  %s23 = scalar_select 0, %s22, %s20
  $region1: #{_lambda_.2} parent=0
    #allocation3 [shape = 'u8[4096]{0}', space=smem, size = 0x1000, scoped, tag = 'input window, operand 6, single buffered']
    #allocation4 [shape = 's32[2]{0}', space=sflag, size = 0x8, scoped, tag = 'scoped memory for _lambda_.2']
    %24 = vsyncpa [#allocation4], 0
    loop: start=0, step=1, limit=8
    $region2: #{_lambda_.2} parent=1 // loop_pre_header
      _
    $region3: #{_lambda_.2} parent=1 // loop_header
      %s26 = sphi 0, %s30
      %p27 = scmp.ge.s32.totalorder %s26, 8
      %s34 = sphi 0, %s34
      %s36 = sphi 0, %s34
      %s37 = sphi 0, %s36
      %s51 = sphi 0, %s37
      %s55 = sphi 0, %s55
      %s57 = sphi 0, %s55
      %s58 = sphi 0, %s57
      %s72 = sphi 0, %s58
      %s76 = sphi 0, %s76
      %s78 = sphi 0, %s76
      %s79 = sphi 0, %s78
      %s93 = sphi 0, %s79
      %s97 = sphi 0, %s97
      %s99 = sphi 0, %s97
      %s100 = sphi 0, %s99
      %s114 = sphi 0, %s100
      %s118 = sphi 0, %s118
      %s120 = sphi 0, %s118
      %s121 = sphi 0, %s120
      %s135 = sphi 0, %s121
      %s139 = sphi 0, %s139
      %s141 = sphi 0, %s139
      %s142 = sphi 0, %s141
      %s156 = sphi 0, %s142
      %s160 = sphi 0, %s160
      %s162 = sphi 0, %s160
      %s163 = sphi 0, %s162
      %s177 = sphi 0, %s163
      %s181 = sphi 0, %s181
      %s183 = sphi 0, %s181
      %s184 = sphi 0, %s183
      %s198 = sphi 0, %s184
      %s202 = sphi 0, %s202
      %s204 = sphi 0, %s202
      %s205 = sphi 0, %s204
      %s219 = sphi 0, %s205
      %s223 = sphi 0, %s223
      %s225 = sphi 0, %s223
      %s226 = sphi 0, %s225
      %s240 = sphi 0, %s226
      %s244 = sphi 0, %s244
      %s246 = sphi 0, %s244
      %s247 = sphi 0, %s246
      %s261 = sphi 0, %s247
      %s267 = sphi 0, %s269
      %s270 = sphi 0, %s267
      %s271 = sphi 0, %s270
      %s287 = sphi 0, %s271
      %s293 = sphi 0, %s295
      %s296 = sphi 0, %s293
      %s297 = sphi 0, %s296
      %s313 = sphi 0, %s297
      %s319 = sphi 0, %s321
      %s322 = sphi 0, %s319
      %s323 = sphi 0, %s322
      %s339 = sphi 0, %s323
      %s345 = sphi 0, %s347
      %s348 = sphi 0, %s345
      %s349 = sphi 0, %s348
      %s365 = sphi 0, %s349
      %s371 = sphi 0, %s373
      %s374 = sphi 0, %s371
      %s375 = sphi 0, %s374
      %s391 = sphi 0, %s375
      %s397 = sphi 0, %s399
      %s400 = sphi 0, %s397
      %s401 = sphi 0, %s400
      %s417 = sphi 0, %s401
      %s423 = sphi 0, %s425
      %s426 = sphi 0, %s423
      %s427 = sphi 0, %s426
      %s443 = sphi 0, %s427
      %s449 = sphi 0, %s451
      %s452 = sphi 0, %s449
      %s453 = sphi 0, %s452
      %s469 = sphi 0, %s453
      %s473 = sphi 0, %s473
      %s475 = sphi 0, %s473
      %s476 = sphi 0, %s475
      %s490 = sphi 0, %s476
    $region4: #{_lambda_.2} parent=1 // loop_header_branch
      %29 = sbr.rel (%p27) target = $region8
    $region5: #{_lambda_.2} parent=1 // loop_body
      %s31 = ssub.s32 %s26, 1
      %s32 = ssub.s32 %s26, 2
      %s33 = sadd.s32 %s26, 1
      %s35 = sadd.s32 %s34, 1
      %p38 = scmp.eq.s32.totalorder %s26, 5
      %p39 = scmp.ne.s32.totalorder %s34, %s36
      %p40 = scmp.eq.s32.totalorder %s26, 0
      %p41 = por %p39, %p40
      %p42 = scmp.ne.s32.totalorder %s34, %s36
      %p43 = scmp.eq.s32.totalorder %s31, 5
      %p44 = por %p42, %p43
      %p45 = scmp.ne.s32.totalorder %s36, %s37
      %p46 = scmp.eq.s32.totalorder %s31, 0
      %p47 = por %p45, %p46
      %p48 = scmp.ne.s32.totalorder %s36, %s37
      %p49 = scmp.eq.s32.totalorder %s32, 5
      %p50 = por %p48, %p49
      %p52 = scmp.ne.s32.totalorder %s37, %s51
      %p53 = scmp.eq.s32.totalorder %s32, 0
      %p54 = por %p52, %p53
      %s56 = sadd.s32 %s55, 1
      %p59 = scmp.eq.s32.totalorder %s26, 5
      %p60 = scmp.ne.s32.totalorder %s55, %s57
      %p61 = scmp.eq.s32.totalorder %s26, 0
      %p62 = por %p60, %p61
      %p63 = scmp.ne.s32.totalorder %s55, %s57
      %p64 = scmp.eq.s32.totalorder %s31, 5
      %p65 = por %p63, %p64
      %p66 = scmp.ne.s32.totalorder %s57, %s58
      %p67 = scmp.eq.s32.totalorder %s31, 0
      %p68 = por %p66, %p67
      %p69 = scmp.ne.s32.totalorder %s57, %s58
      %p70 = scmp.eq.s32.totalorder %s32, 5
      %p71 = por %p69, %p70
      %p73 = scmp.ne.s32.totalorder %s58, %s72
      %p74 = scmp.eq.s32.totalorder %s32, 0
      %p75 = por %p73, %p74
      %s77 = sadd.s32 %s76, 1
      %p80 = scmp.eq.s32.totalorder %s26, 5
      %p81 = scmp.ne.s32.totalorder %s76, %s78
      %p82 = scmp.eq.s32.totalorder %s26, 0
      %p83 = por %p81, %p82
      %p84 = scmp.ne.s32.totalorder %s76, %s78
      %p85 = scmp.eq.s32.totalorder %s31, 5
      %p86 = por %p84, %p85
      %p87 = scmp.ne.s32.totalorder %s78, %s79
      %p88 = scmp.eq.s32.totalorder %s31, 0
      %p89 = por %p87, %p88
      %p90 = scmp.ne.s32.totalorder %s78, %s79
      %p91 = scmp.eq.s32.totalorder %s32, 5
      %p92 = por %p90, %p91
      %p94 = scmp.ne.s32.totalorder %s79, %s93
      %p95 = scmp.eq.s32.totalorder %s32, 0
      %p96 = por %p94, %p95
      %s98 = sadd.s32 %s97, 1
      %p101 = scmp.eq.s32.totalorder %s26, 5
      %p102 = scmp.ne.s32.totalorder %s97, %s99
      %p103 = scmp.eq.s32.totalorder %s26, 0
      %p104 = por %p102, %p103
      %p105 = scmp.ne.s32.totalorder %s97, %s99
      %p106 = scmp.eq.s32.totalorder %s31, 5
      %p107 = por %p105, %p106
      %p108 = scmp.ne.s32.totalorder %s99, %s100
      %p109 = scmp.eq.s32.totalorder %s31, 0
      %p110 = por %p108, %p109
      %p111 = scmp.ne.s32.totalorder %s99, %s100
      %p112 = scmp.eq.s32.totalorder %s32, 5
      %p113 = por %p111, %p112
      %p115 = scmp.ne.s32.totalorder %s100, %s114
      %p116 = scmp.eq.s32.totalorder %s32, 0
      %p117 = por %p115, %p116
      %s119 = sadd.s32 %s118, 1
      %p122 = scmp.eq.s32.totalorder %s26, 5
      %p123 = scmp.ne.s32.totalorder %s118, %s120
      %p124 = scmp.eq.s32.totalorder %s26, 0
      %p125 = por %p123, %p124
      %p126 = scmp.ne.s32.totalorder %s118, %s120
      %p127 = scmp.eq.s32.totalorder %s31, 5
      %p128 = por %p126, %p127
      %p129 = scmp.ne.s32.totalorder %s120, %s121
      %p130 = scmp.eq.s32.totalorder %s31, 0
      %p131 = por %p129, %p130
      %p132 = scmp.ne.s32.totalorder %s120, %s121
      %p133 = scmp.eq.s32.totalorder %s32, 5
      %p134 = por %p132, %p133
      %p136 = scmp.ne.s32.totalorder %s121, %s135
      %p137 = scmp.eq.s32.totalorder %s32, 0
      %p138 = por %p136, %p137
      %s140 = sadd.s32 %s139, 1
      %p143 = scmp.eq.s32.totalorder %s26, 5
      %p144 = scmp.ne.s32.totalorder %s139, %s141
      %p145 = scmp.eq.s32.totalorder %s26, 0
      %p146 = por %p144, %p145
      %p147 = scmp.ne.s32.totalorder %s139, %s141
      %p148 = scmp.eq.s32.totalorder %s31, 5
      %p149 = por %p147, %p148
      %p150 = scmp.ne.s32.totalorder %s141, %s142
      %p151 = scmp.eq.s32.totalorder %s31, 0
      %p152 = por %p150, %p151
      %p153 = scmp.ne.s32.totalorder %s141, %s142
      %p154 = scmp.eq.s32.totalorder %s32, 5
      %p155 = por %p153, %p154
      %p157 = scmp.ne.s32.totalorder %s142, %s156
      %p158 = scmp.eq.s32.totalorder %s32, 0
      %p159 = por %p157, %p158
      %s161 = sadd.s32 %s160, 1
      %p164 = scmp.eq.s32.totalorder %s26, 5
      %p165 = scmp.ne.s32.totalorder %s160, %s162
      %p166 = scmp.eq.s32.totalorder %s26, 0
      %p167 = por %p165, %p166
      %p168 = scmp.ne.s32.totalorder %s160, %s162
      %p169 = scmp.eq.s32.totalorder %s31, 5
      %p170 = por %p168, %p169
      %p171 = scmp.ne.s32.totalorder %s162, %s163
      %p172 = scmp.eq.s32.totalorder %s31, 0
      %p173 = por %p171, %p172
      %p174 = scmp.ne.s32.totalorder %s162, %s163
      %p175 = scmp.eq.s32.totalorder %s32, 5
      %p176 = por %p174, %p175
      %p178 = scmp.ne.s32.totalorder %s163, %s177
      %p179 = scmp.eq.s32.totalorder %s32, 0
      %p180 = por %p178, %p179
      %s182 = sadd.s32 %s181, 1
      %p185 = scmp.eq.s32.totalorder %s26, 5
      %p186 = scmp.ne.s32.totalorder %s181, %s183
      %p187 = scmp.eq.s32.totalorder %s26, 0
      %p188 = por %p186, %p187
      %p189 = scmp.ne.s32.totalorder %s181, %s183
      %p190 = scmp.eq.s32.totalorder %s31, 5
      %p191 = por %p189, %p190
      %p192 = scmp.ne.s32.totalorder %s183, %s184
      %p193 = scmp.eq.s32.totalorder %s31, 0
      %p194 = por %p192, %p193
      %p195 = scmp.ne.s32.totalorder %s183, %s184
      %p196 = scmp.eq.s32.totalorder %s32, 5
      %p197 = por %p195, %p196
      %p199 = scmp.ne.s32.totalorder %s184, %s198
      %p200 = scmp.eq.s32.totalorder %s32, 0
      %p201 = por %p199, %p200
      %s203 = sadd.s32 %s202, 1
      %p206 = scmp.eq.s32.totalorder %s26, 5
      %p207 = scmp.ne.s32.totalorder %s202, %s204
      %p208 = scmp.eq.s32.totalorder %s26, 0
      %p209 = por %p207, %p208
      %p210 = scmp.ne.s32.totalorder %s202, %s204
      %p211 = scmp.eq.s32.totalorder %s31, 5
      %p212 = por %p210, %p211
      %p213 = scmp.ne.s32.totalorder %s204, %s205
      %p214 = scmp.eq.s32.totalorder %s31, 0
      %p215 = por %p213, %p214
      %p216 = scmp.ne.s32.totalorder %s204, %s205
      %p217 = scmp.eq.s32.totalorder %s32, 5
      %p218 = por %p216, %p217
      %p220 = scmp.ne.s32.totalorder %s205, %s219
      %p221 = scmp.eq.s32.totalorder %s32, 0
      %p222 = por %p220, %p221
      %s224 = sadd.s32 %s223, 1
      %p227 = scmp.eq.s32.totalorder %s26, 5
      %p228 = scmp.ne.s32.totalorder %s223, %s225
      %p229 = scmp.eq.s32.totalorder %s26, 0
      %p230 = por %p228, %p229
      %p231 = scmp.ne.s32.totalorder %s223, %s225
      %p232 = scmp.eq.s32.totalorder %s31, 5
      %p233 = por %p231, %p232
      %p234 = scmp.ne.s32.totalorder %s225, %s226
      %p235 = scmp.eq.s32.totalorder %s31, 0
      %p236 = por %p234, %p235
      %p237 = scmp.ne.s32.totalorder %s225, %s226
      %p238 = scmp.eq.s32.totalorder %s32, 5
      %p239 = por %p237, %p238
      %p241 = scmp.ne.s32.totalorder %s226, %s240
      %p242 = scmp.eq.s32.totalorder %s32, 0
      %p243 = por %p241, %p242
      %s245 = sadd.s32 %s244, 1
      %p248 = scmp.eq.s32.totalorder %s26, 5
      %p249 = scmp.ne.s32.totalorder %s244, %s246
      %p250 = scmp.eq.s32.totalorder %s26, 0
      %p251 = por %p249, %p250
      %p252 = scmp.ne.s32.totalorder %s244, %s246
      %p253 = scmp.eq.s32.totalorder %s31, 5
      %p254 = por %p252, %p253
      %p255 = scmp.ne.s32.totalorder %s246, %s247
      %p256 = scmp.eq.s32.totalorder %s31, 0
      %p257 = por %p255, %p256
      %p258 = scmp.ne.s32.totalorder %s246, %s247
      %p259 = scmp.eq.s32.totalorder %s32, 5
      %p260 = por %p258, %p259
      %p262 = scmp.ne.s32.totalorder %s247, %s261
      %p263 = scmp.eq.s32.totalorder %s32, 0
      %p264 = por %p262, %p263
      %s265 = ssub.s32 %s26, %s33
      %p266 = scmp.eq.s32.totalorder %s265, 0
      %s268 = sadd.s32 %s267, 1
      %s269 = scalar_select %p266, %s267, %s268
      %p272 = pneg %p266
      %p273 = scmp.eq.s32.totalorder %s26, 5
      %p274 = por %p272, %p273
      %p275 = scmp.ne.s32.totalorder %s267, %s270
      %p276 = scmp.eq.s32.totalorder %s26, 0
      %p277 = por %p275, %p276
      %p278 = scmp.ne.s32.totalorder %s267, %s270
      %p279 = scmp.eq.s32.totalorder %s31, 5
      %p280 = por %p278, %p279
      %p281 = scmp.ne.s32.totalorder %s270, %s271
      %p282 = scmp.eq.s32.totalorder %s31, 0
      %p283 = por %p281, %p282
      %p284 = scmp.ne.s32.totalorder %s270, %s271
      %p285 = scmp.eq.s32.totalorder %s32, 5
      %p286 = por %p284, %p285
      %p288 = scmp.ne.s32.totalorder %s271, %s287
      %p289 = scmp.eq.s32.totalorder %s32, 0
      %p290 = por %p288, %p289
      %s291 = ssub.s32 %s26, %s33
      %p292 = scmp.eq.s32.totalorder %s291, 0
      %s294 = sadd.s32 %s293, 1
      %s295 = scalar_select %p292, %s293, %s294
      %p298 = pneg %p292
      %p299 = scmp.eq.s32.totalorder %s26, 5
      %p300 = por %p298, %p299
      %p301 = scmp.ne.s32.totalorder %s293, %s296
      %p302 = scmp.eq.s32.totalorder %s26, 0
      %p303 = por %p301, %p302
      %p304 = scmp.ne.s32.totalorder %s293, %s296
      %p305 = scmp.eq.s32.totalorder %s31, 5
      %p306 = por %p304, %p305
      %p307 = scmp.ne.s32.totalorder %s296, %s297
      %p308 = scmp.eq.s32.totalorder %s31, 0
      %p309 = por %p307, %p308
      %p310 = scmp.ne.s32.totalorder %s296, %s297
      %p311 = scmp.eq.s32.totalorder %s32, 5
      %p312 = por %p310, %p311
      %p314 = scmp.ne.s32.totalorder %s297, %s313
      %p315 = scmp.eq.s32.totalorder %s32, 0
      %p316 = por %p314, %p315
      %s317 = ssub.s32 %s26, %s33
      %p318 = scmp.eq.s32.totalorder %s317, 0
      %s320 = sadd.s32 %s319, 1
      %s321 = scalar_select %p318, %s319, %s320
      %p324 = pneg %p318
      %p325 = scmp.eq.s32.totalorder %s26, 5
      %p326 = por %p324, %p325
      %p327 = scmp.ne.s32.totalorder %s319, %s322
      %p328 = scmp.eq.s32.totalorder %s26, 0
      %p329 = por %p327, %p328
      %p330 = scmp.ne.s32.totalorder %s319, %s322
      %p331 = scmp.eq.s32.totalorder %s31, 5
      %p332 = por %p330, %p331
      %p333 = scmp.ne.s32.totalorder %s322, %s323
      %p334 = scmp.eq.s32.totalorder %s31, 0
      %p335 = por %p333, %p334
      %p336 = scmp.ne.s32.totalorder %s322, %s323
      %p337 = scmp.eq.s32.totalorder %s32, 5
      %p338 = por %p336, %p337
      %p340 = scmp.ne.s32.totalorder %s323, %s339
      %p341 = scmp.eq.s32.totalorder %s32, 0
      %p342 = por %p340, %p341
      %s343 = ssub.s32 %s26, %s33
      %p344 = scmp.eq.s32.totalorder %s343, 0
      %s346 = sadd.s32 %s345, 1
      %s347 = scalar_select %p344, %s345, %s346
      %p350 = pneg %p344
      %p351 = scmp.eq.s32.totalorder %s26, 5
      %p352 = por %p350, %p351
      %p353 = scmp.ne.s32.totalorder %s345, %s348
      %p354 = scmp.eq.s32.totalorder %s26, 0
      %p355 = por %p353, %p354
      %p356 = scmp.ne.s32.totalorder %s345, %s348
      %p357 = scmp.eq.s32.totalorder %s31, 5
      %p358 = por %p356, %p357
      %p359 = scmp.ne.s32.totalorder %s348, %s349
      %p360 = scmp.eq.s32.totalorder %s31, 0
      %p361 = por %p359, %p360
      %p362 = scmp.ne.s32.totalorder %s348, %s349
      %p363 = scmp.eq.s32.totalorder %s32, 5
      %p364 = por %p362, %p363
      %p366 = scmp.ne.s32.totalorder %s349, %s365
      %p367 = scmp.eq.s32.totalorder %s32, 0
      %p368 = por %p366, %p367
      %s369 = ssub.s32 %s26, %s33
      %p370 = scmp.eq.s32.totalorder %s369, 0
      %s372 = sadd.s32 %s371, 1
      %s373 = scalar_select %p370, %s371, %s372
      %p376 = pneg %p370
      %p377 = scmp.eq.s32.totalorder %s26, 5
      %p378 = por %p376, %p377
      %p379 = scmp.ne.s32.totalorder %s371, %s374
      %p380 = scmp.eq.s32.totalorder %s26, 0
      %p381 = por %p379, %p380
      %p382 = scmp.ne.s32.totalorder %s371, %s374
      %p383 = scmp.eq.s32.totalorder %s31, 5
      %p384 = por %p382, %p383
      %p385 = scmp.ne.s32.totalorder %s374, %s375
      %p386 = scmp.eq.s32.totalorder %s31, 0
      %p387 = por %p385, %p386
      %p388 = scmp.ne.s32.totalorder %s374, %s375
      %p389 = scmp.eq.s32.totalorder %s32, 5
      %p390 = por %p388, %p389
      %p392 = scmp.ne.s32.totalorder %s375, %s391
      %p393 = scmp.eq.s32.totalorder %s32, 0
      %p394 = por %p392, %p393
      %s395 = ssub.s32 %s26, %s33
      %p396 = scmp.eq.s32.totalorder %s395, 0
      %s398 = sadd.s32 %s397, 1
      %s399 = scalar_select %p396, %s397, %s398
      %p402 = pneg %p396
      %p403 = scmp.eq.s32.totalorder %s26, 5
      %p404 = por %p402, %p403
      %p405 = scmp.ne.s32.totalorder %s397, %s400
      %p406 = scmp.eq.s32.totalorder %s26, 0
      %p407 = por %p405, %p406
      %p408 = scmp.ne.s32.totalorder %s397, %s400
      %p409 = scmp.eq.s32.totalorder %s31, 5
      %p410 = por %p408, %p409
      %p411 = scmp.ne.s32.totalorder %s400, %s401
      %p412 = scmp.eq.s32.totalorder %s31, 0
      %p413 = por %p411, %p412
      %p414 = scmp.ne.s32.totalorder %s400, %s401
      %p415 = scmp.eq.s32.totalorder %s32, 5
      %p416 = por %p414, %p415
      %p418 = scmp.ne.s32.totalorder %s401, %s417
      %p419 = scmp.eq.s32.totalorder %s32, 0
      %p420 = por %p418, %p419
      %s421 = ssub.s32 %s26, %s33
      %p422 = scmp.eq.s32.totalorder %s421, 0
      %s424 = sadd.s32 %s423, 1
      %s425 = scalar_select %p422, %s423, %s424
      %p428 = pneg %p422
      %p429 = scmp.eq.s32.totalorder %s26, 5
      %p430 = por %p428, %p429
      %p431 = scmp.ne.s32.totalorder %s423, %s426
      %p432 = scmp.eq.s32.totalorder %s26, 0
      %p433 = por %p431, %p432
      %p434 = scmp.ne.s32.totalorder %s423, %s426
      %p435 = scmp.eq.s32.totalorder %s31, 5
      %p436 = por %p434, %p435
      %p437 = scmp.ne.s32.totalorder %s426, %s427
      %p438 = scmp.eq.s32.totalorder %s31, 0
      %p439 = por %p437, %p438
      %p440 = scmp.ne.s32.totalorder %s426, %s427
      %p441 = scmp.eq.s32.totalorder %s32, 5
      %p442 = por %p440, %p441
      %p444 = scmp.ne.s32.totalorder %s427, %s443
      %p445 = scmp.eq.s32.totalorder %s32, 0
      %p446 = por %p444, %p445
      %s447 = ssub.s32 %s26, %s33
      %p448 = scmp.eq.s32.totalorder %s447, 0
      %s450 = sadd.s32 %s449, 1
      %s451 = scalar_select %p448, %s449, %s450
      %p454 = pneg %p448
      %p455 = scmp.eq.s32.totalorder %s26, 5
      %p456 = por %p454, %p455
      %p457 = scmp.ne.s32.totalorder %s449, %s452
      %p458 = scmp.eq.s32.totalorder %s26, 0
      %p459 = por %p457, %p458
      %p460 = scmp.ne.s32.totalorder %s449, %s452
      %p461 = scmp.eq.s32.totalorder %s31, 5
      %p462 = por %p460, %p461
      %p463 = scmp.ne.s32.totalorder %s452, %s453
      %p464 = scmp.eq.s32.totalorder %s31, 0
      %p465 = por %p463, %p464
      %p466 = scmp.ne.s32.totalorder %s452, %s453
      %p467 = scmp.eq.s32.totalorder %s32, 5
      %p468 = por %p466, %p467
      %p470 = scmp.ne.s32.totalorder %s453, %s469
      %p471 = scmp.eq.s32.totalorder %s32, 0
      %p472 = por %p470, %p471
      %s474 = sadd.s32 %s473, 1
      %p477 = scmp.eq.s32.totalorder %s26, 5
      %p478 = scmp.ne.s32.totalorder %s473, %s475
      %p479 = scmp.eq.s32.totalorder %s26, 0
      %p480 = por %p478, %p479
      %p481 = scmp.ne.s32.totalorder %s473, %s475
      %p482 = scmp.eq.s32.totalorder %s31, 5
      %p483 = por %p481, %p482
      %p484 = scmp.ne.s32.totalorder %s475, %s476
      %p485 = scmp.eq.s32.totalorder %s31, 0
      %p486 = por %p484, %p485
      %p487 = scmp.ne.s32.totalorder %s475, %s476
      %p488 = scmp.eq.s32.totalorder %s32, 5
      %p489 = por %p487, %p488
      %p491 = scmp.ne.s32.totalorder %s476, %s490
      %p492 = scmp.eq.s32.totalorder %s32, 0
      %p493 = por %p491, %p492
      %p494 = scmp.le.s32.totalorder 1, %s26
      %p495 = scmp.lt.s32.totalorder %s26, 7
      %p496 = pnand %p494, %p495
      %p497 = pneg %p496
      // Predicated region
      $region9: #{_lambda_.2} parent=5 // pred_check
        _
      $region10: #{_lambda_.2} parent=5 // pred_check_branch
        %499 = sbr.rel (%p496) target = $region12
      $region11: #{_lambda_.2} parent=5 // pred_region
        %s500 = ssub.s32 %s26, 1
        // Predicated region
        $region13: #{_lambda_.2} parent=11 // pred_check
          %p501 = pneg %p47
        $region14: #{_lambda_.2} parent=11 // pred_check_branch
          %503 = sbr.rel (%p501) target = $region16
        $region15: #{_lambda_.2} parent=11 // pred_region
          _
        $region16: #{_lambda_.2} parent=11 // pred_fallthru
          _
        // Predicated region
        $region17: #{_lambda_.2} parent=11 // pred_check
          %p504 = pneg %p68
        $region18: #{_lambda_.2} parent=11 // pred_check_branch
          %506 = sbr.rel (%p504) target = $region20
        $region19: #{_lambda_.2} parent=11 // pred_region
          _
        $region20: #{_lambda_.2} parent=11 // pred_fallthru
          _
        // Predicated region
        $region21: #{_lambda_.2} parent=11 // pred_check
          %p507 = pneg %p89
        $region22: #{_lambda_.2} parent=11 // pred_check_branch
          %509 = sbr.rel (%p507) target = $region24
        $region23: #{_lambda_.2} parent=11 // pred_region
          _
        $region24: #{_lambda_.2} parent=11 // pred_fallthru
          _
        // Predicated region
        $region25: #{_lambda_.2} parent=11 // pred_check
          %p510 = pneg %p110
        $region26: #{_lambda_.2} parent=11 // pred_check_branch
          %512 = sbr.rel (%p510) target = $region28
        $region27: #{_lambda_.2} parent=11 // pred_region
          _
        $region28: #{_lambda_.2} parent=11 // pred_fallthru
          _
        // Predicated region
        $region29: #{_lambda_.2} parent=11 // pred_check
          %p513 = pneg %p131
        $region30: #{_lambda_.2} parent=11 // pred_check_branch
          %515 = sbr.rel (%p513) target = $region32
        $region31: #{_lambda_.2} parent=11 // pred_region
          _
        $region32: #{_lambda_.2} parent=11 // pred_fallthru
          _
        // Predicated region
        $region33: #{_lambda_.2} parent=11 // pred_check
          %p516 = pneg %p152
        $region34: #{_lambda_.2} parent=11 // pred_check_branch
          %518 = sbr.rel (%p516) target = $region36
        $region35: #{_lambda_.2} parent=11 // pred_region
          _
        $region36: #{_lambda_.2} parent=11 // pred_fallthru
          _
        // Predicated region
        $region37: #{_lambda_.2} parent=11 // pred_check
          %p519 = pneg %p173
        $region38: #{_lambda_.2} parent=11 // pred_check_branch
          %521 = sbr.rel (%p519) target = $region40
        $region39: #{_lambda_.2} parent=11 // pred_region
          %s523 = ssub.s32 128, 128
          %524 = vsyncadd [#allocation4], %s523
          %s526 = sshll.u32 %s6, 4
          %s527 = int_to_ptr.vmem [resolvable:$true] %s526
          %529 = dma.vmem_to_smem %s527, 128, [#allocation3], [#allocation4]
        $region40: #{_lambda_.2} parent=11 // pred_fallthru
          _
        // Predicated region
        $region41: #{_lambda_.2} parent=11 // pred_check
          %p530 = pneg %p194
        $region42: #{_lambda_.2} parent=11 // pred_check_branch
          %532 = sbr.rel (%p530) target = $region44
        $region43: #{_lambda_.2} parent=11 // pred_region
          _
        $region44: #{_lambda_.2} parent=11 // pred_fallthru
          _
        // Predicated region
        $region45: #{_lambda_.2} parent=11 // pred_check
          %p533 = pneg %p215
        $region46: #{_lambda_.2} parent=11 // pred_check_branch
          %535 = sbr.rel (%p533) target = $region48
        $region47: #{_lambda_.2} parent=11 // pred_region
          _
        $region48: #{_lambda_.2} parent=11 // pred_fallthru
          _
        // Predicated region
        $region49: #{_lambda_.2} parent=11 // pred_check
          %p536 = pneg %p236
        $region50: #{_lambda_.2} parent=11 // pred_check_branch
          %538 = sbr.rel (%p536) target = $region52
        $region51: #{_lambda_.2} parent=11 // pred_region
          _
        $region52: #{_lambda_.2} parent=11 // pred_fallthru
          _
        // Predicated region
        $region53: #{_lambda_.2} parent=11 // pred_check
          %p539 = pneg %p257
        $region54: #{_lambda_.2} parent=11 // pred_check_branch
          %541 = sbr.rel (%p539) target = $region56
        $region55: #{_lambda_.2} parent=11 // pred_region
          _
        $region56: #{_lambda_.2} parent=11 // pred_fallthru
          _
      $region12: #{_lambda_.2} parent=5 // pred_fallthru
        _
      %p542 = scmp.lt.s32.totalorder %s26, 6
      // Predicated region
      $region57: #{_lambda_.2} parent=5 // pred_check
        %p543 = pneg %p542
      $region58: #{_lambda_.2} parent=5 // pred_check_branch
        %545 = sbr.rel (%p543) target = $region60
      $region59: #{_lambda_.2} parent=5 // pred_region
        // Predicated region
        $region61: #{_lambda_.2} parent=59 // pred_check
          %p546 = pneg %p277
        $region62: #{_lambda_.2} parent=59 // pred_check_branch
          %548 = sbr.rel (%p546) target = $region64
        $region63: #{_lambda_.2} parent=59 // pred_region
          %p549 = scmp.lt.s32.totalorder %s26, 5
          %s550 = scalar_select %p549, %s26, 5
          %s551 = smul.addr %s550, 48
          %s552 = smul.addr %s551, 8
          %s553 = scalar_lea.vmem %s11, %s552
        $region64: #{_lambda_.2} parent=59 // pred_fallthru
          _
        // Predicated region
        $region65: #{_lambda_.2} parent=59 // pred_check
          %p554 = pneg %p303
        $region66: #{_lambda_.2} parent=59 // pred_check_branch
          %556 = sbr.rel (%p554) target = $region68
        $region67: #{_lambda_.2} parent=59 // pred_region
          %p557 = scmp.lt.s32.totalorder %s26, 5
          %s558 = scalar_select %p557, %s26, 5
          %s559 = scalar_lea.vmem %s12, %s558
        $region68: #{_lambda_.2} parent=59 // pred_fallthru
          _
        // Predicated region
        $region69: #{_lambda_.2} parent=59 // pred_check
          %p560 = pneg %p329
        $region70: #{_lambda_.2} parent=59 // pred_check_branch
          %562 = sbr.rel (%p560) target = $region72
        $region71: #{_lambda_.2} parent=59 // pred_region
          %p563 = scmp.lt.s32.totalorder %s26, 5
          %s564 = scalar_select %p563, %s26, 5
          %s565 = smul.addr %s564, 16
          %s566 = smul.addr %s565, 8
          %s567 = scalar_lea.vmem %s13, %s566
        $region72: #{_lambda_.2} parent=59 // pred_fallthru
          _
        // Predicated region
        $region73: #{_lambda_.2} parent=59 // pred_check
          %p568 = pneg %p355
        $region74: #{_lambda_.2} parent=59 // pred_check_branch
          %570 = sbr.rel (%p568) target = $region76
        $region75: #{_lambda_.2} parent=59 // pred_region
          %p571 = scmp.lt.s32.totalorder %s26, 5
          %s572 = scalar_select %p571, %s26, 5
          %s573 = scalar_lea.vmem %s14, %s572
        $region76: #{_lambda_.2} parent=59 // pred_fallthru
          _
        // Predicated region
        $region77: #{_lambda_.2} parent=59 // pred_check
          %p574 = pneg %p381
        $region78: #{_lambda_.2} parent=59 // pred_check_branch
          %576 = sbr.rel (%p574) target = $region80
        $region79: #{_lambda_.2} parent=59 // pred_region
          %p577 = scmp.lt.s32.totalorder %s26, 5
          %s578 = scalar_select %p577, %s26, 5
          %s579 = smul.addr %s578, 48
          %s580 = smul.addr %s579, 8
          %s581 = scalar_lea.vmem %s15, %s580
        $region80: #{_lambda_.2} parent=59 // pred_fallthru
          _
        // Predicated region
        $region81: #{_lambda_.2} parent=59 // pred_check
          %p582 = pneg %p407
        $region82: #{_lambda_.2} parent=59 // pred_check_branch
          %584 = sbr.rel (%p582) target = $region84
        $region83: #{_lambda_.2} parent=59 // pred_region
          %p585 = scmp.lt.s32.totalorder %s26, 5
          %s586 = scalar_select %p585, %s26, 5
          %s587 = scalar_lea.vmem %s16, %s586
        $region84: #{_lambda_.2} parent=59 // pred_fallthru
          _
        // Predicated region
        $region85: #{_lambda_.2} parent=59 // pred_check
          %p588 = pneg %p433
        $region86: #{_lambda_.2} parent=59 // pred_check_branch
          %590 = sbr.rel (%p588) target = $region88
        $region87: #{_lambda_.2} parent=59 // pred_region
          %p591 = scmp.lt.s32.totalorder %s26, 5
          %s592 = scalar_select %p591, %s26, 5
          %s593 = smul.addr %s592, 16
          %s594 = smul.addr %s593, 8
          %s595 = scalar_lea.vmem %s17, %s594
        $region88: #{_lambda_.2} parent=59 // pred_fallthru
          _
        // Predicated region
        $region89: #{_lambda_.2} parent=59 // pred_check
          %p596 = pneg %p459
        $region90: #{_lambda_.2} parent=59 // pred_check_branch
          %598 = sbr.rel (%p596) target = $region92
        $region91: #{_lambda_.2} parent=59 // pred_region
          %p599 = scmp.lt.s32.totalorder %s26, 5
          %s600 = scalar_select %p599, %s26, 5
          %s601 = scalar_lea.vmem %s18, %s600
        $region92: #{_lambda_.2} parent=59 // pred_fallthru
          _
      $region60: #{_lambda_.2} parent=5 // pred_fallthru
        _
      %p602 = scmp.le.s32.totalorder 1, %s26
      %p603 = scmp.lt.s32.totalorder %s26, 7
      %p604 = pnand %p602, %p603
      %p605 = pneg %p604
      // Predicated region
      $region93: #{_lambda_.2} parent=5 // pred_check
        _
      $region94: #{_lambda_.2} parent=5 // pred_check_branch
        %607 = sbr.rel (%p604) target = $region96
      $region95: #{_lambda_.2} parent=5 // pred_region
        %s608 = ssub.s32 %s26, 1
        // Predicated region
        $region97: #{_lambda_.2} parent=95 // pred_check
          %p609 = pneg %p173
        $region98: #{_lambda_.2} parent=95 // pred_check_branch
          %611 = sbr.rel (%p609) target = $region100
        $region99: #{_lambda_.2} parent=95 // pred_region
          %612 = dma.done [#allocation4], 128
        $region100: #{_lambda_.2} parent=95 // pred_fallthru
          _
        %613 = sfence
        %p614 = pneg %p47
        %p615 = pneg %p44
        %p616 = pneg %p68
        %p617 = pneg %p65
        %p618 = pneg %p89
        %p619 = pneg %p86
        %p620 = pneg %p110
        %p621 = pneg %p107
        %p622 = pneg %p131
        %p623 = pneg %p128
        %p624 = pneg %p152
        %p625 = pneg %p149
        %p626 = pneg %p173
        %p627 = pneg %p170
        %p628 = pneg %p194
        %p629 = pneg %p191
        %p630 = pneg %p215
        %p631 = pneg %p212
        %p632 = pneg %p236
        %p633 = pneg %p233
        %p634 = pneg %p257
        %p635 = pneg %p254
        %p636 = scmp.lt.s32.totalorder %s31, 5
        %s637 = scalar_select %p636, %s31, 5
        %s638 = smul.addr %s637, 48
        %s639 = smul.addr %s638, 8
        %s640 = scalar_lea.vmem %s11, %s639
        %p641 = pneg %p283
        %p642 = pneg %p280
        %p643 = scmp.lt.s32.totalorder %s31, 5
        %s644 = scalar_select %p643, %s31, 5
        %s645 = scalar_lea.vmem %s12, %s644
        %p646 = pneg %p309
        %p647 = pneg %p306
        %p648 = scmp.lt.s32.totalorder %s31, 5
        %s649 = scalar_select %p648, %s31, 5
        %s650 = smul.addr %s649, 16
        %s651 = smul.addr %s650, 8
        %s652 = scalar_lea.vmem %s13, %s651
        %p653 = pneg %p335
        %p654 = pneg %p332
        %p655 = scmp.lt.s32.totalorder %s31, 5
        %s656 = scalar_select %p655, %s31, 5
        %s657 = scalar_lea.vmem %s14, %s656
        %p658 = pneg %p361
        %p659 = pneg %p358
        %p660 = scmp.lt.s32.totalorder %s31, 5
        %s661 = scalar_select %p660, %s31, 5
        %s662 = smul.addr %s661, 48
        %s663 = smul.addr %s662, 8
        %s664 = scalar_lea.vmem %s15, %s663
        %p665 = pneg %p387
        %p666 = pneg %p384
        %p667 = scmp.lt.s32.totalorder %s31, 5
        %s668 = scalar_select %p667, %s31, 5
        %s669 = scalar_lea.vmem %s16, %s668
        %p670 = pneg %p413
        %p671 = pneg %p410
        %p672 = scmp.lt.s32.totalorder %s31, 5
        %s673 = scalar_select %p672, %s31, 5
        %s674 = smul.addr %s673, 16
        %s675 = smul.addr %s674, 8
        %s676 = scalar_lea.vmem %s17, %s675
        %p677 = pneg %p439
        %p678 = pneg %p436
        %p679 = scmp.lt.s32.totalorder %s31, 5
        %s680 = scalar_select %p679, %s31, 5
        %s681 = scalar_lea.vmem %s18, %s680
        %p682 = pneg %p465
        %p683 = pneg %p462
        %p684 = pneg %p486
        %p685 = pneg %p483
        %p686 = scmp.lt.s32.totalorder %s31, 5
        %s687 = scalar_select %p686, %s31, 5
        %s688 = smul.addr %s687, 48
        %s689 = smul.addr %s688, 8
        %s690 = scalar_lea.vmem %s11, %s689
        %p691 = scmp.lt.s32.totalorder %s31, 5
        %s692 = scalar_select %p691, %s31, 5
        %s693 = scalar_lea.vmem %s12, %s692
        %p694 = scmp.lt.s32.totalorder %s31, 5
        %s695 = scalar_select %p694, %s31, 5
        %s696 = smul.addr %s695, 16
        %s697 = smul.addr %s696, 8
        %s698 = scalar_lea.vmem %s13, %s697
        %p699 = scmp.lt.s32.totalorder %s31, 5
        %s700 = scalar_select %p699, %s31, 5
        %s701 = scalar_lea.vmem %s14, %s700
        %p702 = scmp.lt.s32.totalorder %s31, 5
        %s703 = scalar_select %p702, %s31, 5
        %s704 = smul.addr %s703, 48
        %s705 = smul.addr %s704, 8
        %s706 = scalar_lea.vmem %s15, %s705
        %p707 = scmp.lt.s32.totalorder %s31, 5
        %s708 = scalar_select %p707, %s31, 5
        %s709 = scalar_lea.vmem %s16, %s708
        %p710 = scmp.lt.s32.totalorder %s31, 5
        %s711 = scalar_select %p710, %s31, 5
        %s712 = smul.addr %s711, 16
        %s713 = smul.addr %s712, 8
        %s714 = scalar_lea.vmem %s17, %s713
        %p715 = scmp.lt.s32.totalorder %s31, 5
        %s716 = scalar_select %p715, %s31, 5
        %s717 = scalar_lea.vmem %s18, %s716
        %p718 = scmp.eq.s32.totalorder %s31, 0
        // Predicated region
        $region101: #{_lambda_.2} parent=95 // pred_check
          %p719 = pneg %p718
        $region102: #{_lambda_.2} parent=95 // pred_check_branch
          %721 = sbr.rel (%p719) target = $region104
        $region103: #{_lambda_.2} parent=95 // pred_region
          %v722 = vld [vmem:[%s0] sm:$0xff]
          %v723 = vld [vmem:[%s0 + $0x8] sm:$0xff]
          %v724 = vld [vmem:[%s0 + $0x10] sm:$0xff]
          %v725 = vld [vmem:[%s0 + $0x18] sm:$0xff]
          %v726 = vld [vmem:[%s0 + $0x20] sm:$0xff]
          %v727 = vld [vmem:[%s0 + $0x28] sm:$0xff]
          %v728 = vld [vmem:[%s0 + $0x30] sm:$0xff]
          %v729 = vld [vmem:[%s0 + $0x38] sm:$0xff]
          %v730 = vld [vmem:[%s7] sm:$0xff]
          %v731 = vld [vmem:[%s7 + $0x8] sm:$0xff]
          %v732 = vld [vmem:[%s7 + $0x10] sm:$0xff]
          %v733 = vld [vmem:[%s7 + $0x18] sm:$0xff]
          %v734 = vld [vmem:[%s7 + $0x20] sm:$0xff]
          %v735 = vld [vmem:[%s7 + $0x28] sm:$0xff]
          %v736 = vld [vmem:[%s7 + $0x30] sm:$0xff]
          %v737 = vld [vmem:[%s7 + $0x38] sm:$0xff]
          %v738 = vld [vmem:[%s7 + $0x40] sm:$0xff]
          %v739 = vld [vmem:[%s7 + $0x48] sm:$0xff]
          %v740 = vld [vmem:[%s7 + $0x50] sm:$0xff]
          %v741 = vld [vmem:[%s7 + $0x58] sm:$0xff]
          %v742 = vld [vmem:[%s7 + $0x60] sm:$0xff]
          %v743 = vld [vmem:[%s7 + $0x68] sm:$0xff]
          %v744 = vld [vmem:[%s7 + $0x70] sm:$0xff]
          %v745 = vld [vmem:[%s7 + $0x78] sm:$0xff]
          %v746 = vld [vmem:[%s8] sm:$0x1]
          %v748 = vlaneseq
          %v749 = vshrl.u32 %v748, 7
          %v750 = vsub.s32 0, %v749
          %v751 = vrot.slane %v746, %v750
          %753 = vmatprep.subr.mxu0 0.0
          %754 = vmatpush1.msra.mxu0 %v730
          %755 = vmatprep.subr.mxu0 0.0
          %756 = vmatpush1.msra.mxu0 %v731
          %757 = vmatprep.subr.mxu0 0.0
          %758 = vmatpush1.msra.mxu0 %v732
          %759 = vmatprep.subr.mxu0 0.0
          %760 = vmatpush1.msra.mxu0 %v733
          %761 = vmatprep.subr.mxu0 0.0
          %762 = vmatpush1.msra.mxu0 %v734
          %763 = vmatprep.subr.mxu0 0.0
          %764 = vmatpush1.msra.mxu0 %v735
          %765 = vmatprep.subr.mxu0 0.0
          %766 = vmatpush1.msra.mxu0 %v736
          %767 = vmatprep.subr.mxu0 0.0
          %768 = vmatpush1.msra.mxu0 %v737
          %769 = vmatprep.subr.mxu0 0.0
          %770 = vmatpush1.msra.mxu0 %v738
          %771 = vmatprep.subr.mxu0 0.0
          %772 = vmatpush1.msra.mxu0 %v739
          %773 = vmatprep.subr.mxu0 0.0
          %774 = vmatpush1.msra.mxu0 %v740
          %775 = vmatprep.subr.mxu0 0.0
          %776 = vmatpush1.msra.mxu0 %v741
          %777 = vmatprep.subr.mxu0 0.0
          %778 = vmatpush1.msra.mxu0 %v742
          %779 = vmatprep.subr.mxu0 0.0
          %780 = vmatpush1.msra.mxu0 %v743
          %781 = vmatprep.subr.mxu0 0.0
          %782 = vmatpush1.msra.mxu0 %v744
          %783 = vmatprep.subr.mxu0 0.0
          %784 = vmatpush1.msra.mxu0 %v745
          %785 = vmatprep.subr.mxu0 0.0
          %786 = vmatpush1.msra.mxu0 0.0
          %787 = vmatprep.subr.mxu0 0.0
          %788 = vmatpush1.msra.mxu0 0.0
          %789 = vmatprep.subr.mxu0 0.0
          %790 = vmatpush1.msra.mxu0 0.0
          %791 = vmatprep.subr.mxu0 0.0
          %792 = vmatpush1.msra.mxu0 0.0
          %793 = vmatprep.subr.mxu0 0.0
          %794 = vmatpush1.msra.mxu0 0.0
          %795 = vmatprep.subr.mxu0 0.0
          %796 = vmatpush1.msra.mxu0 0.0
          %797 = vmatprep.subr.mxu0 0.0
          %798 = vmatpush1.msra.mxu0 0.0
          %799 = vmatprep.subr.mxu0 0.0
          %800 = vmatpush1.msra.mxu0 0.0
          %801 = vmatprep.subr.mxu0 0.0
          %802 = vmatpush1.msra.mxu0 0.0
          %803 = vmatprep.subr.mxu0 0.0
          %804 = vmatpush1.msra.mxu0 0.0
          %805 = vmatprep.subr.mxu0 0.0
          %806 = vmatpush1.msra.mxu0 0.0
          %807 = vmatprep.subr.mxu0 0.0
          %808 = vmatpush1.msra.mxu0 0.0
          %809 = vmatprep.subr.mxu0 0.0
          %810 = vmatpush1.msra.mxu0 0.0
          %811 = vmatprep.subr.mxu0 0.0
          %812 = vmatpush1.msra.mxu0 0.0
          %813 = vmatprep.subr.mxu0 0.0
          %814 = vmatpush1.msra.mxu0 0.0
          %815 = vmatprep.subr.mxu0 0.0
          %816 = vmatpush1.msra.mxu0 0.0
          %817 = vmatprep.mubr.f32.mxu0 0.0
          %818 = vmatmul.mubr.f32.gmra.mrb[0].mxu0 %v722
          %v819 = vpop.f32.mrb[0].mxu0
          %v820 = vadd.f32 %v751, %v819
          %v821 = vpop.f32.mrb[0].mxu0
          %822 = vmatprep.mubr.f32.mxu0 0.0
          %823 = vmatmul.mubr.f32.gmra.mrb[0].mxu0 %v723
          %v824 = vpop.f32.mrb[0].mxu0
          %v825 = vadd.f32 %v751, %v824
          %v826 = vpop.f32.mrb[0].mxu0
          %827 = vmatprep.mubr.f32.mxu0 0.0
          %828 = vmatmul.mubr.f32.gmra.mrb[0].mxu0 %v724
          %v829 = vpop.f32.mrb[0].mxu0
          %v830 = vadd.f32 %v751, %v829
          %v831 = vpop.f32.mrb[0].mxu0
          %832 = vmatprep.mubr.f32.mxu0 0.0
          %833 = vmatmul.mubr.f32.gmra.mrb[0].mxu0 %v725
          %v834 = vpop.f32.mrb[0].mxu0
          %v835 = vadd.f32 %v751, %v834
          %v836 = vpop.f32.mrb[0].mxu0
          %837 = vmatprep.mubr.f32.mxu0 0.0
          %838 = vmatmul.mubr.f32.gmra.mrb[0].mxu0 %v726
          %v839 = vpop.f32.mrb[0].mxu0
          %v840 = vadd.f32 %v751, %v839
          %v841 = vpop.f32.mrb[0].mxu0
          %842 = vmatprep.mubr.f32.mxu0 0.0
          %843 = vmatmul.mubr.f32.gmra.mrb[0].mxu0 %v727
          %v844 = vpop.f32.mrb[0].mxu0
          %v845 = vadd.f32 %v751, %v844
          %v846 = vpop.f32.mrb[0].mxu0
          %847 = vmatprep.mubr.f32.mxu0 0.0
          %848 = vmatmul.mubr.f32.gmra.mrb[0].mxu0 %v728
          %v849 = vpop.f32.mrb[0].mxu0
          %v850 = vadd.f32 %v751, %v849
          %v851 = vpop.f32.mrb[0].mxu0
          %852 = vmatprep.mubr.f32.mxu0 0.0
          %853 = vmatmul.mubr.f32.gmra.mrb[0].mxu0 %v729
          %v854 = vpop.f32.mrb[0].mxu0
          %v855 = vadd.f32 %v751, %v854
          %v856 = vpop.f32.mrb[0].mxu0
          %857 = vdwg.mxu0
          %v858 = vxor.u32 %v820, 2147483648
          %v859 = vxor.u32 %v825, 2147483648
          %v860 = vxor.u32 %v830, 2147483648
          %v861 = vxor.u32 %v835, 2147483648
          %v862 = vxor.u32 %v840, 2147483648
          %v863 = vxor.u32 %v845, 2147483648
          %v864 = vxor.u32 %v850, 2147483648
          %v865 = vxor.u32 %v855, 2147483648
          %v866 = vmul.f32 %v858, 1.442695
          %v867 = vpow.pop %v866
          %v868 = vmul.f32 %v859, 1.442695
          %v869 = vpow.pop %v868
          %v870 = vmul.f32 %v860, 1.442695
          %v871 = vpow.pop %v870
          %v872 = vmul.f32 %v861, 1.442695
          %v873 = vpow.pop %v872
          %v874 = vmul.f32 %v862, 1.442695
          %v875 = vpow.pop %v874
          %v876 = vmul.f32 %v863, 1.442695
          %v877 = vpow.pop %v876
          %v878 = vmul.f32 %v864, 1.442695
          %v879 = vpow.pop %v878
          %v880 = vmul.f32 %v865, 1.442695
          %v881 = vpow.pop %v880
          %v882 = vadd.f32 %v867, 1.0
          %v883 = vadd.f32 %v869, 1.0
          %v884 = vadd.f32 %v871, 1.0
          %v885 = vadd.f32 %v873, 1.0
          %v886 = vadd.f32 %v875, 1.0
          %v887 = vadd.f32 %v877, 1.0
          %v888 = vadd.f32 %v879, 1.0
          %v889 = vadd.f32 %v881, 1.0
          %v890 = vrcp.pop %v882
          %v891 = vmul.f32 1.0, %v890
          %v892 = vrcp.pop %v883
          %v893 = vmul.f32 1.0, %v892
          %v894 = vrcp.pop %v884
          %v895 = vmul.f32 1.0, %v894
          %v896 = vrcp.pop %v885
          %v897 = vmul.f32 1.0, %v896
          %v898 = vrcp.pop %v886
          %v899 = vmul.f32 1.0, %v898
          %v900 = vrcp.pop %v887
          %v901 = vmul.f32 1.0, %v900
          %v902 = vrcp.pop %v888
          %v903 = vmul.f32 1.0, %v902
          %v904 = vrcp.pop %v889
          %v905 = vmul.f32 1.0, %v904
          %v906 = vmul.f32 %v820, %v891
          %v907 = vmul.f32 %v825, %v893
          %v908 = vmul.f32 %v830, %v895
          %v909 = vmul.f32 %v835, %v897
          %v910 = vmul.f32 %v840, %v899
          %v911 = vmul.f32 %v845, %v901
          %v912 = vmul.f32 %v850, %v903
          %v913 = vmul.f32 %v855, %v905
          %v914 = vld [vmem:[%s9] sm:$0xff]
          %v915 = vld [vmem:[%s9 + $0x8] sm:$0xff]
          %v916 = vld [vmem:[%s9 + $0x10] sm:$0xff]
          %v917 = vld [vmem:[%s9 + $0x18] sm:$0xff]
          %v918 = vld [vmem:[%s9 + $0x20] sm:$0xff]
          %v919 = vld [vmem:[%s9 + $0x28] sm:$0xff]
          %v920 = vld [vmem:[%s9 + $0x30] sm:$0xff]
          %v921 = vld [vmem:[%s9 + $0x38] sm:$0xff]
          %v922 = vld [vmem:[%s9 + $0x40] sm:$0xff]
          %v923 = vld [vmem:[%s9 + $0x48] sm:$0xff]
          %v924 = vld [vmem:[%s9 + $0x50] sm:$0xff]
          %v925 = vld [vmem:[%s9 + $0x58] sm:$0xff]
          %v926 = vld [vmem:[%s9 + $0x60] sm:$0xff]
          %v927 = vld [vmem:[%s9 + $0x68] sm:$0xff]
          %v928 = vld [vmem:[%s9 + $0x70] sm:$0xff]
          %v929 = vld [vmem:[%s9 + $0x78] sm:$0xff]
          %v930 = vld [vmem:[%s10] sm:$0x1]
          %v932 = vlaneseq
          %v933 = vshrl.u32 %v932, 7
          %v934 = vsub.s32 0, %v933
          %v935 = vrot.slane %v930, %v934
          %937 = vmatprep.subr.mxu0 0.0
          %938 = vmatpush1.msra.mxu0 %v914
          %939 = vmatprep.subr.mxu0 0.0
          %940 = vmatpush1.msra.mxu0 %v915
          %941 = vmatprep.subr.mxu0 0.0
          %942 = vmatpush1.msra.mxu0 %v916
          %943 = vmatprep.subr.mxu0 0.0
          %944 = vmatpush1.msra.mxu0 %v917
          %945 = vmatprep.subr.mxu0 0.0
          %946 = vmatpush1.msra.mxu0 %v918
          %947 = vmatprep.subr.mxu0 0.0
          %948 = vmatpush1.msra.mxu0 %v919
          %949 = vmatprep.subr.mxu0 0.0
          %950 = vmatpush1.msra.mxu0 %v920
          %951 = vmatprep.subr.mxu0 0.0
          %952 = vmatpush1.msra.mxu0 %v921
          %953 = vmatprep.subr.mxu0 0.0
          %954 = vmatpush1.msra.mxu0 %v922
          %955 = vmatprep.subr.mxu0 0.0
          %956 = vmatpush1.msra.mxu0 %v923
          %957 = vmatprep.subr.mxu0 0.0
          %958 = vmatpush1.msra.mxu0 %v924
          %959 = vmatprep.subr.mxu0 0.0
          %960 = vmatpush1.msra.mxu0 %v925
          %961 = vmatprep.subr.mxu0 0.0
          %962 = vmatpush1.msra.mxu0 %v926
          %963 = vmatprep.subr.mxu0 0.0
          %964 = vmatpush1.msra.mxu0 %v927
          %965 = vmatprep.subr.mxu0 0.0
          %966 = vmatpush1.msra.mxu0 %v928
          %967 = vmatprep.subr.mxu0 0.0
          %968 = vmatpush1.msra.mxu0 %v929
          %969 = vmatprep.subr.mxu0 0.0
          %970 = vmatpush1.msra.mxu0 0.0
          %971 = vmatprep.subr.mxu0 0.0
          %972 = vmatpush1.msra.mxu0 0.0
          %973 = vmatprep.subr.mxu0 0.0
          %974 = vmatpush1.msra.mxu0 0.0
          %975 = vmatprep.subr.mxu0 0.0
          %976 = vmatpush1.msra.mxu0 0.0
          %977 = vmatprep.subr.mxu0 0.0
          %978 = vmatpush1.msra.mxu0 0.0
          %979 = vmatprep.subr.mxu0 0.0
          %980 = vmatpush1.msra.mxu0 0.0
          %981 = vmatprep.subr.mxu0 0.0
          %982 = vmatpush1.msra.mxu0 0.0
          %983 = vmatprep.subr.mxu0 0.0
          %984 = vmatpush1.msra.mxu0 0.0
          %985 = vmatprep.subr.mxu0 0.0
          %986 = vmatpush1.msra.mxu0 0.0
          %987 = vmatprep.subr.mxu0 0.0
          %988 = vmatpush1.msra.mxu0 0.0
          %989 = vmatprep.subr.mxu0 0.0
          %990 = vmatpush1.msra.mxu0 0.0
          %991 = vmatprep.subr.mxu0 0.0
          %992 = vmatpush1.msra.mxu0 0.0
          %993 = vmatprep.subr.mxu0 0.0
          %994 = vmatpush1.msra.mxu0 0.0
          %995 = vmatprep.subr.mxu0 0.0
          %996 = vmatpush1.msra.mxu0 0.0
          %997 = vmatprep.subr.mxu0 0.0
          %998 = vmatpush1.msra.mxu0 0.0
          %999 = vmatprep.subr.mxu0 0.0
          %1000 = vmatpush1.msra.mxu0 0.0
          %1001 = vmatprep.mubr.f32.mxu0 0.0
          %1002 = vmatmul.mubr.f32.gmra.mrb[0].mxu0 %v906
          %v1003 = vpop.f32.mrb[0].mxu0
          %v1004 = vadd.f32 %v935, %v1003
          %v1005 = vpop.f32.mrb[0].mxu0
          %1006 = vmatprep.mubr.f32.mxu0 0.0
          %1007 = vmatmul.mubr.f32.gmra.mrb[0].mxu0 %v907
          %v1008 = vpop.f32.mrb[0].mxu0
          %v1009 = vadd.f32 %v935, %v1008
          %v1010 = vpop.f32.mrb[0].mxu0
          %1011 = vmatprep.mubr.f32.mxu0 0.0
          %1012 = vmatmul.mubr.f32.gmra.mrb[0].mxu0 %v908
          %v1013 = vpop.f32.mrb[0].mxu0
          %v1014 = vadd.f32 %v935, %v1013
          %v1015 = vpop.f32.mrb[0].mxu0
          %1016 = vmatprep.mubr.f32.mxu0 0.0
          %1017 = vmatmul.mubr.f32.gmra.mrb[0].mxu0 %v909
          %v1018 = vpop.f32.mrb[0].mxu0
          %v1019 = vadd.f32 %v935, %v1018
          %v1020 = vpop.f32.mrb[0].mxu0
          %1021 = vmatprep.mubr.f32.mxu0 0.0
          %1022 = vmatmul.mubr.f32.gmra.mrb[0].mxu0 %v910
          %v1023 = vpop.f32.mrb[0].mxu0
          %v1024 = vadd.f32 %v935, %v1023
          %v1025 = vpop.f32.mrb[0].mxu0
          %1026 = vmatprep.mubr.f32.mxu0 0.0
          %1027 = vmatmul.mubr.f32.gmra.mrb[0].mxu0 %v911
          %v1028 = vpop.f32.mrb[0].mxu0
          %v1029 = vadd.f32 %v935, %v1028
          %v1030 = vpop.f32.mrb[0].mxu0
          %1031 = vmatprep.mubr.f32.mxu0 0.0
          %1032 = vmatmul.mubr.f32.gmra.mrb[0].mxu0 %v912
          %v1033 = vpop.f32.mrb[0].mxu0
          %v1034 = vadd.f32 %v935, %v1033
          %v1035 = vpop.f32.mrb[0].mxu0
          %1036 = vmatprep.mubr.f32.mxu0 0.0
          %1037 = vmatmul.mubr.f32.gmra.mrb[0].mxu0 %v913
          %v1038 = vpop.f32.mrb[0].mxu0
          %v1039 = vadd.f32 %v935, %v1038
          %v1040 = vpop.f32.mrb[0].mxu0
          %1041 = vdwg.mxu0
          %v1042 = vxor.u32 %v1004, 2147483648
          %v1043 = vxor.u32 %v1009, 2147483648
          %v1044 = vxor.u32 %v1014, 2147483648
          %v1045 = vxor.u32 %v1019, 2147483648
          %v1046 = vxor.u32 %v1024, 2147483648
          %v1047 = vxor.u32 %v1029, 2147483648
          %v1048 = vxor.u32 %v1034, 2147483648
          %v1049 = vxor.u32 %v1039, 2147483648
          %v1050 = vmul.f32 %v1042, 1.442695
          %v1051 = vpow.pop %v1050
          %v1052 = vmul.f32 %v1043, 1.442695
          %v1053 = vpow.pop %v1052
          %v1054 = vmul.f32 %v1044, 1.442695
          %v1055 = vpow.pop %v1054
          %v1056 = vmul.f32 %v1045, 1.442695
          %v1057 = vpow.pop %v1056
          %v1058 = vmul.f32 %v1046, 1.442695
          %v1059 = vpow.pop %v1058
          %v1060 = vmul.f32 %v1047, 1.442695
          %v1061 = vpow.pop %v1060
          %v1062 = vmul.f32 %v1048, 1.442695
          %v1063 = vpow.pop %v1062
          %v1064 = vmul.f32 %v1049, 1.442695
          %v1065 = vpow.pop %v1064
          %v1066 = vadd.f32 %v1051, 1.0
          %v1067 = vadd.f32 %v1053, 1.0
          %v1068 = vadd.f32 %v1055, 1.0
          %v1069 = vadd.f32 %v1057, 1.0
          %v1070 = vadd.f32 %v1059, 1.0
          %v1071 = vadd.f32 %v1061, 1.0
          %v1072 = vadd.f32 %v1063, 1.0
          %v1073 = vadd.f32 %v1065, 1.0
          %v1074 = vrcp.pop %v1066
          %v1075 = vmul.f32 1.0, %v1074
          %v1076 = vrcp.pop %v1067
          %v1077 = vmul.f32 1.0, %v1076
          %v1078 = vrcp.pop %v1068
          %v1079 = vmul.f32 1.0, %v1078
          %v1080 = vrcp.pop %v1069
          %v1081 = vmul.f32 1.0, %v1080
          %v1082 = vrcp.pop %v1070
          %v1083 = vmul.f32 1.0, %v1082
          %v1084 = vrcp.pop %v1071
          %v1085 = vmul.f32 1.0, %v1084
          %v1086 = vrcp.pop %v1072
          %v1087 = vmul.f32 1.0, %v1086
          %v1088 = vrcp.pop %v1073
          %v1089 = vmul.f32 1.0, %v1088
          %v1090 = vmul.f32 %v1004, %v1075
          %v1091 = vmul.f32 %v1009, %v1077
          %v1092 = vmul.f32 %v1014, %v1079
          %v1093 = vmul.f32 %v1019, %v1081
          %v1094 = vmul.f32 %v1024, %v1083
          %v1095 = vmul.f32 %v1029, %v1085
          %v1096 = vmul.f32 %v1034, %v1087
          %v1097 = vmul.f32 %v1039, %v1089
          %1098 = vst [vmem:[#allocation2] sm:$0xff] %v1090
          %1099 = vst [vmem:[#allocation2 + $0x8] sm:$0xff] %v1091
          %1100 = vst [vmem:[#allocation2 + $0x10] sm:$0xff] %v1092
          %1101 = vst [vmem:[#allocation2 + $0x18] sm:$0xff] %v1093
          %1102 = vst [vmem:[#allocation2 + $0x20] sm:$0xff] %v1094
          %1103 = vst [vmem:[#allocation2 + $0x28] sm:$0xff] %v1095
          %1104 = vst [vmem:[#allocation2 + $0x30] sm:$0xff] %v1096
          %1105 = vst [vmem:[#allocation2 + $0x38] sm:$0xff] %v1097
        $region104: #{_lambda_.2} parent=95 // pred_fallthru
          _
        %v1106 = vld [vmem:[#allocation2] sm:$0xff]
        %v1107 = vld [vmem:[#allocation2 + $0x8] sm:$0xff]
        %v1108 = vld [vmem:[#allocation2 + $0x10] sm:$0xff]
        %v1109 = vld [vmem:[#allocation2 + $0x18] sm:$0xff]
        %v1110 = vld [vmem:[#allocation2 + $0x20] sm:$0xff]
        %v1111 = vld [vmem:[#allocation2 + $0x28] sm:$0xff]
        %v1112 = vld [vmem:[#allocation2 + $0x30] sm:$0xff]
        %v1113 = vld [vmem:[#allocation2 + $0x38] sm:$0xff]
        %v1114 = vld [vmem:[%s2] sm:$0xff]
        %v1115 = vld [vmem:[%s2 + $0x8] sm:$0xff]
        %v1116 = vld [vmem:[%s2 + $0x10] sm:$0xff]
        %v1117 = vld [vmem:[%s2 + $0x18] sm:$0xff]
        %v1118 = vld [vmem:[%s2 + $0x20] sm:$0xff]
        %v1119 = vld [vmem:[%s2 + $0x28] sm:$0xff]
        %v1120 = vld [vmem:[%s2 + $0x30] sm:$0xff]
        %v1121 = vld [vmem:[%s2 + $0x38] sm:$0xff]
        %v1122 = vld [vmem:[%s2 + $0x40] sm:$0xff]
        %v1123 = vld [vmem:[%s2 + $0x48] sm:$0xff]
        %v1124 = vld [vmem:[%s2 + $0x50] sm:$0xff]
        %v1125 = vld [vmem:[%s2 + $0x58] sm:$0xff]
        %v1126 = vld [vmem:[%s2 + $0x60] sm:$0xff]
        %v1127 = vld [vmem:[%s2 + $0x68] sm:$0xff]
        %v1128 = vld [vmem:[%s2 + $0x70] sm:$0xff]
        %v1129 = vld [vmem:[%s2 + $0x78] sm:$0xff]
        %v1130 = vld [vmem:[%s2 + $0x80] sm:$0xff]
        %v1131 = vld [vmem:[%s2 + $0x88] sm:$0xff]
        %v1132 = vld [vmem:[%s2 + $0x90] sm:$0xff]
        %v1133 = vld [vmem:[%s2 + $0x98] sm:$0xff]
        %v1134 = vld [vmem:[%s2 + $0xa0] sm:$0xff]
        %v1135 = vld [vmem:[%s2 + $0xa8] sm:$0xff]
        %v1136 = vld [vmem:[%s2 + $0xb0] sm:$0xff]
        %v1137 = vld [vmem:[%s2 + $0xb8] sm:$0xff]
        %v1138 = vld [vmem:[%s2 + $0xc0] sm:$0xff]
        %v1139 = vld [vmem:[%s2 + $0xc8] sm:$0xff]
        %v1140 = vld [vmem:[%s2 + $0xd0] sm:$0xff]
        %v1141 = vld [vmem:[%s2 + $0xd8] sm:$0xff]
        %v1142 = vld [vmem:[%s2 + $0xe0] sm:$0xff]
        %v1143 = vld [vmem:[%s2 + $0xe8] sm:$0xff]
        %v1144 = vld [vmem:[%s2 + $0xf0] sm:$0xff]
        %v1145 = vld [vmem:[%s2 + $0xf8] sm:$0xff]
        %vm1146 = vcmask 523264
        %v1148 = vsel %vm1146, %v1114, 0
        %v1151 = vsel %vm1146, %v1115, 0
        %v1154 = vsel %vm1146, %v1116, 0
        %v1157 = vsel %vm1146, %v1117, 0
        %v1160 = vsel %vm1146, %v1118, 0
        %v1163 = vsel %vm1146, %v1119, 0
        %v1166 = vsel %vm1146, %v1120, 0
        %v1169 = vsel %vm1146, %v1121, 0
        %v1172 = vsel %vm1146, %v1122, 0
        %v1175 = vsel %vm1146, %v1123, 0
        %v1178 = vsel %vm1146, %v1124, 0
        %v1181 = vsel %vm1146, %v1125, 0
        %v1184 = vsel %vm1146, %v1126, 0
        %v1187 = vsel %vm1146, %v1127, 0
        %v1190 = vsel %vm1146, %v1128, 0
        %v1193 = vsel %vm1146, %v1129, 0
        %v1196 = vsel %vm1146, %v1130, 0
        %v1199 = vsel %vm1146, %v1131, 0
        %v1202 = vsel %vm1146, %v1132, 0
        %v1205 = vsel %vm1146, %v1133, 0
        %v1208 = vsel %vm1146, %v1134, 0
        %v1211 = vsel %vm1146, %v1135, 0
        %v1214 = vsel %vm1146, %v1136, 0
        %v1217 = vsel %vm1146, %v1137, 0
        %v1220 = vsel %vm1146, %v1138, 0
        %v1223 = vsel %vm1146, %v1139, 0
        %v1226 = vsel %vm1146, %v1140, 0
        %v1229 = vsel %vm1146, %v1141, 0
        %v1232 = vsel %vm1146, %v1142, 0
        %v1235 = vsel %vm1146, %v1143, 0
        %v1238 = vsel %vm1146, %v1144, 0
        %v1241 = vsel %vm1146, %v1145, 0
        %1243 = vmatprep.subr.mxu0 0.0
        %1244 = vmatpush1.msra.mxu0 %v1106
        %1245 = vmatprep.subr.mxu0 0.0
        %1246 = vmatpush1.msra.mxu0 %v1107
        %1247 = vmatprep.subr.mxu0 0.0
        %1248 = vmatpush1.msra.mxu0 %v1108
        %1249 = vmatprep.subr.mxu0 0.0
        %1250 = vmatpush1.msra.mxu0 %v1109
        %1251 = vmatprep.subr.mxu0 0.0
        %1252 = vmatpush1.msra.mxu0 %v1110
        %1253 = vmatprep.subr.mxu0 0.0
        %1254 = vmatpush1.msra.mxu0 %v1111
        %1255 = vmatprep.subr.mxu0 0.0
        %1256 = vmatpush1.msra.mxu0 %v1112
        %1257 = vmatprep.subr.mxu0 0.0
        %1258 = vmatpush1.msra.mxu0 %v1113
        %1259 = vmatprep.subr.mxu0 0.0
        %1260 = vmatpush1.msra.mxu0 0.0
        %1261 = vmatprep.subr.mxu0 0.0
        %1262 = vmatpush1.msra.mxu0 0.0
        %1263 = vmatprep.subr.mxu0 0.0
        %1264 = vmatpush1.msra.mxu0 0.0
        %1265 = vmatprep.subr.mxu0 0.0
        %1266 = vmatpush1.msra.mxu0 0.0
        %1267 = vmatprep.subr.mxu0 0.0
        %1268 = vmatpush1.msra.mxu0 0.0
        %1269 = vmatprep.subr.mxu0 0.0
        %1270 = vmatpush1.msra.mxu0 0.0
        %1271 = vmatprep.subr.mxu0 0.0
        %1272 = vmatpush1.msra.mxu0 0.0
        %1273 = vmatprep.subr.mxu0 0.0
        %1274 = vmatpush1.msra.mxu0 0.0
        %1275 = vmatprep.subr.mxu0 0.0
        %1276 = vmatpush1.msra.mxu0 0.0
        %1277 = vmatprep.subr.mxu0 0.0
        %1278 = vmatpush1.msra.mxu0 0.0
        %1279 = vmatprep.subr.mxu0 0.0
        %1280 = vmatpush1.msra.mxu0 0.0
        %1281 = vmatprep.subr.mxu0 0.0
        %1282 = vmatpush1.msra.mxu0 0.0
        %1283 = vmatprep.subr.mxu0 0.0
        %1284 = vmatpush1.msra.mxu0 0.0
        %1285 = vmatprep.subr.mxu0 0.0
        %1286 = vmatpush1.msra.mxu0 0.0
        %1287 = vmatprep.subr.mxu0 0.0
        %1288 = vmatpush1.msra.mxu0 0.0
        %1289 = vmatprep.subr.mxu0 0.0
        %1290 = vmatpush1.msra.mxu0 0.0
        %1291 = vmatprep.subr.mxu0 0.0
        %1292 = vmatpush1.msra.mxu0 0.0
        %1293 = vmatprep.subr.mxu0 0.0
        %1294 = vmatpush1.msra.mxu0 0.0
        %1295 = vmatprep.subr.mxu0 0.0
        %1296 = vmatpush1.msra.mxu0 0.0
        %1297 = vmatprep.subr.mxu0 0.0
        %1298 = vmatpush1.msra.mxu0 0.0
        %1299 = vmatprep.subr.mxu0 0.0
        %1300 = vmatpush1.msra.mxu0 0.0
        %1301 = vmatprep.subr.mxu0 0.0
        %1302 = vmatpush1.msra.mxu0 0.0
        %1303 = vmatprep.subr.mxu0 0.0
        %1304 = vmatpush1.msra.mxu0 0.0
        %1305 = vmatprep.subr.mxu0 0.0
        %1306 = vmatpush1.msra.mxu0 0.0
        %1307 = vmatprep.mubr.f32.mxu0 0.0
        %1308 = vmatmul.mubr.f32.gmra.mrb[0].mxu0 %v1148
        %v1309 = vpop.f32.mrb[0].mxu0
        %v1310 = vadd.f32 0.0, %v1309
        %v1311 = vpop.f32.mrb[0].mxu0
        %1312 = vmatprep.mubr.f32.mxu0 0.0
        %1313 = vmatmul.mubr.f32.gmra.mrb[0].mxu0 %v1151
        %v1314 = vpop.f32.mrb[0].mxu0
        %v1315 = vadd.f32 0.0, %v1314
        %v1316 = vpop.f32.mrb[0].mxu0
        %1317 = vmatprep.mubr.f32.mxu0 0.0
        %1318 = vmatmul.mubr.f32.gmra.mrb[0].mxu0 %v1154
        %v1319 = vpop.f32.mrb[0].mxu0
        %v1320 = vadd.f32 0.0, %v1319
        %v1321 = vpop.f32.mrb[0].mxu0
        %1322 = vmatprep.mubr.f32.mxu0 0.0
        %1323 = vmatmul.mubr.f32.gmra.mrb[0].mxu0 %v1157
        %v1324 = vpop.f32.mrb[0].mxu0
        %v1325 = vadd.f32 0.0, %v1324
        %v1326 = vpop.f32.mrb[0].mxu0
        %1327 = vmatprep.mubr.f32.mxu0 0.0
        %1328 = vmatmul.mubr.f32.gmra.mrb[0].mxu0 %v1160
        %v1329 = vpop.f32.mrb[0].mxu0
        %v1330 = vadd.f32 0.0, %v1329
        %v1331 = vpop.f32.mrb[0].mxu0
        %1332 = vmatprep.mubr.f32.mxu0 0.0
        %1333 = vmatmul.mubr.f32.gmra.mrb[0].mxu0 %v1163
        %v1334 = vpop.f32.mrb[0].mxu0
        %v1335 = vadd.f32 0.0, %v1334
        %v1336 = vpop.f32.mrb[0].mxu0
        %1337 = vmatprep.mubr.f32.mxu0 0.0
        %1338 = vmatmul.mubr.f32.gmra.mrb[0].mxu0 %v1166
        %v1339 = vpop.f32.mrb[0].mxu0
        %v1340 = vadd.f32 0.0, %v1339
        %v1341 = vpop.f32.mrb[0].mxu0
        %1342 = vmatprep.mubr.f32.mxu0 0.0
        %1343 = vmatmul.mubr.f32.gmra.mrb[0].mxu0 %v1169
        %v1344 = vpop.f32.mrb[0].mxu0
        %v1345 = vadd.f32 0.0, %v1344
        %v1346 = vpop.f32.mrb[0].mxu0
        %1347 = vmatprep.mubr.f32.mxu0 0.0
        %1348 = vmatmul.mubr.f32.gmra.mrb[0].mxu0 %v1172
        %v1349 = vpop.f32.mrb[0].mxu0
        %v1350 = vadd.f32 0.0, %v1349
        %v1351 = vpop.f32.mrb[0].mxu0
        %1352 = vmatprep.mubr.f32.mxu0 0.0
        %1353 = vmatmul.mubr.f32.gmra.mrb[0].mxu0 %v1175
        %v1354 = vpop.f32.mrb[0].mxu0
        %v1355 = vadd.f32 0.0, %v1354
        %v1356 = vpop.f32.mrb[0].mxu0
        %1357 = vmatprep.mubr.f32.mxu0 0.0
        %1358 = vmatmul.mubr.f32.gmra.mrb[0].mxu0 %v1178
        %v1359 = vpop.f32.mrb[0].mxu0
        %v1360 = vadd.f32 0.0, %v1359
        %v1361 = vpop.f32.mrb[0].mxu0
        %1362 = vmatprep.mubr.f32.mxu0 0.0
        %1363 = vmatmul.mubr.f32.gmra.mrb[0].mxu0 %v1181
        %v1364 = vpop.f32.mrb[0].mxu0
        %v1365 = vadd.f32 0.0, %v1364
        %v1366 = vpop.f32.mrb[0].mxu0
        %1367 = vmatprep.mubr.f32.mxu0 0.0
        %1368 = vmatmul.mubr.f32.gmra.mrb[0].mxu0 %v1184
        %v1369 = vpop.f32.mrb[0].mxu0
        %v1370 = vadd.f32 0.0, %v1369
        %v1371 = vpop.f32.mrb[0].mxu0
        %1372 = vmatprep.mubr.f32.mxu0 0.0
        %1373 = vmatmul.mubr.f32.gmra.mrb[0].mxu0 %v1187
        %v1374 = vpop.f32.mrb[0].mxu0
        %v1375 = vadd.f32 0.0, %v1374
        %v1376 = vpop.f32.mrb[0].mxu0
        %1377 = vmatprep.mubr.f32.mxu0 0.0
        %1378 = vmatmul.mubr.f32.gmra.mrb[0].mxu0 %v1190
        %v1379 = vpop.f32.mrb[0].mxu0
        %v1380 = vadd.f32 0.0, %v1379
        %v1381 = vpop.f32.mrb[0].mxu0
        %1382 = vmatprep.mubr.f32.mxu0 0.0
        %1383 = vmatmul.mubr.f32.gmra.mrb[0].mxu0 %v1193
        %v1384 = vpop.f32.mrb[0].mxu0
        %v1385 = vadd.f32 0.0, %v1384
        %v1386 = vpop.f32.mrb[0].mxu0
        %1387 = vmatprep.mubr.f32.mxu0 0.0
        %1388 = vmatmul.mubr.f32.gmra.mrb[0].mxu0 %v1196
        %v1389 = vpop.f32.mrb[0].mxu0
        %v1390 = vadd.f32 0.0, %v1389
        %v1391 = vpop.f32.mrb[0].mxu0
        %1392 = vmatprep.mubr.f32.mxu0 0.0
        %1393 = vmatmul.mubr.f32.gmra.mrb[0].mxu0 %v1199
        %v1394 = vpop.f32.mrb[0].mxu0
        %v1395 = vadd.f32 0.0, %v1394
        %v1396 = vpop.f32.mrb[0].mxu0
        %1397 = vmatprep.mubr.f32.mxu0 0.0
        %1398 = vmatmul.mubr.f32.gmra.mrb[0].mxu0 %v1202
        %v1399 = vpop.f32.mrb[0].mxu0
        %v1400 = vadd.f32 0.0, %v1399
        %v1401 = vpop.f32.mrb[0].mxu0
        %1402 = vmatprep.mubr.f32.mxu0 0.0
        %1403 = vmatmul.mubr.f32.gmra.mrb[0].mxu0 %v1205
        %v1404 = vpop.f32.mrb[0].mxu0
        %v1405 = vadd.f32 0.0, %v1404
        %v1406 = vpop.f32.mrb[0].mxu0
        %1407 = vmatprep.mubr.f32.mxu0 0.0
        %1408 = vmatmul.mubr.f32.gmra.mrb[0].mxu0 %v1208
        %v1409 = vpop.f32.mrb[0].mxu0
        %v1410 = vadd.f32 0.0, %v1409
        %v1411 = vpop.f32.mrb[0].mxu0
        %1412 = vmatprep.mubr.f32.mxu0 0.0
        %1413 = vmatmul.mubr.f32.gmra.mrb[0].mxu0 %v1211
        %v1414 = vpop.f32.mrb[0].mxu0
        %v1415 = vadd.f32 0.0, %v1414
        %v1416 = vpop.f32.mrb[0].mxu0
        %1417 = vmatprep.mubr.f32.mxu0 0.0
        %1418 = vmatmul.mubr.f32.gmra.mrb[0].mxu0 %v1214
        %v1419 = vpop.f32.mrb[0].mxu0
        %v1420 = vadd.f32 0.0, %v1419
        %v1421 = vpop.f32.mrb[0].mxu0
        %1422 = vmatprep.mubr.f32.mxu0 0.0
        %1423 = vmatmul.mubr.f32.gmra.mrb[0].mxu0 %v1217
        %v1424 = vpop.f32.mrb[0].mxu0
        %v1425 = vadd.f32 0.0, %v1424
        %v1426 = vpop.f32.mrb[0].mxu0
        %1427 = vmatprep.mubr.f32.mxu0 0.0
        %1428 = vmatmul.mubr.f32.gmra.mrb[0].mxu0 %v1220
        %v1429 = vpop.f32.mrb[0].mxu0
        %v1430 = vadd.f32 0.0, %v1429
        %v1431 = vpop.f32.mrb[0].mxu0
        %1432 = vmatprep.mubr.f32.mxu0 0.0
        %1433 = vmatmul.mubr.f32.gmra.mrb[0].mxu0 %v1223
        %v1434 = vpop.f32.mrb[0].mxu0
        %v1435 = vadd.f32 0.0, %v1434
        %v1436 = vpop.f32.mrb[0].mxu0
        %1437 = vmatprep.mubr.f32.mxu0 0.0
        %1438 = vmatmul.mubr.f32.gmra.mrb[0].mxu0 %v1226
        %v1439 = vpop.f32.mrb[0].mxu0
        %v1440 = vadd.f32 0.0, %v1439
        %v1441 = vpop.f32.mrb[0].mxu0
        %1442 = vmatprep.mubr.f32.mxu0 0.0
        %1443 = vmatmul.mubr.f32.gmra.mrb[0].mxu0 %v1229
        %v1444 = vpop.f32.mrb[0].mxu0
        %v1445 = vadd.f32 0.0, %v1444
        %v1446 = vpop.f32.mrb[0].mxu0
        %1447 = vmatprep.mubr.f32.mxu0 0.0
        %1448 = vmatmul.mubr.f32.gmra.mrb[0].mxu0 %v1232
        %v1449 = vpop.f32.mrb[0].mxu0
        %v1450 = vadd.f32 0.0, %v1449
        %v1451 = vpop.f32.mrb[0].mxu0
        %1452 = vmatprep.mubr.f32.mxu0 0.0
        %1453 = vmatmul.mubr.f32.gmra.mrb[0].mxu0 %v1235
        %v1454 = vpop.f32.mrb[0].mxu0
        %v1455 = vadd.f32 0.0, %v1454
        %v1456 = vpop.f32.mrb[0].mxu0
        %1457 = vmatprep.mubr.f32.mxu0 0.0
        %1458 = vmatmul.mubr.f32.gmra.mrb[0].mxu0 %v1238
        %v1459 = vpop.f32.mrb[0].mxu0
        %v1460 = vadd.f32 0.0, %v1459
        %v1461 = vpop.f32.mrb[0].mxu0
        %1462 = vmatprep.mubr.f32.mxu0 0.0
        %1463 = vmatmul.mubr.f32.gmra.mrb[0].mxu0 %v1241
        %v1464 = vpop.f32.mrb[0].mxu0
        %v1465 = vadd.f32 0.0, %v1464
        %v1466 = vpop.f32.mrb[0].mxu0
        %1467 = vdwg.mxu0
        %v1468 = vld [vmem:[%s1] sm:$0xff]
        %v1469 = vld [vmem:[%s1 + $0x8] sm:$0xff]
        %v1470 = vld [vmem:[%s1 + $0x10] sm:$0xff]
        %v1471 = vld [vmem:[%s1 + $0x18] sm:$0xff]
        %v1472 = vld [vmem:[%s1 + $0x20] sm:$0xff]
        %v1473 = vld [vmem:[%s1 + $0x28] sm:$0xff]
        %v1474 = vld [vmem:[%s1 + $0x30] sm:$0xff]
        %v1475 = vld [vmem:[%s1 + $0x38] sm:$0xff]
        %v1476 = vld [vmem:[%s1 + $0x40] sm:$0xff]
        %v1477 = vld [vmem:[%s1 + $0x48] sm:$0xff]
        %v1478 = vld [vmem:[%s1 + $0x50] sm:$0xff]
        %v1479 = vld [vmem:[%s1 + $0x58] sm:$0xff]
        %v1480 = vld [vmem:[%s1 + $0x60] sm:$0xff]
        %v1481 = vld [vmem:[%s1 + $0x68] sm:$0xff]
        %v1482 = vld [vmem:[%s1 + $0x70] sm:$0xff]
        %v1483 = vld [vmem:[%s1 + $0x78] sm:$0xff]
        %v1484 = vld [vmem:[%s1 + $0x80] sm:$0xff]
        %v1485 = vld [vmem:[%s1 + $0x88] sm:$0xff]
        %v1486 = vld [vmem:[%s1 + $0x90] sm:$0xff]
        %v1487 = vld [vmem:[%s1 + $0x98] sm:$0xff]
        %v1488 = vld [vmem:[%s1 + $0xa0] sm:$0xff]
        %v1489 = vld [vmem:[%s1 + $0xa8] sm:$0xff]
        %v1490 = vld [vmem:[%s1 + $0xb0] sm:$0xff]
        %v1491 = vld [vmem:[%s1 + $0xb8] sm:$0xff]
        %v1492 = vld [vmem:[%s1 + $0xc0] sm:$0xff]
        %v1493 = vld [vmem:[%s1 + $0xc8] sm:$0xff]
        %v1494 = vld [vmem:[%s1 + $0xd0] sm:$0xff]
        %v1495 = vld [vmem:[%s1 + $0xd8] sm:$0xff]
        %v1496 = vld [vmem:[%s1 + $0xe0] sm:$0xff]
        %v1497 = vld [vmem:[%s1 + $0xe8] sm:$0xff]
        %v1498 = vld [vmem:[%s1 + $0xf0] sm:$0xff]
        %v1499 = vld [vmem:[%s1 + $0xf8] sm:$0xff]
        %v1501 = vsel %vm1146, %v1468, 0
        %v1504 = vsel %vm1146, %v1469, 0
        %v1507 = vsel %vm1146, %v1470, 0
        %v1510 = vsel %vm1146, %v1471, 0
        %v1513 = vsel %vm1146, %v1472, 0
        %v1516 = vsel %vm1146, %v1473, 0
        %v1519 = vsel %vm1146, %v1474, 0
        %v1522 = vsel %vm1146, %v1475, 0
        %v1525 = vsel %vm1146, %v1476, 0
        %v1528 = vsel %vm1146, %v1477, 0
        %v1531 = vsel %vm1146, %v1478, 0
        %v1534 = vsel %vm1146, %v1479, 0
        %v1537 = vsel %vm1146, %v1480, 0
        %v1540 = vsel %vm1146, %v1481, 0
        %v1543 = vsel %vm1146, %v1482, 0
        %v1546 = vsel %vm1146, %v1483, 0
        %v1549 = vsel %vm1146, %v1484, 0
        %v1552 = vsel %vm1146, %v1485, 0
        %v1555 = vsel %vm1146, %v1486, 0
        %v1558 = vsel %vm1146, %v1487, 0
        %v1561 = vsel %vm1146, %v1488, 0
        %v1564 = vsel %vm1146, %v1489, 0
        %v1567 = vsel %vm1146, %v1490, 0
        %v1570 = vsel %vm1146, %v1491, 0
        %v1573 = vsel %vm1146, %v1492, 0
        %v1576 = vsel %vm1146, %v1493, 0
        %v1579 = vsel %vm1146, %v1494, 0
        %v1582 = vsel %vm1146, %v1495, 0
        %v1585 = vsel %vm1146, %v1496, 0
        %v1588 = vsel %vm1146, %v1497, 0
        %v1591 = vsel %vm1146, %v1498, 0
        %v1594 = vsel %vm1146, %v1499, 0
        %1596 = vmatprep.subr.mxu0 0.0
        %1597 = vmatpush1.msra.mxu0 %v1106
        %1598 = vmatprep.subr.mxu0 0.0
        %1599 = vmatpush1.msra.mxu0 %v1107
        %1600 = vmatprep.subr.mxu0 0.0
        %1601 = vmatpush1.msra.mxu0 %v1108
        %1602 = vmatprep.subr.mxu0 0.0
        %1603 = vmatpush1.msra.mxu0 %v1109
        %1604 = vmatprep.subr.mxu0 0.0
        %1605 = vmatpush1.msra.mxu0 %v1110
        %1606 = vmatprep.subr.mxu0 0.0
        %1607 = vmatpush1.msra.mxu0 %v1111
        %1608 = vmatprep.subr.mxu0 0.0
        %1609 = vmatpush1.msra.mxu0 %v1112
        %1610 = vmatprep.subr.mxu0 0.0
        %1611 = vmatpush1.msra.mxu0 %v1113
        %1612 = vmatprep.subr.mxu0 0.0
        %1613 = vmatpush1.msra.mxu0 0.0
        %1614 = vmatprep.subr.mxu0 0.0
        %1615 = vmatpush1.msra.mxu0 0.0
        %1616 = vmatprep.subr.mxu0 0.0
        %1617 = vmatpush1.msra.mxu0 0.0
        %1618 = vmatprep.subr.mxu0 0.0
        %1619 = vmatpush1.msra.mxu0 0.0
        %1620 = vmatprep.subr.mxu0 0.0
        %1621 = vmatpush1.msra.mxu0 0.0
        %1622 = vmatprep.subr.mxu0 0.0
        %1623 = vmatpush1.msra.mxu0 0.0
        %1624 = vmatprep.subr.mxu0 0.0
        %1625 = vmatpush1.msra.mxu0 0.0
        %1626 = vmatprep.subr.mxu0 0.0
        %1627 = vmatpush1.msra.mxu0 0.0
        %1628 = vmatprep.subr.mxu0 0.0
        %1629 = vmatpush1.msra.mxu0 0.0
        %1630 = vmatprep.subr.mxu0 0.0
        %1631 = vmatpush1.msra.mxu0 0.0
        %1632 = vmatprep.subr.mxu0 0.0
        %1633 = vmatpush1.msra.mxu0 0.0
        %1634 = vmatprep.subr.mxu0 0.0
        %1635 = vmatpush1.msra.mxu0 0.0
        %1636 = vmatprep.subr.mxu0 0.0
        %1637 = vmatpush1.msra.mxu0 0.0
        %1638 = vmatprep.subr.mxu0 0.0
        %1639 = vmatpush1.msra.mxu0 0.0
        %1640 = vmatprep.subr.mxu0 0.0
        %1641 = vmatpush1.msra.mxu0 0.0
        %1642 = vmatprep.subr.mxu0 0.0
        %1643 = vmatpush1.msra.mxu0 0.0
        %1644 = vmatprep.subr.mxu0 0.0
        %1645 = vmatpush1.msra.mxu0 0.0
        %1646 = vmatprep.subr.mxu0 0.0
        %1647 = vmatpush1.msra.mxu0 0.0
        %1648 = vmatprep.subr.mxu0 0.0
        %1649 = vmatpush1.msra.mxu0 0.0
        %1650 = vmatprep.subr.mxu0 0.0
        %1651 = vmatpush1.msra.mxu0 0.0
        %1652 = vmatprep.subr.mxu0 0.0
        %1653 = vmatpush1.msra.mxu0 0.0
        %1654 = vmatprep.subr.mxu0 0.0
        %1655 = vmatpush1.msra.mxu0 0.0
        %1656 = vmatprep.subr.mxu0 0.0
        %1657 = vmatpush1.msra.mxu0 0.0
        %1658 = vmatprep.subr.mxu0 0.0
        %1659 = vmatpush1.msra.mxu0 0.0
        %1660 = vmatprep.mubr.f32.mxu0 0.0
        %1661 = vmatmul.mubr.f32.gmra.mrb[0].mxu0 %v1501
        %v1662 = vpop.f32.mrb[0].mxu0
        %v1663 = vadd.f32 0.0, %v1662
        %v1664 = vpop.f32.mrb[0].mxu0
        %1665 = vmatprep.mubr.f32.mxu0 0.0
        %1666 = vmatmul.mubr.f32.gmra.mrb[0].mxu0 %v1504
        %v1667 = vpop.f32.mrb[0].mxu0
        %v1668 = vadd.f32 0.0, %v1667
        %v1669 = vpop.f32.mrb[0].mxu0
        %1670 = vmatprep.mubr.f32.mxu0 0.0
        %1671 = vmatmul.mubr.f32.gmra.mrb[0].mxu0 %v1507
        %v1672 = vpop.f32.mrb[0].mxu0
        %v1673 = vadd.f32 0.0, %v1672
        %v1674 = vpop.f32.mrb[0].mxu0
        %1675 = vmatprep.mubr.f32.mxu0 0.0
        %1676 = vmatmul.mubr.f32.gmra.mrb[0].mxu0 %v1510
        %v1677 = vpop.f32.mrb[0].mxu0
        %v1678 = vadd.f32 0.0, %v1677
        %v1679 = vpop.f32.mrb[0].mxu0
        %1680 = vmatprep.mubr.f32.mxu0 0.0
        %1681 = vmatmul.mubr.f32.gmra.mrb[0].mxu0 %v1513
        %v1682 = vpop.f32.mrb[0].mxu0
        %v1683 = vadd.f32 0.0, %v1682
        %v1684 = vpop.f32.mrb[0].mxu0
        %1685 = vmatprep.mubr.f32.mxu0 0.0
        %1686 = vmatmul.mubr.f32.gmra.mrb[0].mxu0 %v1516
        %v1687 = vpop.f32.mrb[0].mxu0
        %v1688 = vadd.f32 0.0, %v1687
        %v1689 = vpop.f32.mrb[0].mxu0
        %1690 = vmatprep.mubr.f32.mxu0 0.0
        %1691 = vmatmul.mubr.f32.gmra.mrb[0].mxu0 %v1519
        %v1692 = vpop.f32.mrb[0].mxu0
        %v1693 = vadd.f32 0.0, %v1692
        %v1694 = vpop.f32.mrb[0].mxu0
        %1695 = vmatprep.mubr.f32.mxu0 0.0
        %1696 = vmatmul.mubr.f32.gmra.mrb[0].mxu0 %v1522
        %v1697 = vpop.f32.mrb[0].mxu0
        %v1698 = vadd.f32 0.0, %v1697
        %v1699 = vpop.f32.mrb[0].mxu0
        %1700 = vmatprep.mubr.f32.mxu0 0.0
        %1701 = vmatmul.mubr.f32.gmra.mrb[0].mxu0 %v1525
        %v1702 = vpop.f32.mrb[0].mxu0
        %v1703 = vadd.f32 0.0, %v1702
        %v1704 = vpop.f32.mrb[0].mxu0
        %1705 = vmatprep.mubr.f32.mxu0 0.0
        %1706 = vmatmul.mubr.f32.gmra.mrb[0].mxu0 %v1528
        %v1707 = vpop.f32.mrb[0].mxu0
        %v1708 = vadd.f32 0.0, %v1707
        %v1709 = vpop.f32.mrb[0].mxu0
        %1710 = vmatprep.mubr.f32.mxu0 0.0
        %1711 = vmatmul.mubr.f32.gmra.mrb[0].mxu0 %v1531
        %v1712 = vpop.f32.mrb[0].mxu0
        %v1713 = vadd.f32 0.0, %v1712
        %v1714 = vpop.f32.mrb[0].mxu0
        %1715 = vmatprep.mubr.f32.mxu0 0.0
        %1716 = vmatmul.mubr.f32.gmra.mrb[0].mxu0 %v1534
        %v1717 = vpop.f32.mrb[0].mxu0
        %v1718 = vadd.f32 0.0, %v1717
        %v1719 = vpop.f32.mrb[0].mxu0
        %1720 = vmatprep.mubr.f32.mxu0 0.0
        %1721 = vmatmul.mubr.f32.gmra.mrb[0].mxu0 %v1537
        %v1722 = vpop.f32.mrb[0].mxu0
        %v1723 = vadd.f32 0.0, %v1722
        %v1724 = vpop.f32.mrb[0].mxu0
        %1725 = vmatprep.mubr.f32.mxu0 0.0
        %1726 = vmatmul.mubr.f32.gmra.mrb[0].mxu0 %v1540
        %v1727 = vpop.f32.mrb[0].mxu0
        %v1728 = vadd.f32 0.0, %v1727
        %v1729 = vpop.f32.mrb[0].mxu0
        %1730 = vmatprep.mubr.f32.mxu0 0.0
        %1731 = vmatmul.mubr.f32.gmra.mrb[0].mxu0 %v1543
        %v1732 = vpop.f32.mrb[0].mxu0
        %v1733 = vadd.f32 0.0, %v1732
        %v1734 = vpop.f32.mrb[0].mxu0
        %1735 = vmatprep.mubr.f32.mxu0 0.0
        %1736 = vmatmul.mubr.f32.gmra.mrb[0].mxu0 %v1546
        %v1737 = vpop.f32.mrb[0].mxu0
        %v1738 = vadd.f32 0.0, %v1737
        %v1739 = vpop.f32.mrb[0].mxu0
        %1740 = vmatprep.mubr.f32.mxu0 0.0
        %1741 = vmatmul.mubr.f32.gmra.mrb[0].mxu0 %v1549
        %v1742 = vpop.f32.mrb[0].mxu0
        %v1743 = vadd.f32 0.0, %v1742
        %v1744 = vpop.f32.mrb[0].mxu0
        %1745 = vmatprep.mubr.f32.mxu0 0.0
        %1746 = vmatmul.mubr.f32.gmra.mrb[0].mxu0 %v1552
        %v1747 = vpop.f32.mrb[0].mxu0
        %v1748 = vadd.f32 0.0, %v1747
        %v1749 = vpop.f32.mrb[0].mxu0
        %1750 = vmatprep.mubr.f32.mxu0 0.0
        %1751 = vmatmul.mubr.f32.gmra.mrb[0].mxu0 %v1555
        %v1752 = vpop.f32.mrb[0].mxu0
        %v1753 = vadd.f32 0.0, %v1752
        %v1754 = vpop.f32.mrb[0].mxu0
        %1755 = vmatprep.mubr.f32.mxu0 0.0
        %1756 = vmatmul.mubr.f32.gmra.mrb[0].mxu0 %v1558
        %v1757 = vpop.f32.mrb[0].mxu0
        %v1758 = vadd.f32 0.0, %v1757
        %v1759 = vpop.f32.mrb[0].mxu0
        %1760 = vmatprep.mubr.f32.mxu0 0.0
        %1761 = vmatmul.mubr.f32.gmra.mrb[0].mxu0 %v1561
        %v1762 = vpop.f32.mrb[0].mxu0
        %v1763 = vadd.f32 0.0, %v1762
        %v1764 = vpop.f32.mrb[0].mxu0
        %1765 = vmatprep.mubr.f32.mxu0 0.0
        %1766 = vmatmul.mubr.f32.gmra.mrb[0].mxu0 %v1564
        %v1767 = vpop.f32.mrb[0].mxu0
        %v1768 = vadd.f32 0.0, %v1767
        %v1769 = vpop.f32.mrb[0].mxu0
        %1770 = vmatprep.mubr.f32.mxu0 0.0
        %1771 = vmatmul.mubr.f32.gmra.mrb[0].mxu0 %v1567
        %v1772 = vpop.f32.mrb[0].mxu0
        %v1773 = vadd.f32 0.0, %v1772
        %v1774 = vpop.f32.mrb[0].mxu0
        %1775 = vmatprep.mubr.f32.mxu0 0.0
        %1776 = vmatmul.mubr.f32.gmra.mrb[0].mxu0 %v1570
        %v1777 = vpop.f32.mrb[0].mxu0
        %v1778 = vadd.f32 0.0, %v1777
        %v1779 = vpop.f32.mrb[0].mxu0
        %1780 = vmatprep.mubr.f32.mxu0 0.0
        %1781 = vmatmul.mubr.f32.gmra.mrb[0].mxu0 %v1573
        %v1782 = vpop.f32.mrb[0].mxu0
        %v1783 = vadd.f32 0.0, %v1782
        %v1784 = vpop.f32.mrb[0].mxu0
        %1785 = vmatprep.mubr.f32.mxu0 0.0
        %1786 = vmatmul.mubr.f32.gmra.mrb[0].mxu0 %v1576
        %v1787 = vpop.f32.mrb[0].mxu0
        %v1788 = vadd.f32 0.0, %v1787
        %v1789 = vpop.f32.mrb[0].mxu0
        %1790 = vmatprep.mubr.f32.mxu0 0.0
        %1791 = vmatmul.mubr.f32.gmra.mrb[0].mxu0 %v1579
        %v1792 = vpop.f32.mrb[0].mxu0
        %v1793 = vadd.f32 0.0, %v1792
        %v1794 = vpop.f32.mrb[0].mxu0
        %1795 = vmatprep.mubr.f32.mxu0 0.0
        %1796 = vmatmul.mubr.f32.gmra.mrb[0].mxu0 %v1582
        %v1797 = vpop.f32.mrb[0].mxu0
        %v1798 = vadd.f32 0.0, %v1797
        %v1799 = vpop.f32.mrb[0].mxu0
        %1800 = vmatprep.mubr.f32.mxu0 0.0
        %1801 = vmatmul.mubr.f32.gmra.mrb[0].mxu0 %v1585
        %v1802 = vpop.f32.mrb[0].mxu0
        %v1803 = vadd.f32 0.0, %v1802
        %v1804 = vpop.f32.mrb[0].mxu0
        %1805 = vmatprep.mubr.f32.mxu0 0.0
        %1806 = vmatmul.mubr.f32.gmra.mrb[0].mxu0 %v1588
        %v1807 = vpop.f32.mrb[0].mxu0
        %v1808 = vadd.f32 0.0, %v1807
        %v1809 = vpop.f32.mrb[0].mxu0
        %1810 = vmatprep.mubr.f32.mxu0 0.0
        %1811 = vmatmul.mubr.f32.gmra.mrb[0].mxu0 %v1591
        %v1812 = vpop.f32.mrb[0].mxu0
        %v1813 = vadd.f32 0.0, %v1812
        %v1814 = vpop.f32.mrb[0].mxu0
        %1815 = vmatprep.mubr.f32.mxu0 0.0
        %1816 = vmatmul.mubr.f32.gmra.mrb[0].mxu0 %v1594
        %v1817 = vpop.f32.mrb[0].mxu0
        %v1818 = vadd.f32 0.0, %v1817
        %v1819 = vpop.f32.mrb[0].mxu0
        %1820 = vdwg.mxu0
        %v1821 = vld [vmem:[%s4] sm:$0xff]
        %v1822 = vld [vmem:[%s4 + $0x8] sm:$0xff]
        %v1823 = vld [vmem:[%s4 + $0x10] sm:$0xff]
        %v1824 = vld [vmem:[%s4 + $0x18] sm:$0xff]
        %v1825 = vld [vmem:[%s4 + $0x20] sm:$0xff]
        %v1826 = vld [vmem:[%s4 + $0x28] sm:$0xff]
        %v1827 = vld [vmem:[%s4 + $0x30] sm:$0xff]
        %v1828 = vld [vmem:[%s4 + $0x38] sm:$0xff]
        %v1829 = vld [vmem:[%s4 + $0x40] sm:$0xff]
        %v1830 = vld [vmem:[%s4 + $0x48] sm:$0xff]
        %v1831 = vld [vmem:[%s4 + $0x50] sm:$0xff]
        %v1832 = vld [vmem:[%s4 + $0x58] sm:$0xff]
        %v1833 = vld [vmem:[%s4 + $0x60] sm:$0xff]
        %v1834 = vld [vmem:[%s4 + $0x68] sm:$0xff]
        %v1835 = vld [vmem:[%s4 + $0x70] sm:$0xff]
        %v1836 = vld [vmem:[%s4 + $0x78] sm:$0xff]
        %v1837 = vld [vmem:[%s4 + $0x80] sm:$0xff]
        %v1838 = vld [vmem:[%s4 + $0x88] sm:$0xff]
        %v1839 = vld [vmem:[%s4 + $0x90] sm:$0xff]
        %v1840 = vld [vmem:[%s4 + $0x98] sm:$0xff]
        %v1841 = vld [vmem:[%s4 + $0xa0] sm:$0xff]
        %v1842 = vld [vmem:[%s4 + $0xa8] sm:$0xff]
        %v1843 = vld [vmem:[%s4 + $0xb0] sm:$0xff]
        %v1844 = vld [vmem:[%s4 + $0xb8] sm:$0xff]
        %v1845 = vld [vmem:[%s4 + $0xc0] sm:$0xff]
        %v1846 = vld [vmem:[%s4 + $0xc8] sm:$0xff]
        %v1847 = vld [vmem:[%s4 + $0xd0] sm:$0xff]
        %v1848 = vld [vmem:[%s4 + $0xd8] sm:$0xff]
        %v1849 = vld [vmem:[%s4 + $0xe0] sm:$0xff]
        %v1850 = vld [vmem:[%s4 + $0xe8] sm:$0xff]
        %v1851 = vld [vmem:[%s4 + $0xf0] sm:$0xff]
        %v1852 = vld [vmem:[%s4 + $0xf8] sm:$0xff]
        %v1853 = vld [vmem:[%s690] sm:$0xff]
        %v1854 = vld [vmem:[%s690 + $0x8] sm:$0xff]
        %v1855 = vld [vmem:[%s690 + $0x10] sm:$0xff]
        %v1856 = vld [vmem:[%s690 + $0x18] sm:$0xff]
        %v1857 = vld [vmem:[%s690 + $0x20] sm:$0xff]
        %v1858 = vld [vmem:[%s690 + $0x28] sm:$0xff]
        %v1859 = vld [vmem:[%s690 + $0x30] sm:$0xff]
        %v1860 = vld [vmem:[%s690 + $0x38] sm:$0xff]
        %v1861 = vld [vmem:[%s690 + $0x40] sm:$0xff]
        %v1862 = vld [vmem:[%s690 + $0x48] sm:$0xff]
        %v1863 = vld [vmem:[%s690 + $0x50] sm:$0xff]
        %v1864 = vld [vmem:[%s690 + $0x58] sm:$0xff]
        %v1865 = vld [vmem:[%s690 + $0x60] sm:$0xff]
        %v1866 = vld [vmem:[%s690 + $0x68] sm:$0xff]
        %v1867 = vld [vmem:[%s690 + $0x70] sm:$0xff]
        %v1868 = vld [vmem:[%s690 + $0x78] sm:$0xff]
        %v1869 = vld [vmem:[%s690 + $0x80] sm:$0xff]
        %v1870 = vld [vmem:[%s690 + $0x88] sm:$0xff]
        %v1871 = vld [vmem:[%s690 + $0x90] sm:$0xff]
        %v1872 = vld [vmem:[%s690 + $0x98] sm:$0xff]
        %v1873 = vld [vmem:[%s690 + $0xa0] sm:$0xff]
        %v1874 = vld [vmem:[%s690 + $0xa8] sm:$0xff]
        %v1875 = vld [vmem:[%s690 + $0xb0] sm:$0xff]
        %v1876 = vld [vmem:[%s690 + $0xb8] sm:$0xff]
        %v1877 = vld [vmem:[%s690 + $0xc0] sm:$0xff]
        %v1878 = vld [vmem:[%s690 + $0xc8] sm:$0xff]
        %v1879 = vld [vmem:[%s690 + $0xd0] sm:$0xff]
        %v1880 = vld [vmem:[%s690 + $0xd8] sm:$0xff]
        %v1881 = vld [vmem:[%s690 + $0xe0] sm:$0xff]
        %v1882 = vld [vmem:[%s690 + $0xe8] sm:$0xff]
        %v1883 = vld [vmem:[%s690 + $0xf0] sm:$0xff]
        %v1884 = vld [vmem:[%s690 + $0xf8] sm:$0xff]
        %v1885 = vld [vmem:[%s690 + $0x100] sm:$0xff]
        %v1886 = vld [vmem:[%s690 + $0x108] sm:$0xff]
        %v1887 = vld [vmem:[%s690 + $0x110] sm:$0xff]
        %v1888 = vld [vmem:[%s690 + $0x118] sm:$0xff]
        %v1889 = vld [vmem:[%s690 + $0x120] sm:$0xff]
        %v1890 = vld [vmem:[%s690 + $0x128] sm:$0xff]
        %v1891 = vld [vmem:[%s690 + $0x130] sm:$0xff]
        %v1892 = vld [vmem:[%s690 + $0x138] sm:$0xff]
        %v1893 = vld [vmem:[%s690 + $0x140] sm:$0xff]
        %v1894 = vld [vmem:[%s690 + $0x148] sm:$0xff]
        %v1895 = vld [vmem:[%s690 + $0x150] sm:$0xff]
        %v1896 = vld [vmem:[%s690 + $0x158] sm:$0xff]
        %v1897 = vld [vmem:[%s690 + $0x160] sm:$0xff]
        %v1898 = vld [vmem:[%s690 + $0x168] sm:$0xff]
        %v1899 = vld [vmem:[%s690 + $0x170] sm:$0xff]
        %v1900 = vld [vmem:[%s690 + $0x178] sm:$0xff]
        %v1901 = vld [vmem:[%s693] sm:$0x1]
        %v1903 = vlaneseq
        %v1904 = vshrl.u32 %v1903, 7
        %v1905 = vsub.s32 0, %v1904
        %v1906 = vrot.slane %v1901, %v1905
        %1908 = vmatprep.subr.mxu0 0.0
        %1909 = vmatpush1.msra.mxu0 %v1853
        %1910 = vmatprep.subr.mxu0 0.0
        %1911 = vmatpush1.msra.mxu0 %v1854
        %1912 = vmatprep.subr.mxu0 0.0
        %1913 = vmatpush1.msra.mxu0 %v1855
        %1914 = vmatprep.subr.mxu0 0.0
        %1915 = vmatpush1.msra.mxu0 %v1856
        %1916 = vmatprep.subr.mxu0 0.0
        %1917 = vmatpush1.msra.mxu0 %v1857
        %1918 = vmatprep.subr.mxu0 0.0
        %1919 = vmatpush1.msra.mxu0 %v1858
        %1920 = vmatprep.subr.mxu0 0.0
        %1921 = vmatpush1.msra.mxu0 %v1859
        %1922 = vmatprep.subr.mxu0 0.0
        %1923 = vmatpush1.msra.mxu0 %v1860
        %1924 = vmatprep.subr.mxu0 0.0
        %1925 = vmatpush1.msra.mxu0 %v1861
        %1926 = vmatprep.subr.mxu0 0.0
        %1927 = vmatpush1.msra.mxu0 %v1862
        %1928 = vmatprep.subr.mxu0 0.0
        %1929 = vmatpush1.msra.mxu0 %v1863
        %1930 = vmatprep.subr.mxu0 0.0
        %1931 = vmatpush1.msra.mxu0 %v1864
        %1932 = vmatprep.subr.mxu0 0.0
        %1933 = vmatpush1.msra.mxu0 %v1865
        %1934 = vmatprep.subr.mxu0 0.0
        %1935 = vmatpush1.msra.mxu0 %v1866
        %1936 = vmatprep.subr.mxu0 0.0
        %1937 = vmatpush1.msra.mxu0 %v1867
        %1938 = vmatprep.subr.mxu0 0.0
        %1939 = vmatpush1.msra.mxu0 %v1868
        %1940 = vmatprep.subr.mxu0 0.0
        %1941 = vmatpush1.msra.mxu0 %v1869
        %1942 = vmatprep.subr.mxu0 0.0
        %1943 = vmatpush1.msra.mxu0 %v1870
        %1944 = vmatprep.subr.mxu0 0.0
        %1945 = vmatpush1.msra.mxu0 %v1871
        %1946 = vmatprep.subr.mxu0 0.0
        %1947 = vmatpush1.msra.mxu0 %v1872
        %1948 = vmatprep.subr.mxu0 0.0
        %1949 = vmatpush1.msra.mxu0 %v1873
        %1950 = vmatprep.subr.mxu0 0.0
        %1951 = vmatpush1.msra.mxu0 %v1874
        %1952 = vmatprep.subr.mxu0 0.0
        %1953 = vmatpush1.msra.mxu0 %v1875
        %1954 = vmatprep.subr.mxu0 0.0
        %1955 = vmatpush1.msra.mxu0 %v1876
        %1956 = vmatprep.subr.mxu0 0.0
        %1957 = vmatpush1.msra.mxu0 %v1877
        %1958 = vmatprep.subr.mxu0 0.0
        %1959 = vmatpush1.msra.mxu0 %v1878
        %1960 = vmatprep.subr.mxu0 0.0
        %1961 = vmatpush1.msra.mxu0 %v1879
        %1962 = vmatprep.subr.mxu0 0.0
        %1963 = vmatpush1.msra.mxu0 %v1880
        %1964 = vmatprep.subr.mxu0 0.0
        %1965 = vmatpush1.msra.mxu0 %v1881
        %1966 = vmatprep.subr.mxu0 0.0
        %1967 = vmatpush1.msra.mxu0 %v1882
        %1968 = vmatprep.subr.mxu0 0.0
        %1969 = vmatpush1.msra.mxu0 %v1883
        %1970 = vmatprep.subr.mxu0 0.0
        %1971 = vmatpush1.msra.mxu0 %v1884
        %1972 = vmatprep.mubr.f32.mxu0 %v1663
        %1973 = vmatmul.mubr.f32.gmra.mrb[0].mxu0 %v1310
        %v1974 = vpop.f32.mrb[0].mxu0
        %v1975 = vadd.f32 %v1906, %v1974
        %v1976 = vpop.f32.mrb[0].mxu0
        %1977 = vmatprep.mubr.f32.mxu0 %v1668
        %1978 = vmatmul.mubr.f32.gmra.mrb[0].mxu0 %v1315
        %v1979 = vpop.f32.mrb[0].mxu0
        %v1980 = vadd.f32 %v1906, %v1979
        %v1981 = vpop.f32.mrb[0].mxu0
        %1982 = vmatprep.mubr.f32.mxu0 %v1673
        %1983 = vmatmul.mubr.f32.gmra.mrb[0].mxu0 %v1320
        %v1984 = vpop.f32.mrb[0].mxu0
        %v1985 = vadd.f32 %v1906, %v1984
        %v1986 = vpop.f32.mrb[0].mxu0
        %1987 = vmatprep.mubr.f32.mxu0 %v1678
        %1988 = vmatmul.mubr.f32.gmra.mrb[0].mxu0 %v1325
        %v1989 = vpop.f32.mrb[0].mxu0
        %v1990 = vadd.f32 %v1906, %v1989
        %v1991 = vpop.f32.mrb[0].mxu0
        %1992 = vmatprep.mubr.f32.mxu0 %v1683
        %1993 = vmatmul.mubr.f32.gmra.mrb[0].mxu0 %v1330
        %v1994 = vpop.f32.mrb[0].mxu0
        %v1995 = vadd.f32 %v1906, %v1994
        %v1996 = vpop.f32.mrb[0].mxu0
        %1997 = vmatprep.mubr.f32.mxu0 %v1688
        %1998 = vmatmul.mubr.f32.gmra.mrb[0].mxu0 %v1335
        %v1999 = vpop.f32.mrb[0].mxu0
        %v2000 = vadd.f32 %v1906, %v1999
        %v2001 = vpop.f32.mrb[0].mxu0
        %2002 = vmatprep.mubr.f32.mxu0 %v1693
        %2003 = vmatmul.mubr.f32.gmra.mrb[0].mxu0 %v1340
        %v2004 = vpop.f32.mrb[0].mxu0
        %v2005 = vadd.f32 %v1906, %v2004
        %v2006 = vpop.f32.mrb[0].mxu0
        %2007 = vmatprep.mubr.f32.mxu0 %v1698
        %2008 = vmatmul.mubr.f32.gmra.mrb[0].mxu0 %v1345
        %v2009 = vpop.f32.mrb[0].mxu0
        %v2010 = vadd.f32 %v1906, %v2009
        %v2011 = vpop.f32.mrb[0].mxu0
        %2012 = vmatprep.mubr.f32.mxu0 %v1703
        %2013 = vmatmul.mubr.f32.gmra.mrb[0].mxu0 %v1350
        %v2014 = vpop.f32.mrb[0].mxu0
        %v2015 = vadd.f32 %v1906, %v2014
        %v2016 = vpop.f32.mrb[0].mxu0
        %2017 = vmatprep.mubr.f32.mxu0 %v1708
        %2018 = vmatmul.mubr.f32.gmra.mrb[0].mxu0 %v1355
        %v2019 = vpop.f32.mrb[0].mxu0
        %v2020 = vadd.f32 %v1906, %v2019
        %v2021 = vpop.f32.mrb[0].mxu0
        %2022 = vmatprep.mubr.f32.mxu0 %v1713
        %2023 = vmatmul.mubr.f32.gmra.mrb[0].mxu0 %v1360
        %v2024 = vpop.f32.mrb[0].mxu0
        %v2025 = vadd.f32 %v1906, %v2024
        %v2026 = vpop.f32.mrb[0].mxu0
        %2027 = vmatprep.mubr.f32.mxu0 %v1718
        %2028 = vmatmul.mubr.f32.gmra.mrb[0].mxu0 %v1365
        %v2029 = vpop.f32.mrb[0].mxu0
        %v2030 = vadd.f32 %v1906, %v2029
        %v2031 = vpop.f32.mrb[0].mxu0
        %2032 = vmatprep.mubr.f32.mxu0 %v1723
        %2033 = vmatmul.mubr.f32.gmra.mrb[0].mxu0 %v1370
        %v2034 = vpop.f32.mrb[0].mxu0
        %v2035 = vadd.f32 %v1906, %v2034
        %v2036 = vpop.f32.mrb[0].mxu0
        %2037 = vmatprep.mubr.f32.mxu0 %v1728
        %2038 = vmatmul.mubr.f32.gmra.mrb[0].mxu0 %v1375
        %v2039 = vpop.f32.mrb[0].mxu0
        %v2040 = vadd.f32 %v1906, %v2039
        %v2041 = vpop.f32.mrb[0].mxu0
        %2042 = vmatprep.mubr.f32.mxu0 %v1733
        %2043 = vmatmul.mubr.f32.gmra.mrb[0].mxu0 %v1380
        %v2044 = vpop.f32.mrb[0].mxu0
        %v2045 = vadd.f32 %v1906, %v2044
        %v2046 = vpop.f32.mrb[0].mxu0
        %2047 = vmatprep.mubr.f32.mxu0 %v1738
        %2048 = vmatmul.mubr.f32.gmra.mrb[0].mxu0 %v1385
        %v2049 = vpop.f32.mrb[0].mxu0
        %v2050 = vadd.f32 %v1906, %v2049
        %v2051 = vpop.f32.mrb[0].mxu0
        %2052 = vmatprep.mubr.f32.mxu0 %v1743
        %2053 = vmatmul.mubr.f32.gmra.mrb[0].mxu0 %v1390
        %v2054 = vpop.f32.mrb[0].mxu0
        %v2055 = vadd.f32 %v1906, %v2054
        %v2056 = vpop.f32.mrb[0].mxu0
        %2057 = vmatprep.mubr.f32.mxu0 %v1748
        %2058 = vmatmul.mubr.f32.gmra.mrb[0].mxu0 %v1395
        %v2059 = vpop.f32.mrb[0].mxu0
        %v2060 = vadd.f32 %v1906, %v2059
        %v2061 = vpop.f32.mrb[0].mxu0
        %2062 = vmatprep.mubr.f32.mxu0 %v1753
        %2063 = vmatmul.mubr.f32.gmra.mrb[0].mxu0 %v1400
        %v2064 = vpop.f32.mrb[0].mxu0
        %v2065 = vadd.f32 %v1906, %v2064
        %v2066 = vpop.f32.mrb[0].mxu0
        %2067 = vmatprep.mubr.f32.mxu0 %v1758
        %2068 = vmatmul.mubr.f32.gmra.mrb[0].mxu0 %v1405
        %v2069 = vpop.f32.mrb[0].mxu0
        %v2070 = vadd.f32 %v1906, %v2069
        %v2071 = vpop.f32.mrb[0].mxu0
        %2072 = vmatprep.mubr.f32.mxu0 %v1763
        %2073 = vmatmul.mubr.f32.gmra.mrb[0].mxu0 %v1410
        %v2074 = vpop.f32.mrb[0].mxu0
        %v2075 = vadd.f32 %v1906, %v2074
        %v2076 = vpop.f32.mrb[0].mxu0
        %2077 = vmatprep.mubr.f32.mxu0 %v1768
        %2078 = vmatmul.mubr.f32.gmra.mrb[0].mxu0 %v1415
        %v2079 = vpop.f32.mrb[0].mxu0
        %v2080 = vadd.f32 %v1906, %v2079
        %v2081 = vpop.f32.mrb[0].mxu0
        %2082 = vmatprep.mubr.f32.mxu0 %v1773
        %2083 = vmatmul.mubr.f32.gmra.mrb[0].mxu0 %v1420
        %v2084 = vpop.f32.mrb[0].mxu0
        %v2085 = vadd.f32 %v1906, %v2084
        %v2086 = vpop.f32.mrb[0].mxu0
        %2087 = vmatprep.mubr.f32.mxu0 %v1778
        %2088 = vmatmul.mubr.f32.gmra.mrb[0].mxu0 %v1425
        %v2089 = vpop.f32.mrb[0].mxu0
        %v2090 = vadd.f32 %v1906, %v2089
        %v2091 = vpop.f32.mrb[0].mxu0
        %2092 = vmatprep.mubr.f32.mxu0 %v1783
        %2093 = vmatmul.mubr.f32.gmra.mrb[0].mxu0 %v1430
        %v2094 = vpop.f32.mrb[0].mxu0
        %v2095 = vadd.f32 %v1906, %v2094
        %v2096 = vpop.f32.mrb[0].mxu0
        %2097 = vmatprep.mubr.f32.mxu0 %v1788
        %2098 = vmatmul.mubr.f32.gmra.mrb[0].mxu0 %v1435
        %v2099 = vpop.f32.mrb[0].mxu0
        %v2100 = vadd.f32 %v1906, %v2099
        %v2101 = vpop.f32.mrb[0].mxu0
        %2102 = vmatprep.mubr.f32.mxu0 %v1793
        %2103 = vmatmul.mubr.f32.gmra.mrb[0].mxu0 %v1440
        %v2104 = vpop.f32.mrb[0].mxu0
        %v2105 = vadd.f32 %v1906, %v2104
        %v2106 = vpop.f32.mrb[0].mxu0
        %2107 = vmatprep.mubr.f32.mxu0 %v1798
        %2108 = vmatmul.mubr.f32.gmra.mrb[0].mxu0 %v1445
        %v2109 = vpop.f32.mrb[0].mxu0
        %v2110 = vadd.f32 %v1906, %v2109
        %v2111 = vpop.f32.mrb[0].mxu0
        %2112 = vmatprep.mubr.f32.mxu0 %v1803
        %2113 = vmatmul.mubr.f32.gmra.mrb[0].mxu0 %v1450
        %v2114 = vpop.f32.mrb[0].mxu0
        %v2115 = vadd.f32 %v1906, %v2114
        %v2116 = vpop.f32.mrb[0].mxu0
        %2117 = vmatprep.mubr.f32.mxu0 %v1808
        %2118 = vmatmul.mubr.f32.gmra.mrb[0].mxu0 %v1455
        %v2119 = vpop.f32.mrb[0].mxu0
        %v2120 = vadd.f32 %v1906, %v2119
        %v2121 = vpop.f32.mrb[0].mxu0
        %2122 = vmatprep.mubr.f32.mxu0 %v1813
        %2123 = vmatmul.mubr.f32.gmra.mrb[0].mxu0 %v1460
        %v2124 = vpop.f32.mrb[0].mxu0
        %v2125 = vadd.f32 %v1906, %v2124
        %v2126 = vpop.f32.mrb[0].mxu0
        %2127 = vmatprep.mubr.f32.mxu0 %v1818
        %2128 = vmatmul.mubr.f32.gmra.mrb[0].mxu0 %v1465
        %v2129 = vpop.f32.mrb[0].mxu0
        %v2130 = vadd.f32 %v1906, %v2129
        %v2131 = vpop.f32.mrb[0].mxu0
        %2132 = vdwg.mxu0
        %2133 = vmatprep.subr.mxu0 0.0
        %2134 = vmatpush1.msra.mxu0 %v1885
        %2135 = vmatprep.subr.mxu0 0.0
        %2136 = vmatpush1.msra.mxu0 %v1886
        %2137 = vmatprep.subr.mxu0 0.0
        %2138 = vmatpush1.msra.mxu0 %v1887
        %2139 = vmatprep.subr.mxu0 0.0
        %2140 = vmatpush1.msra.mxu0 %v1888
        %2141 = vmatprep.subr.mxu0 0.0
        %2142 = vmatpush1.msra.mxu0 %v1889
        %2143 = vmatprep.subr.mxu0 0.0
        %2144 = vmatpush1.msra.mxu0 %v1890
        %2145 = vmatprep.subr.mxu0 0.0
        %2146 = vmatpush1.msra.mxu0 %v1891
        %2147 = vmatprep.subr.mxu0 0.0
        %2148 = vmatpush1.msra.mxu0 %v1892
        %2149 = vmatprep.subr.mxu0 0.0
        %2150 = vmatpush1.msra.mxu0 %v1893
        %2151 = vmatprep.subr.mxu0 0.0
        %2152 = vmatpush1.msra.mxu0 %v1894
        %2153 = vmatprep.subr.mxu0 0.0
        %2154 = vmatpush1.msra.mxu0 %v1895
        %2155 = vmatprep.subr.mxu0 0.0
        %2156 = vmatpush1.msra.mxu0 %v1896
        %2157 = vmatprep.subr.mxu0 0.0
        %2158 = vmatpush1.msra.mxu0 %v1897
        %2159 = vmatprep.subr.mxu0 0.0
        %2160 = vmatpush1.msra.mxu0 %v1898
        %2161 = vmatprep.subr.mxu0 0.0
        %2162 = vmatpush1.msra.mxu0 %v1899
        %2163 = vmatprep.subr.mxu0 0.0
        %2164 = vmatpush1.msra.mxu0 %v1900
        %2165 = vmatprep.subr.mxu0 0.0
        %2166 = vmatpush1.msra.mxu0 0.0
        %2167 = vmatprep.subr.mxu0 0.0
        %2168 = vmatpush1.msra.mxu0 0.0
        %2169 = vmatprep.subr.mxu0 0.0
        %2170 = vmatpush1.msra.mxu0 0.0
        %2171 = vmatprep.subr.mxu0 0.0
        %2172 = vmatpush1.msra.mxu0 0.0
        %2173 = vmatprep.subr.mxu0 0.0
        %2174 = vmatpush1.msra.mxu0 0.0
        %2175 = vmatprep.subr.mxu0 0.0
        %2176 = vmatpush1.msra.mxu0 0.0
        %2177 = vmatprep.subr.mxu0 0.0
        %2178 = vmatpush1.msra.mxu0 0.0
        %2179 = vmatprep.subr.mxu0 0.0
        %2180 = vmatpush1.msra.mxu0 0.0
        %2181 = vmatprep.subr.mxu0 0.0
        %2182 = vmatpush1.msra.mxu0 0.0
        %2183 = vmatprep.subr.mxu0 0.0
        %2184 = vmatpush1.msra.mxu0 0.0
        %2185 = vmatprep.subr.mxu0 0.0
        %2186 = vmatpush1.msra.mxu0 0.0
        %2187 = vmatprep.subr.mxu0 0.0
        %2188 = vmatpush1.msra.mxu0 0.0
        %2189 = vmatprep.subr.mxu0 0.0
        %2190 = vmatpush1.msra.mxu0 0.0
        %2191 = vmatprep.subr.mxu0 0.0
        %2192 = vmatpush1.msra.mxu0 0.0
        %2193 = vmatprep.subr.mxu0 0.0
        %2194 = vmatpush1.msra.mxu0 0.0
        %2195 = vmatprep.subr.mxu0 0.0
        %2196 = vmatpush1.msra.mxu0 0.0
        %2197 = vmatprep.mubr.f32.mxu0 0.0
        %2198 = vmatmul.mubr.f32.gmra.mrb[0].mxu0 %v1821
        %v2199 = vpop.f32.mrb[0].mxu0
        %v2200 = vadd.f32 %v1975, %v2199
        %v2201 = vpop.f32.mrb[0].mxu0
        %2202 = vmatprep.mubr.f32.mxu0 0.0
        %2203 = vmatmul.mubr.f32.gmra.mrb[0].mxu0 %v1822
        %v2204 = vpop.f32.mrb[0].mxu0
        %v2205 = vadd.f32 %v1980, %v2204
        %v2206 = vpop.f32.mrb[0].mxu0
        %2207 = vmatprep.mubr.f32.mxu0 0.0
        %2208 = vmatmul.mubr.f32.gmra.mrb[0].mxu0 %v1823
        %v2209 = vpop.f32.mrb[0].mxu0
        %v2210 = vadd.f32 %v1985, %v2209
        %v2211 = vpop.f32.mrb[0].mxu0
        %2212 = vmatprep.mubr.f32.mxu0 0.0
        %2213 = vmatmul.mubr.f32.gmra.mrb[0].mxu0 %v1824
        %v2214 = vpop.f32.mrb[0].mxu0
        %v2215 = vadd.f32 %v1990, %v2214
        %v2216 = vpop.f32.mrb[0].mxu0
        %2217 = vmatprep.mubr.f32.mxu0 0.0
        %2218 = vmatmul.mubr.f32.gmra.mrb[0].mxu0 %v1825
        %v2219 = vpop.f32.mrb[0].mxu0
        %v2220 = vadd.f32 %v1995, %v2219
        %v2221 = vpop.f32.mrb[0].mxu0
        %2222 = vmatprep.mubr.f32.mxu0 0.0
        %2223 = vmatmul.mubr.f32.gmra.mrb[0].mxu0 %v1826
        %v2224 = vpop.f32.mrb[0].mxu0
        %v2225 = vadd.f32 %v2000, %v2224
        %v2226 = vpop.f32.mrb[0].mxu0
        %2227 = vmatprep.mubr.f32.mxu0 0.0
        %2228 = vmatmul.mubr.f32.gmra.mrb[0].mxu0 %v1827
        %v2229 = vpop.f32.mrb[0].mxu0
        %v2230 = vadd.f32 %v2005, %v2229
        %v2231 = vpop.f32.mrb[0].mxu0
        %2232 = vmatprep.mubr.f32.mxu0 0.0
        %2233 = vmatmul.mubr.f32.gmra.mrb[0].mxu0 %v1828
        %v2234 = vpop.f32.mrb[0].mxu0
        %v2235 = vadd.f32 %v2010, %v2234
        %v2236 = vpop.f32.mrb[0].mxu0
        %2237 = vmatprep.mubr.f32.mxu0 0.0
        %2238 = vmatmul.mubr.f32.gmra.mrb[0].mxu0 %v1829
        %v2239 = vpop.f32.mrb[0].mxu0
        %v2240 = vadd.f32 %v2015, %v2239
        %v2241 = vpop.f32.mrb[0].mxu0
        %2242 = vmatprep.mubr.f32.mxu0 0.0
        %2243 = vmatmul.mubr.f32.gmra.mrb[0].mxu0 %v1830
        %v2244 = vpop.f32.mrb[0].mxu0
        %v2245 = vadd.f32 %v2020, %v2244
        %v2246 = vpop.f32.mrb[0].mxu0
        %2247 = vmatprep.mubr.f32.mxu0 0.0
        %2248 = vmatmul.mubr.f32.gmra.mrb[0].mxu0 %v1831
        %v2249 = vpop.f32.mrb[0].mxu0
        %v2250 = vadd.f32 %v2025, %v2249
        %v2251 = vpop.f32.mrb[0].mxu0
        %2252 = vmatprep.mubr.f32.mxu0 0.0
        %2253 = vmatmul.mubr.f32.gmra.mrb[0].mxu0 %v1832
        %v2254 = vpop.f32.mrb[0].mxu0
        %v2255 = vadd.f32 %v2030, %v2254
        %v2256 = vpop.f32.mrb[0].mxu0
        %2257 = vmatprep.mubr.f32.mxu0 0.0
        %2258 = vmatmul.mubr.f32.gmra.mrb[0].mxu0 %v1833
        %v2259 = vpop.f32.mrb[0].mxu0
        %v2260 = vadd.f32 %v2035, %v2259
        %v2261 = vpop.f32.mrb[0].mxu0
        %2262 = vmatprep.mubr.f32.mxu0 0.0
        %2263 = vmatmul.mubr.f32.gmra.mrb[0].mxu0 %v1834
        %v2264 = vpop.f32.mrb[0].mxu0
        %v2265 = vadd.f32 %v2040, %v2264
        %v2266 = vpop.f32.mrb[0].mxu0
        %2267 = vmatprep.mubr.f32.mxu0 0.0
        %2268 = vmatmul.mubr.f32.gmra.mrb[0].mxu0 %v1835
        %v2269 = vpop.f32.mrb[0].mxu0
        %v2270 = vadd.f32 %v2045, %v2269
        %v2271 = vpop.f32.mrb[0].mxu0
        %2272 = vmatprep.mubr.f32.mxu0 0.0
        %2273 = vmatmul.mubr.f32.gmra.mrb[0].mxu0 %v1836
        %v2274 = vpop.f32.mrb[0].mxu0
        %v2275 = vadd.f32 %v2050, %v2274
        %v2276 = vpop.f32.mrb[0].mxu0
        %2277 = vmatprep.mubr.f32.mxu0 0.0
        %2278 = vmatmul.mubr.f32.gmra.mrb[0].mxu0 %v1837
        %v2279 = vpop.f32.mrb[0].mxu0
        %v2280 = vadd.f32 %v2055, %v2279
        %v2281 = vpop.f32.mrb[0].mxu0
        %2282 = vmatprep.mubr.f32.mxu0 0.0
        %2283 = vmatmul.mubr.f32.gmra.mrb[0].mxu0 %v1838
        %v2284 = vpop.f32.mrb[0].mxu0
        %v2285 = vadd.f32 %v2060, %v2284
        %v2286 = vpop.f32.mrb[0].mxu0
        %2287 = vmatprep.mubr.f32.mxu0 0.0
        %2288 = vmatmul.mubr.f32.gmra.mrb[0].mxu0 %v1839
        %v2289 = vpop.f32.mrb[0].mxu0
        %v2290 = vadd.f32 %v2065, %v2289
        %v2291 = vpop.f32.mrb[0].mxu0
        %2292 = vmatprep.mubr.f32.mxu0 0.0
        %2293 = vmatmul.mubr.f32.gmra.mrb[0].mxu0 %v1840
        %v2294 = vpop.f32.mrb[0].mxu0
        %v2295 = vadd.f32 %v2070, %v2294
        %v2296 = vpop.f32.mrb[0].mxu0
        %2297 = vmatprep.mubr.f32.mxu0 0.0
        %2298 = vmatmul.mubr.f32.gmra.mrb[0].mxu0 %v1841
        %v2299 = vpop.f32.mrb[0].mxu0
        %v2300 = vadd.f32 %v2075, %v2299
        %v2301 = vpop.f32.mrb[0].mxu0
        %2302 = vmatprep.mubr.f32.mxu0 0.0
        %2303 = vmatmul.mubr.f32.gmra.mrb[0].mxu0 %v1842
        %v2304 = vpop.f32.mrb[0].mxu0
        %v2305 = vadd.f32 %v2080, %v2304
        %v2306 = vpop.f32.mrb[0].mxu0
        %2307 = vmatprep.mubr.f32.mxu0 0.0
        %2308 = vmatmul.mubr.f32.gmra.mrb[0].mxu0 %v1843
        %v2309 = vpop.f32.mrb[0].mxu0
        %v2310 = vadd.f32 %v2085, %v2309
        %v2311 = vpop.f32.mrb[0].mxu0
        %2312 = vmatprep.mubr.f32.mxu0 0.0
        %2313 = vmatmul.mubr.f32.gmra.mrb[0].mxu0 %v1844
        %v2314 = vpop.f32.mrb[0].mxu0
        %v2315 = vadd.f32 %v2090, %v2314
        %v2316 = vpop.f32.mrb[0].mxu0
        %2317 = vmatprep.mubr.f32.mxu0 0.0
        %2318 = vmatmul.mubr.f32.gmra.mrb[0].mxu0 %v1845
        %v2319 = vpop.f32.mrb[0].mxu0
        %v2320 = vadd.f32 %v2095, %v2319
        %v2321 = vpop.f32.mrb[0].mxu0
        %2322 = vmatprep.mubr.f32.mxu0 0.0
        %2323 = vmatmul.mubr.f32.gmra.mrb[0].mxu0 %v1846
        %v2324 = vpop.f32.mrb[0].mxu0
        %v2325 = vadd.f32 %v2100, %v2324
        %v2326 = vpop.f32.mrb[0].mxu0
        %2327 = vmatprep.mubr.f32.mxu0 0.0
        %2328 = vmatmul.mubr.f32.gmra.mrb[0].mxu0 %v1847
        %v2329 = vpop.f32.mrb[0].mxu0
        %v2330 = vadd.f32 %v2105, %v2329
        %v2331 = vpop.f32.mrb[0].mxu0
        %2332 = vmatprep.mubr.f32.mxu0 0.0
        %2333 = vmatmul.mubr.f32.gmra.mrb[0].mxu0 %v1848
        %v2334 = vpop.f32.mrb[0].mxu0
        %v2335 = vadd.f32 %v2110, %v2334
        %v2336 = vpop.f32.mrb[0].mxu0
        %2337 = vmatprep.mubr.f32.mxu0 0.0
        %2338 = vmatmul.mubr.f32.gmra.mrb[0].mxu0 %v1849
        %v2339 = vpop.f32.mrb[0].mxu0
        %v2340 = vadd.f32 %v2115, %v2339
        %v2341 = vpop.f32.mrb[0].mxu0
        %2342 = vmatprep.mubr.f32.mxu0 0.0
        %2343 = vmatmul.mubr.f32.gmra.mrb[0].mxu0 %v1850
        %v2344 = vpop.f32.mrb[0].mxu0
        %v2345 = vadd.f32 %v2120, %v2344
        %v2346 = vpop.f32.mrb[0].mxu0
        %2347 = vmatprep.mubr.f32.mxu0 0.0
        %2348 = vmatmul.mubr.f32.gmra.mrb[0].mxu0 %v1851
        %v2349 = vpop.f32.mrb[0].mxu0
        %v2350 = vadd.f32 %v2125, %v2349
        %v2351 = vpop.f32.mrb[0].mxu0
        %2352 = vmatprep.mubr.f32.mxu0 0.0
        %2353 = vmatmul.mubr.f32.gmra.mrb[0].mxu0 %v1852
        %v2354 = vpop.f32.mrb[0].mxu0
        %v2355 = vadd.f32 %v2130, %v2354
        %v2356 = vpop.f32.mrb[0].mxu0
        %2357 = vdwg.mxu0
        %v2358 = vxor.u32 %v2200, 2147483648
        %v2359 = vxor.u32 %v2205, 2147483648
        %v2360 = vxor.u32 %v2210, 2147483648
        %v2361 = vxor.u32 %v2215, 2147483648
        %v2362 = vxor.u32 %v2220, 2147483648
        %v2363 = vxor.u32 %v2225, 2147483648
        %v2364 = vxor.u32 %v2230, 2147483648
        %v2365 = vxor.u32 %v2235, 2147483648
        %v2366 = vxor.u32 %v2240, 2147483648
        %v2367 = vxor.u32 %v2245, 2147483648
        %v2368 = vxor.u32 %v2250, 2147483648
        %v2369 = vxor.u32 %v2255, 2147483648
        %v2370 = vxor.u32 %v2260, 2147483648
        %v2371 = vxor.u32 %v2265, 2147483648
        %v2372 = vxor.u32 %v2270, 2147483648
        %v2373 = vxor.u32 %v2275, 2147483648
        %v2374 = vxor.u32 %v2280, 2147483648
        %v2375 = vxor.u32 %v2285, 2147483648
        %v2376 = vxor.u32 %v2290, 2147483648
        %v2377 = vxor.u32 %v2295, 2147483648
        %v2378 = vxor.u32 %v2300, 2147483648
        %v2379 = vxor.u32 %v2305, 2147483648
        %v2380 = vxor.u32 %v2310, 2147483648
        %v2381 = vxor.u32 %v2315, 2147483648
        %v2382 = vxor.u32 %v2320, 2147483648
        %v2383 = vxor.u32 %v2325, 2147483648
        %v2384 = vxor.u32 %v2330, 2147483648
        %v2385 = vxor.u32 %v2335, 2147483648
        %v2386 = vxor.u32 %v2340, 2147483648
        %v2387 = vxor.u32 %v2345, 2147483648
        %v2388 = vxor.u32 %v2350, 2147483648
        %v2389 = vxor.u32 %v2355, 2147483648
        %v2390 = vmul.f32 %v2358, 1.442695
        %v2391 = vpow.pop %v2390
        %v2392 = vmul.f32 %v2359, 1.442695
        %v2393 = vpow.pop %v2392
        %v2394 = vmul.f32 %v2360, 1.442695
        %v2395 = vpow.pop %v2394
        %v2396 = vmul.f32 %v2361, 1.442695
        %v2397 = vpow.pop %v2396
        %v2398 = vmul.f32 %v2362, 1.442695
        %v2399 = vpow.pop %v2398
        %v2400 = vmul.f32 %v2363, 1.442695
        %v2401 = vpow.pop %v2400
        %v2402 = vmul.f32 %v2364, 1.442695
        %v2403 = vpow.pop %v2402
        %v2404 = vmul.f32 %v2365, 1.442695
        %v2405 = vpow.pop %v2404
        %v2406 = vmul.f32 %v2366, 1.442695
        %v2407 = vpow.pop %v2406
        %v2408 = vmul.f32 %v2367, 1.442695
        %v2409 = vpow.pop %v2408
        %v2410 = vmul.f32 %v2368, 1.442695
        %v2411 = vpow.pop %v2410
        %v2412 = vmul.f32 %v2369, 1.442695
        %v2413 = vpow.pop %v2412
        %v2414 = vmul.f32 %v2370, 1.442695
        %v2415 = vpow.pop %v2414
        %v2416 = vmul.f32 %v2371, 1.442695
        %v2417 = vpow.pop %v2416
        %v2418 = vmul.f32 %v2372, 1.442695
        %v2419 = vpow.pop %v2418
        %v2420 = vmul.f32 %v2373, 1.442695
        %v2421 = vpow.pop %v2420
        %v2422 = vmul.f32 %v2374, 1.442695
        %v2423 = vpow.pop %v2422
        %v2424 = vmul.f32 %v2375, 1.442695
        %v2425 = vpow.pop %v2424
        %v2426 = vmul.f32 %v2376, 1.442695
        %v2427 = vpow.pop %v2426
        %v2428 = vmul.f32 %v2377, 1.442695
        %v2429 = vpow.pop %v2428
        %v2430 = vmul.f32 %v2378, 1.442695
        %v2431 = vpow.pop %v2430
        %v2432 = vmul.f32 %v2379, 1.442695
        %v2433 = vpow.pop %v2432
        %v2434 = vmul.f32 %v2380, 1.442695
        %v2435 = vpow.pop %v2434
        %v2436 = vmul.f32 %v2381, 1.442695
        %v2437 = vpow.pop %v2436
        %v2438 = vmul.f32 %v2382, 1.442695
        %v2439 = vpow.pop %v2438
        %v2440 = vmul.f32 %v2383, 1.442695
        %v2441 = vpow.pop %v2440
        %v2442 = vmul.f32 %v2384, 1.442695
        %v2443 = vpow.pop %v2442
        %v2444 = vmul.f32 %v2385, 1.442695
        %v2445 = vpow.pop %v2444
        %v2446 = vmul.f32 %v2386, 1.442695
        %v2447 = vpow.pop %v2446
        %v2448 = vmul.f32 %v2387, 1.442695
        %v2449 = vpow.pop %v2448
        %v2450 = vmul.f32 %v2388, 1.442695
        %v2451 = vpow.pop %v2450
        %v2452 = vmul.f32 %v2389, 1.442695
        %v2453 = vpow.pop %v2452
        %v2454 = vadd.f32 %v2391, 1.0
        %v2455 = vadd.f32 %v2393, 1.0
        %v2456 = vadd.f32 %v2395, 1.0
        %v2457 = vadd.f32 %v2397, 1.0
        %v2458 = vadd.f32 %v2399, 1.0
        %v2459 = vadd.f32 %v2401, 1.0
        %v2460 = vadd.f32 %v2403, 1.0
        %v2461 = vadd.f32 %v2405, 1.0
        %v2462 = vadd.f32 %v2407, 1.0
        %v2463 = vadd.f32 %v2409, 1.0
        %v2464 = vadd.f32 %v2411, 1.0
        %v2465 = vadd.f32 %v2413, 1.0
        %v2466 = vadd.f32 %v2415, 1.0
        %v2467 = vadd.f32 %v2417, 1.0
        %v2468 = vadd.f32 %v2419, 1.0
        %v2469 = vadd.f32 %v2421, 1.0
        %v2470 = vadd.f32 %v2423, 1.0
        %v2471 = vadd.f32 %v2425, 1.0
        %v2472 = vadd.f32 %v2427, 1.0
        %v2473 = vadd.f32 %v2429, 1.0
        %v2474 = vadd.f32 %v2431, 1.0
        %v2475 = vadd.f32 %v2433, 1.0
        %v2476 = vadd.f32 %v2435, 1.0
        %v2477 = vadd.f32 %v2437, 1.0
        %v2478 = vadd.f32 %v2439, 1.0
        %v2479 = vadd.f32 %v2441, 1.0
        %v2480 = vadd.f32 %v2443, 1.0
        %v2481 = vadd.f32 %v2445, 1.0
        %v2482 = vadd.f32 %v2447, 1.0
        %v2483 = vadd.f32 %v2449, 1.0
        %v2484 = vadd.f32 %v2451, 1.0
        %v2485 = vadd.f32 %v2453, 1.0
        %v2486 = vrcp.pop %v2454
        %v2487 = vmul.f32 1.0, %v2486
        %v2488 = vrcp.pop %v2455
        %v2489 = vmul.f32 1.0, %v2488
        %v2490 = vrcp.pop %v2456
        %v2491 = vmul.f32 1.0, %v2490
        %v2492 = vrcp.pop %v2457
        %v2493 = vmul.f32 1.0, %v2492
        %v2494 = vrcp.pop %v2458
        %v2495 = vmul.f32 1.0, %v2494
        %v2496 = vrcp.pop %v2459
        %v2497 = vmul.f32 1.0, %v2496
        %v2498 = vrcp.pop %v2460
        %v2499 = vmul.f32 1.0, %v2498
        %v2500 = vrcp.pop %v2461
        %v2501 = vmul.f32 1.0, %v2500
        %v2502 = vrcp.pop %v2462
        %v2503 = vmul.f32 1.0, %v2502
        %v2504 = vrcp.pop %v2463
        %v2505 = vmul.f32 1.0, %v2504
        %v2506 = vrcp.pop %v2464
        %v2507 = vmul.f32 1.0, %v2506
        %v2508 = vrcp.pop %v2465
        %v2509 = vmul.f32 1.0, %v2508
        %v2510 = vrcp.pop %v2466
        %v2511 = vmul.f32 1.0, %v2510
        %v2512 = vrcp.pop %v2467
        %v2513 = vmul.f32 1.0, %v2512
        %v2514 = vrcp.pop %v2468
        %v2515 = vmul.f32 1.0, %v2514
        %v2516 = vrcp.pop %v2469
        %v2517 = vmul.f32 1.0, %v2516
        %v2518 = vrcp.pop %v2470
        %v2519 = vmul.f32 1.0, %v2518
        %v2520 = vrcp.pop %v2471
        %v2521 = vmul.f32 1.0, %v2520
        %v2522 = vrcp.pop %v2472
        %v2523 = vmul.f32 1.0, %v2522
        %v2524 = vrcp.pop %v2473
        %v2525 = vmul.f32 1.0, %v2524
        %v2526 = vrcp.pop %v2474
        %v2527 = vmul.f32 1.0, %v2526
        %v2528 = vrcp.pop %v2475
        %v2529 = vmul.f32 1.0, %v2528
        %v2530 = vrcp.pop %v2476
        %v2531 = vmul.f32 1.0, %v2530
        %v2532 = vrcp.pop %v2477
        %v2533 = vmul.f32 1.0, %v2532
        %v2534 = vrcp.pop %v2478
        %v2535 = vmul.f32 1.0, %v2534
        %v2536 = vrcp.pop %v2479
        %v2537 = vmul.f32 1.0, %v2536
        %v2538 = vrcp.pop %v2480
        %v2539 = vmul.f32 1.0, %v2538
        %v2540 = vrcp.pop %v2481
        %v2541 = vmul.f32 1.0, %v2540
        %v2542 = vrcp.pop %v2482
        %v2543 = vmul.f32 1.0, %v2542
        %v2544 = vrcp.pop %v2483
        %v2545 = vmul.f32 1.0, %v2544
        %v2546 = vrcp.pop %v2484
        %v2547 = vmul.f32 1.0, %v2546
        %v2548 = vrcp.pop %v2485
        %v2549 = vmul.f32 1.0, %v2548
        %v2550 = vmul.f32 %v2200, %v2487
        %v2551 = vmul.f32 %v2205, %v2489
        %v2552 = vmul.f32 %v2210, %v2491
        %v2553 = vmul.f32 %v2215, %v2493
        %v2554 = vmul.f32 %v2220, %v2495
        %v2555 = vmul.f32 %v2225, %v2497
        %v2556 = vmul.f32 %v2230, %v2499
        %v2557 = vmul.f32 %v2235, %v2501
        %v2558 = vmul.f32 %v2240, %v2503
        %v2559 = vmul.f32 %v2245, %v2505
        %v2560 = vmul.f32 %v2250, %v2507
        %v2561 = vmul.f32 %v2255, %v2509
        %v2562 = vmul.f32 %v2260, %v2511
        %v2563 = vmul.f32 %v2265, %v2513
        %v2564 = vmul.f32 %v2270, %v2515
        %v2565 = vmul.f32 %v2275, %v2517
        %v2566 = vmul.f32 %v2280, %v2519
        %v2567 = vmul.f32 %v2285, %v2521
        %v2568 = vmul.f32 %v2290, %v2523
        %v2569 = vmul.f32 %v2295, %v2525
        %v2570 = vmul.f32 %v2300, %v2527
        %v2571 = vmul.f32 %v2305, %v2529
        %v2572 = vmul.f32 %v2310, %v2531
        %v2573 = vmul.f32 %v2315, %v2533
        %v2574 = vmul.f32 %v2320, %v2535
        %v2575 = vmul.f32 %v2325, %v2537
        %v2576 = vmul.f32 %v2330, %v2539
        %v2577 = vmul.f32 %v2335, %v2541
        %v2578 = vmul.f32 %v2340, %v2543
        %v2579 = vmul.f32 %v2345, %v2545
        %v2580 = vmul.f32 %v2350, %v2547
        %v2581 = vmul.f32 %v2355, %v2549
        %v2582 = vld [vmem:[%s698] sm:$0xff]
        %v2583 = vld [vmem:[%s698 + $0x8] sm:$0xff]
        %v2584 = vld [vmem:[%s698 + $0x10] sm:$0xff]
        %v2585 = vld [vmem:[%s698 + $0x18] sm:$0xff]
        %v2586 = vld [vmem:[%s698 + $0x20] sm:$0xff]
        %v2587 = vld [vmem:[%s698 + $0x28] sm:$0xff]
        %v2588 = vld [vmem:[%s698 + $0x30] sm:$0xff]
        %v2589 = vld [vmem:[%s698 + $0x38] sm:$0xff]
        %v2590 = vld [vmem:[%s698 + $0x40] sm:$0xff]
        %v2591 = vld [vmem:[%s698 + $0x48] sm:$0xff]
        %v2592 = vld [vmem:[%s698 + $0x50] sm:$0xff]
        %v2593 = vld [vmem:[%s698 + $0x58] sm:$0xff]
        %v2594 = vld [vmem:[%s698 + $0x60] sm:$0xff]
        %v2595 = vld [vmem:[%s698 + $0x68] sm:$0xff]
        %v2596 = vld [vmem:[%s698 + $0x70] sm:$0xff]
        %v2597 = vld [vmem:[%s698 + $0x78] sm:$0xff]
        %v2598 = vld [vmem:[%s701] sm:$0x1]
        %v2600 = vlaneseq
        %v2601 = vshrl.u32 %v2600, 7
        %v2602 = vsub.s32 0, %v2601
        %v2603 = vrot.slane %v2598, %v2602
        %2605 = vmatprep.subr.mxu0 0.0
        %2606 = vmatpush1.msra.mxu0 %v2582
        %2607 = vmatprep.subr.mxu0 0.0
        %2608 = vmatpush1.msra.mxu0 %v2583
        %2609 = vmatprep.subr.mxu0 0.0
        %2610 = vmatpush1.msra.mxu0 %v2584
        %2611 = vmatprep.subr.mxu0 0.0
        %2612 = vmatpush1.msra.mxu0 %v2585
        %2613 = vmatprep.subr.mxu0 0.0
        %2614 = vmatpush1.msra.mxu0 %v2586
        %2615 = vmatprep.subr.mxu0 0.0
        %2616 = vmatpush1.msra.mxu0 %v2587
        %2617 = vmatprep.subr.mxu0 0.0
        %2618 = vmatpush1.msra.mxu0 %v2588
        %2619 = vmatprep.subr.mxu0 0.0
        %2620 = vmatpush1.msra.mxu0 %v2589
        %2621 = vmatprep.subr.mxu0 0.0
        %2622 = vmatpush1.msra.mxu0 %v2590
        %2623 = vmatprep.subr.mxu0 0.0
        %2624 = vmatpush1.msra.mxu0 %v2591
        %2625 = vmatprep.subr.mxu0 0.0
        %2626 = vmatpush1.msra.mxu0 %v2592
        %2627 = vmatprep.subr.mxu0 0.0
        %2628 = vmatpush1.msra.mxu0 %v2593
        %2629 = vmatprep.subr.mxu0 0.0
        %2630 = vmatpush1.msra.mxu0 %v2594
        %2631 = vmatprep.subr.mxu0 0.0
        %2632 = vmatpush1.msra.mxu0 %v2595
        %2633 = vmatprep.subr.mxu0 0.0
        %2634 = vmatpush1.msra.mxu0 %v2596
        %2635 = vmatprep.subr.mxu0 0.0
        %2636 = vmatpush1.msra.mxu0 %v2597
        %2637 = vmatprep.subr.mxu0 0.0
        %2638 = vmatpush1.msra.mxu0 0.0
        %2639 = vmatprep.subr.mxu0 0.0
        %2640 = vmatpush1.msra.mxu0 0.0
        %2641 = vmatprep.subr.mxu0 0.0
        %2642 = vmatpush1.msra.mxu0 0.0
        %2643 = vmatprep.subr.mxu0 0.0
        %2644 = vmatpush1.msra.mxu0 0.0
        %2645 = vmatprep.subr.mxu0 0.0
        %2646 = vmatpush1.msra.mxu0 0.0
        %2647 = vmatprep.subr.mxu0 0.0
        %2648 = vmatpush1.msra.mxu0 0.0
        %2649 = vmatprep.subr.mxu0 0.0
        %2650 = vmatpush1.msra.mxu0 0.0
        %2651 = vmatprep.subr.mxu0 0.0
        %2652 = vmatpush1.msra.mxu0 0.0
        %2653 = vmatprep.subr.mxu0 0.0
        %2654 = vmatpush1.msra.mxu0 0.0
        %2655 = vmatprep.subr.mxu0 0.0
        %2656 = vmatpush1.msra.mxu0 0.0
        %2657 = vmatprep.subr.mxu0 0.0
        %2658 = vmatpush1.msra.mxu0 0.0
        %2659 = vmatprep.subr.mxu0 0.0
        %2660 = vmatpush1.msra.mxu0 0.0
        %2661 = vmatprep.subr.mxu0 0.0
        %2662 = vmatpush1.msra.mxu0 0.0
        %2663 = vmatprep.subr.mxu0 0.0
        %2664 = vmatpush1.msra.mxu0 0.0
        %2665 = vmatprep.subr.mxu0 0.0
        %2666 = vmatpush1.msra.mxu0 0.0
        %2667 = vmatprep.subr.mxu0 0.0
        %2668 = vmatpush1.msra.mxu0 0.0
        %2669 = vmatprep.mubr.f32.mxu0 0.0
        %2670 = vmatmul.mubr.f32.gmra.mrb[0].mxu0 %v2550
        %v2671 = vpop.f32.mrb[0].mxu0
        %v2672 = vadd.f32 %v2603, %v2671
        %v2673 = vpop.f32.mrb[0].mxu0
        %2674 = vmatprep.mubr.f32.mxu0 0.0
        %2675 = vmatmul.mubr.f32.gmra.mrb[0].mxu0 %v2551
        %v2676 = vpop.f32.mrb[0].mxu0
        %v2677 = vadd.f32 %v2603, %v2676
        %v2678 = vpop.f32.mrb[0].mxu0
        %2679 = vmatprep.mubr.f32.mxu0 0.0
        %2680 = vmatmul.mubr.f32.gmra.mrb[0].mxu0 %v2552
        %v2681 = vpop.f32.mrb[0].mxu0
        %v2682 = vadd.f32 %v2603, %v2681
        %v2683 = vpop.f32.mrb[0].mxu0
        %2684 = vmatprep.mubr.f32.mxu0 0.0
        %2685 = vmatmul.mubr.f32.gmra.mrb[0].mxu0 %v2553
        %v2686 = vpop.f32.mrb[0].mxu0
        %v2687 = vadd.f32 %v2603, %v2686
        %v2688 = vpop.f32.mrb[0].mxu0
        %2689 = vmatprep.mubr.f32.mxu0 0.0
        %2690 = vmatmul.mubr.f32.gmra.mrb[0].mxu0 %v2554
        %v2691 = vpop.f32.mrb[0].mxu0
        %v2692 = vadd.f32 %v2603, %v2691
        %v2693 = vpop.f32.mrb[0].mxu0
        %2694 = vmatprep.mubr.f32.mxu0 0.0
        %2695 = vmatmul.mubr.f32.gmra.mrb[0].mxu0 %v2555
        %v2696 = vpop.f32.mrb[0].mxu0
        %v2697 = vadd.f32 %v2603, %v2696
        %v2698 = vpop.f32.mrb[0].mxu0
        %2699 = vmatprep.mubr.f32.mxu0 0.0
        %2700 = vmatmul.mubr.f32.gmra.mrb[0].mxu0 %v2556
        %v2701 = vpop.f32.mrb[0].mxu0
        %v2702 = vadd.f32 %v2603, %v2701
        %v2703 = vpop.f32.mrb[0].mxu0
        %2704 = vmatprep.mubr.f32.mxu0 0.0
        %2705 = vmatmul.mubr.f32.gmra.mrb[0].mxu0 %v2557
        %v2706 = vpop.f32.mrb[0].mxu0
        %v2707 = vadd.f32 %v2603, %v2706
        %v2708 = vpop.f32.mrb[0].mxu0
        %2709 = vmatprep.mubr.f32.mxu0 0.0
        %2710 = vmatmul.mubr.f32.gmra.mrb[0].mxu0 %v2558
        %v2711 = vpop.f32.mrb[0].mxu0
        %v2712 = vadd.f32 %v2603, %v2711
        %v2713 = vpop.f32.mrb[0].mxu0
        %2714 = vmatprep.mubr.f32.mxu0 0.0
        %2715 = vmatmul.mubr.f32.gmra.mrb[0].mxu0 %v2559
        %v2716 = vpop.f32.mrb[0].mxu0
        %v2717 = vadd.f32 %v2603, %v2716
        %v2718 = vpop.f32.mrb[0].mxu0
        %2719 = vmatprep.mubr.f32.mxu0 0.0
        %2720 = vmatmul.mubr.f32.gmra.mrb[0].mxu0 %v2560
        %v2721 = vpop.f32.mrb[0].mxu0
        %v2722 = vadd.f32 %v2603, %v2721
        %v2723 = vpop.f32.mrb[0].mxu0
        %2724 = vmatprep.mubr.f32.mxu0 0.0
        %2725 = vmatmul.mubr.f32.gmra.mrb[0].mxu0 %v2561
        %v2726 = vpop.f32.mrb[0].mxu0
        %v2727 = vadd.f32 %v2603, %v2726
        %v2728 = vpop.f32.mrb[0].mxu0
        %2729 = vmatprep.mubr.f32.mxu0 0.0
        %2730 = vmatmul.mubr.f32.gmra.mrb[0].mxu0 %v2562
        %v2731 = vpop.f32.mrb[0].mxu0
        %v2732 = vadd.f32 %v2603, %v2731
        %v2733 = vpop.f32.mrb[0].mxu0
        %2734 = vmatprep.mubr.f32.mxu0 0.0
        %2735 = vmatmul.mubr.f32.gmra.mrb[0].mxu0 %v2563
        %v2736 = vpop.f32.mrb[0].mxu0
        %v2737 = vadd.f32 %v2603, %v2736
        %v2738 = vpop.f32.mrb[0].mxu0
        %2739 = vmatprep.mubr.f32.mxu0 0.0
        %2740 = vmatmul.mubr.f32.gmra.mrb[0].mxu0 %v2564
        %v2741 = vpop.f32.mrb[0].mxu0
        %v2742 = vadd.f32 %v2603, %v2741
        %v2743 = vpop.f32.mrb[0].mxu0
        %2744 = vmatprep.mubr.f32.mxu0 0.0
        %2745 = vmatmul.mubr.f32.gmra.mrb[0].mxu0 %v2565
        %v2746 = vpop.f32.mrb[0].mxu0
        %v2747 = vadd.f32 %v2603, %v2746
        %v2748 = vpop.f32.mrb[0].mxu0
        %2749 = vmatprep.mubr.f32.mxu0 0.0
        %2750 = vmatmul.mubr.f32.gmra.mrb[0].mxu0 %v2566
        %v2751 = vpop.f32.mrb[0].mxu0
        %v2752 = vadd.f32 %v2603, %v2751
        %v2753 = vpop.f32.mrb[0].mxu0
        %2754 = vmatprep.mubr.f32.mxu0 0.0
        %2755 = vmatmul.mubr.f32.gmra.mrb[0].mxu0 %v2567
        %v2756 = vpop.f32.mrb[0].mxu0
        %v2757 = vadd.f32 %v2603, %v2756
        %v2758 = vpop.f32.mrb[0].mxu0
        %2759 = vmatprep.mubr.f32.mxu0 0.0
        %2760 = vmatmul.mubr.f32.gmra.mrb[0].mxu0 %v2568
        %v2761 = vpop.f32.mrb[0].mxu0
        %v2762 = vadd.f32 %v2603, %v2761
        %v2763 = vpop.f32.mrb[0].mxu0
        %2764 = vmatprep.mubr.f32.mxu0 0.0
        %2765 = vmatmul.mubr.f32.gmra.mrb[0].mxu0 %v2569
        %v2766 = vpop.f32.mrb[0].mxu0
        %v2767 = vadd.f32 %v2603, %v2766
        %v2768 = vpop.f32.mrb[0].mxu0
        %2769 = vmatprep.mubr.f32.mxu0 0.0
        %2770 = vmatmul.mubr.f32.gmra.mrb[0].mxu0 %v2570
        %v2771 = vpop.f32.mrb[0].mxu0
        %v2772 = vadd.f32 %v2603, %v2771
        %v2773 = vpop.f32.mrb[0].mxu0
        %2774 = vmatprep.mubr.f32.mxu0 0.0
        %2775 = vmatmul.mubr.f32.gmra.mrb[0].mxu0 %v2571
        %v2776 = vpop.f32.mrb[0].mxu0
        %v2777 = vadd.f32 %v2603, %v2776
        %v2778 = vpop.f32.mrb[0].mxu0
        %2779 = vmatprep.mubr.f32.mxu0 0.0
        %2780 = vmatmul.mubr.f32.gmra.mrb[0].mxu0 %v2572
        %v2781 = vpop.f32.mrb[0].mxu0
        %v2782 = vadd.f32 %v2603, %v2781
        %v2783 = vpop.f32.mrb[0].mxu0
        %2784 = vmatprep.mubr.f32.mxu0 0.0
        %2785 = vmatmul.mubr.f32.gmra.mrb[0].mxu0 %v2573
        %v2786 = vpop.f32.mrb[0].mxu0
        %v2787 = vadd.f32 %v2603, %v2786
        %v2788 = vpop.f32.mrb[0].mxu0
        %2789 = vmatprep.mubr.f32.mxu0 0.0
        %2790 = vmatmul.mubr.f32.gmra.mrb[0].mxu0 %v2574
        %v2791 = vpop.f32.mrb[0].mxu0
        %v2792 = vadd.f32 %v2603, %v2791
        %v2793 = vpop.f32.mrb[0].mxu0
        %2794 = vmatprep.mubr.f32.mxu0 0.0
        %2795 = vmatmul.mubr.f32.gmra.mrb[0].mxu0 %v2575
        %v2796 = vpop.f32.mrb[0].mxu0
        %v2797 = vadd.f32 %v2603, %v2796
        %v2798 = vpop.f32.mrb[0].mxu0
        %2799 = vmatprep.mubr.f32.mxu0 0.0
        %2800 = vmatmul.mubr.f32.gmra.mrb[0].mxu0 %v2576
        %v2801 = vpop.f32.mrb[0].mxu0
        %v2802 = vadd.f32 %v2603, %v2801
        %v2803 = vpop.f32.mrb[0].mxu0
        %2804 = vmatprep.mubr.f32.mxu0 0.0
        %2805 = vmatmul.mubr.f32.gmra.mrb[0].mxu0 %v2577
        %v2806 = vpop.f32.mrb[0].mxu0
        %v2807 = vadd.f32 %v2603, %v2806
        %v2808 = vpop.f32.mrb[0].mxu0
        %2809 = vmatprep.mubr.f32.mxu0 0.0
        %2810 = vmatmul.mubr.f32.gmra.mrb[0].mxu0 %v2578
        %v2811 = vpop.f32.mrb[0].mxu0
        %v2812 = vadd.f32 %v2603, %v2811
        %v2813 = vpop.f32.mrb[0].mxu0
        %2814 = vmatprep.mubr.f32.mxu0 0.0
        %2815 = vmatmul.mubr.f32.gmra.mrb[0].mxu0 %v2579
        %v2816 = vpop.f32.mrb[0].mxu0
        %v2817 = vadd.f32 %v2603, %v2816
        %v2818 = vpop.f32.mrb[0].mxu0
        %2819 = vmatprep.mubr.f32.mxu0 0.0
        %2820 = vmatmul.mubr.f32.gmra.mrb[0].mxu0 %v2580
        %v2821 = vpop.f32.mrb[0].mxu0
        %v2822 = vadd.f32 %v2603, %v2821
        %v2823 = vpop.f32.mrb[0].mxu0
        %2824 = vmatprep.mubr.f32.mxu0 0.0
        %2825 = vmatmul.mubr.f32.gmra.mrb[0].mxu0 %v2581
        %v2826 = vpop.f32.mrb[0].mxu0
        %v2827 = vadd.f32 %v2603, %v2826
        %v2828 = vpop.f32.mrb[0].mxu0
        %2829 = vdwg.mxu0
        %v2830 = vxor.u32 %v2672, 2147483648
        %v2831 = vxor.u32 %v2677, 2147483648
        %v2832 = vxor.u32 %v2682, 2147483648
        %v2833 = vxor.u32 %v2687, 2147483648
        %v2834 = vxor.u32 %v2692, 2147483648
        %v2835 = vxor.u32 %v2697, 2147483648
        %v2836 = vxor.u32 %v2702, 2147483648
        %v2837 = vxor.u32 %v2707, 2147483648
        %v2838 = vxor.u32 %v2712, 2147483648
        %v2839 = vxor.u32 %v2717, 2147483648
        %v2840 = vxor.u32 %v2722, 2147483648
        %v2841 = vxor.u32 %v2727, 2147483648
        %v2842 = vxor.u32 %v2732, 2147483648
        %v2843 = vxor.u32 %v2737, 2147483648
        %v2844 = vxor.u32 %v2742, 2147483648
        %v2845 = vxor.u32 %v2747, 2147483648
        %v2846 = vxor.u32 %v2752, 2147483648
        %v2847 = vxor.u32 %v2757, 2147483648
        %v2848 = vxor.u32 %v2762, 2147483648
        %v2849 = vxor.u32 %v2767, 2147483648
        %v2850 = vxor.u32 %v2772, 2147483648
        %v2851 = vxor.u32 %v2777, 2147483648
        %v2852 = vxor.u32 %v2782, 2147483648
        %v2853 = vxor.u32 %v2787, 2147483648
        %v2854 = vxor.u32 %v2792, 2147483648
        %v2855 = vxor.u32 %v2797, 2147483648
        %v2856 = vxor.u32 %v2802, 2147483648
        %v2857 = vxor.u32 %v2807, 2147483648
        %v2858 = vxor.u32 %v2812, 2147483648
        %v2859 = vxor.u32 %v2817, 2147483648
        %v2860 = vxor.u32 %v2822, 2147483648
        %v2861 = vxor.u32 %v2827, 2147483648
        %v2862 = vmul.f32 %v2830, 1.442695
        %v2863 = vpow.pop %v2862
        %v2864 = vmul.f32 %v2831, 1.442695
        %v2865 = vpow.pop %v2864
        %v2866 = vmul.f32 %v2832, 1.442695
        %v2867 = vpow.pop %v2866
        %v2868 = vmul.f32 %v2833, 1.442695
        %v2869 = vpow.pop %v2868
        %v2870 = vmul.f32 %v2834, 1.442695
        %v2871 = vpow.pop %v2870
        %v2872 = vmul.f32 %v2835, 1.442695
        %v2873 = vpow.pop %v2872
        %v2874 = vmul.f32 %v2836, 1.442695
        %v2875 = vpow.pop %v2874
        %v2876 = vmul.f32 %v2837, 1.442695
        %v2877 = vpow.pop %v2876
        %v2878 = vmul.f32 %v2838, 1.442695
        %v2879 = vpow.pop %v2878
        %v2880 = vmul.f32 %v2839, 1.442695
        %v2881 = vpow.pop %v2880
        %v2882 = vmul.f32 %v2840, 1.442695
        %v2883 = vpow.pop %v2882
        %v2884 = vmul.f32 %v2841, 1.442695
        %v2885 = vpow.pop %v2884
        %v2886 = vmul.f32 %v2842, 1.442695
        %v2887 = vpow.pop %v2886
        %v2888 = vmul.f32 %v2843, 1.442695
        %v2889 = vpow.pop %v2888
        %v2890 = vmul.f32 %v2844, 1.442695
        %v2891 = vpow.pop %v2890
        %v2892 = vmul.f32 %v2845, 1.442695
        %v2893 = vpow.pop %v2892
        %v2894 = vmul.f32 %v2846, 1.442695
        %v2895 = vpow.pop %v2894
        %v2896 = vmul.f32 %v2847, 1.442695
        %v2897 = vpow.pop %v2896
        %v2898 = vmul.f32 %v2848, 1.442695
        %v2899 = vpow.pop %v2898
        %v2900 = vmul.f32 %v2849, 1.442695
        %v2901 = vpow.pop %v2900
        %v2902 = vmul.f32 %v2850, 1.442695
        %v2903 = vpow.pop %v2902
        %v2904 = vmul.f32 %v2851, 1.442695
        %v2905 = vpow.pop %v2904
        %v2906 = vmul.f32 %v2852, 1.442695
        %v2907 = vpow.pop %v2906
        %v2908 = vmul.f32 %v2853, 1.442695
        %v2909 = vpow.pop %v2908
        %v2910 = vmul.f32 %v2854, 1.442695
        %v2911 = vpow.pop %v2910
        %v2912 = vmul.f32 %v2855, 1.442695
        %v2913 = vpow.pop %v2912
        %v2914 = vmul.f32 %v2856, 1.442695
        %v2915 = vpow.pop %v2914
        %v2916 = vmul.f32 %v2857, 1.442695
        %v2917 = vpow.pop %v2916
        %v2918 = vmul.f32 %v2858, 1.442695
        %v2919 = vpow.pop %v2918
        %v2920 = vmul.f32 %v2859, 1.442695
        %v2921 = vpow.pop %v2920
        %v2922 = vmul.f32 %v2860, 1.442695
        %v2923 = vpow.pop %v2922
        %v2924 = vmul.f32 %v2861, 1.442695
        %v2925 = vpow.pop %v2924
        %v2926 = vadd.f32 %v2863, 1.0
        %v2927 = vadd.f32 %v2865, 1.0
        %v2928 = vadd.f32 %v2867, 1.0
        %v2929 = vadd.f32 %v2869, 1.0
        %v2930 = vadd.f32 %v2871, 1.0
        %v2931 = vadd.f32 %v2873, 1.0
        %v2932 = vadd.f32 %v2875, 1.0
        %v2933 = vadd.f32 %v2877, 1.0
        %v2934 = vadd.f32 %v2879, 1.0
        %v2935 = vadd.f32 %v2881, 1.0
        %v2936 = vadd.f32 %v2883, 1.0
        %v2937 = vadd.f32 %v2885, 1.0
        %v2938 = vadd.f32 %v2887, 1.0
        %v2939 = vadd.f32 %v2889, 1.0
        %v2940 = vadd.f32 %v2891, 1.0
        %v2941 = vadd.f32 %v2893, 1.0
        %v2942 = vadd.f32 %v2895, 1.0
        %v2943 = vadd.f32 %v2897, 1.0
        %v2944 = vadd.f32 %v2899, 1.0
        %v2945 = vadd.f32 %v2901, 1.0
        %v2946 = vadd.f32 %v2903, 1.0
        %v2947 = vadd.f32 %v2905, 1.0
        %v2948 = vadd.f32 %v2907, 1.0
        %v2949 = vadd.f32 %v2909, 1.0
        %v2950 = vadd.f32 %v2911, 1.0
        %v2951 = vadd.f32 %v2913, 1.0
        %v2952 = vadd.f32 %v2915, 1.0
        %v2953 = vadd.f32 %v2917, 1.0
        %v2954 = vadd.f32 %v2919, 1.0
        %v2955 = vadd.f32 %v2921, 1.0
        %v2956 = vadd.f32 %v2923, 1.0
        %v2957 = vadd.f32 %v2925, 1.0
        %v2958 = vrcp.pop %v2926
        %v2959 = vmul.f32 1.0, %v2958
        %v2960 = vrcp.pop %v2927
        %v2961 = vmul.f32 1.0, %v2960
        %v2962 = vrcp.pop %v2928
        %v2963 = vmul.f32 1.0, %v2962
        %v2964 = vrcp.pop %v2929
        %v2965 = vmul.f32 1.0, %v2964
        %v2966 = vrcp.pop %v2930
        %v2967 = vmul.f32 1.0, %v2966
        %v2968 = vrcp.pop %v2931
        %v2969 = vmul.f32 1.0, %v2968
        %v2970 = vrcp.pop %v2932
        %v2971 = vmul.f32 1.0, %v2970
        %v2972 = vrcp.pop %v2933
        %v2973 = vmul.f32 1.0, %v2972
        %v2974 = vrcp.pop %v2934
        %v2975 = vmul.f32 1.0, %v2974
        %v2976 = vrcp.pop %v2935
        %v2977 = vmul.f32 1.0, %v2976
        %v2978 = vrcp.pop %v2936
        %v2979 = vmul.f32 1.0, %v2978
        %v2980 = vrcp.pop %v2937
        %v2981 = vmul.f32 1.0, %v2980
        %v2982 = vrcp.pop %v2938
        %v2983 = vmul.f32 1.0, %v2982
        %v2984 = vrcp.pop %v2939
        %v2985 = vmul.f32 1.0, %v2984
        %v2986 = vrcp.pop %v2940
        %v2987 = vmul.f32 1.0, %v2986
        %v2988 = vrcp.pop %v2941
        %v2989 = vmul.f32 1.0, %v2988
        %v2990 = vrcp.pop %v2942
        %v2991 = vmul.f32 1.0, %v2990
        %v2992 = vrcp.pop %v2943
        %v2993 = vmul.f32 1.0, %v2992
        %v2994 = vrcp.pop %v2944
        %v2995 = vmul.f32 1.0, %v2994
        %v2996 = vrcp.pop %v2945
        %v2997 = vmul.f32 1.0, %v2996
        %v2998 = vrcp.pop %v2946
        %v2999 = vmul.f32 1.0, %v2998
        %v3000 = vrcp.pop %v2947
        %v3001 = vmul.f32 1.0, %v3000
        %v3002 = vrcp.pop %v2948
        %v3003 = vmul.f32 1.0, %v3002
        %v3004 = vrcp.pop %v2949
        %v3005 = vmul.f32 1.0, %v3004
        %v3006 = vrcp.pop %v2950
        %v3007 = vmul.f32 1.0, %v3006
        %v3008 = vrcp.pop %v2951
        %v3009 = vmul.f32 1.0, %v3008
        %v3010 = vrcp.pop %v2952
        %v3011 = vmul.f32 1.0, %v3010
        %v3012 = vrcp.pop %v2953
        %v3013 = vmul.f32 1.0, %v3012
        %v3014 = vrcp.pop %v2954
        %v3015 = vmul.f32 1.0, %v3014
        %v3016 = vrcp.pop %v2955
        %v3017 = vmul.f32 1.0, %v3016
        %v3018 = vrcp.pop %v2956
        %v3019 = vmul.f32 1.0, %v3018
        %v3020 = vrcp.pop %v2957
        %v3021 = vmul.f32 1.0, %v3020
        %v3022 = vmul.f32 %v2672, %v2959
        %v3023 = vmul.f32 %v2677, %v2961
        %v3024 = vmul.f32 %v2682, %v2963
        %v3025 = vmul.f32 %v2687, %v2965
        %v3026 = vmul.f32 %v2692, %v2967
        %v3027 = vmul.f32 %v2697, %v2969
        %v3028 = vmul.f32 %v2702, %v2971
        %v3029 = vmul.f32 %v2707, %v2973
        %v3030 = vmul.f32 %v2712, %v2975
        %v3031 = vmul.f32 %v2717, %v2977
        %v3032 = vmul.f32 %v2722, %v2979
        %v3033 = vmul.f32 %v2727, %v2981
        %v3034 = vmul.f32 %v2732, %v2983
        %v3035 = vmul.f32 %v2737, %v2985
        %v3036 = vmul.f32 %v2742, %v2987
        %v3037 = vmul.f32 %v2747, %v2989
        %v3038 = vmul.f32 %v2752, %v2991
        %v3039 = vmul.f32 %v2757, %v2993
        %v3040 = vmul.f32 %v2762, %v2995
        %v3041 = vmul.f32 %v2767, %v2997
        %v3042 = vmul.f32 %v2772, %v2999
        %v3043 = vmul.f32 %v2777, %v3001
        %v3044 = vmul.f32 %v2782, %v3003
        %v3045 = vmul.f32 %v2787, %v3005
        %v3046 = vmul.f32 %v2792, %v3007
        %v3047 = vmul.f32 %v2797, %v3009
        %v3048 = vmul.f32 %v2802, %v3011
        %v3049 = vmul.f32 %v2807, %v3013
        %v3050 = vmul.f32 %v2812, %v3015
        %v3051 = vmul.f32 %v2817, %v3017
        %v3052 = vmul.f32 %v2822, %v3019
        %v3053 = vmul.f32 %v2827, %v3021
        %s3054 = smul.u32 %s31, 128
        %s3055 = sld [smem:[#allocation3 + %s3054]]
        %s3056 = sadd.s32 %s3054, 1
        %s3057 = sld [smem:[#allocation3 + %s3056]]
        %v3058 = vmul.f32 %v1821, %v1821
        %v3059 = vmul.f32 %v1822, %v1822
        %v3060 = vmul.f32 %v1823, %v1823
        %v3061 = vmul.f32 %v1824, %v1824
        %v3062 = vmul.f32 %v1825, %v1825
        %v3063 = vmul.f32 %v1826, %v1826
        %v3064 = vmul.f32 %v1827, %v1827
        %v3065 = vmul.f32 %v1828, %v1828
        %v3066 = vmul.f32 %v1829, %v1829
        %v3067 = vmul.f32 %v1830, %v1830
        %v3068 = vmul.f32 %v1831, %v1831
        %v3069 = vmul.f32 %v1832, %v1832
        %v3070 = vmul.f32 %v1833, %v1833
        %v3071 = vmul.f32 %v1834, %v1834
        %v3072 = vmul.f32 %v1835, %v1835
        %v3073 = vmul.f32 %v1836, %v1836
        %v3074 = vmul.f32 %v1837, %v1837
        %v3075 = vmul.f32 %v1838, %v1838
        %v3076 = vmul.f32 %v1839, %v1839
        %v3077 = vmul.f32 %v1840, %v1840
        %v3078 = vmul.f32 %v1841, %v1841
        %v3079 = vmul.f32 %v1842, %v1842
        %v3080 = vmul.f32 %v1843, %v1843
        %v3081 = vmul.f32 %v1844, %v1844
        %v3082 = vmul.f32 %v1845, %v1845
        %v3083 = vmul.f32 %v1846, %v1846
        %v3084 = vmul.f32 %v1847, %v1847
        %v3085 = vmul.f32 %v1848, %v1848
        %v3086 = vmul.f32 %v1849, %v1849
        %v3087 = vmul.f32 %v1850, %v1850
        %v3088 = vmul.f32 %v1851, %v1851
        %v3089 = vmul.f32 %v1852, %v1852
        %v3090 = vsub.f32 0.0, %v3058
        %v3091 = vsub.f32 0.0, %v3059
        %v3092 = vsub.f32 0.0, %v3060
        %v3093 = vsub.f32 0.0, %v3061
        %v3094 = vsub.f32 0.0, %v3062
        %v3095 = vsub.f32 0.0, %v3063
        %v3096 = vsub.f32 0.0, %v3064
        %v3097 = vsub.f32 0.0, %v3065
        %v3098 = vsub.f32 0.0, %v3066
        %v3099 = vsub.f32 0.0, %v3067
        %v3100 = vsub.f32 0.0, %v3068
        %v3101 = vsub.f32 0.0, %v3069
        %v3102 = vsub.f32 0.0, %v3070
        %v3103 = vsub.f32 0.0, %v3071
        %v3104 = vsub.f32 0.0, %v3072
        %v3105 = vsub.f32 0.0, %v3073
        %v3106 = vsub.f32 0.0, %v3074
        %v3107 = vsub.f32 0.0, %v3075
        %v3108 = vsub.f32 0.0, %v3076
        %v3109 = vsub.f32 0.0, %v3077
        %v3110 = vsub.f32 0.0, %v3078
        %v3111 = vsub.f32 0.0, %v3079
        %v3112 = vsub.f32 0.0, %v3080
        %v3113 = vsub.f32 0.0, %v3081
        %v3114 = vsub.f32 0.0, %v3082
        %v3115 = vsub.f32 0.0, %v3083
        %v3116 = vsub.f32 0.0, %v3084
        %v3117 = vsub.f32 0.0, %v3085
        %v3118 = vsub.f32 0.0, %v3086
        %v3119 = vsub.f32 0.0, %v3087
        %v3120 = vsub.f32 0.0, %v3088
        %v3121 = vsub.f32 0.0, %v3089
        %v3122 = vstv %s3057
        %v3123 = vrcp.pop %v3122
        %v3124 = vmul.f32 %v3090, %v3123
        %v3125 = vmul.f32 %v3091, %v3123
        %v3126 = vmul.f32 %v3092, %v3123
        %v3127 = vmul.f32 %v3093, %v3123
        %v3128 = vmul.f32 %v3094, %v3123
        %v3129 = vmul.f32 %v3095, %v3123
        %v3130 = vmul.f32 %v3096, %v3123
        %v3131 = vmul.f32 %v3097, %v3123
        %v3132 = vmul.f32 %v3098, %v3123
        %v3133 = vmul.f32 %v3099, %v3123
        %v3134 = vmul.f32 %v3100, %v3123
        %v3135 = vmul.f32 %v3101, %v3123
        %v3136 = vmul.f32 %v3102, %v3123
        %v3137 = vmul.f32 %v3103, %v3123
        %v3138 = vmul.f32 %v3104, %v3123
        %v3139 = vmul.f32 %v3105, %v3123
        %v3140 = vmul.f32 %v3106, %v3123
        %v3141 = vmul.f32 %v3107, %v3123
        %v3142 = vmul.f32 %v3108, %v3123
        %v3143 = vmul.f32 %v3109, %v3123
        %v3144 = vmul.f32 %v3110, %v3123
        %v3145 = vmul.f32 %v3111, %v3123
        %v3146 = vmul.f32 %v3112, %v3123
        %v3147 = vmul.f32 %v3113, %v3123
        %v3148 = vmul.f32 %v3114, %v3123
        %v3149 = vmul.f32 %v3115, %v3123
        %v3150 = vmul.f32 %v3116, %v3123
        %v3151 = vmul.f32 %v3117, %v3123
        %v3152 = vmul.f32 %v3118, %v3123
        %v3153 = vmul.f32 %v3119, %v3123
        %v3154 = vmul.f32 %v3120, %v3123
        %v3155 = vmul.f32 %v3121, %v3123
        %v3156 = vmul.f32 %v3124, 1.442695
        %v3157 = vpow.pop %v3156
        %v3158 = vmul.f32 %v3125, 1.442695
        %v3159 = vpow.pop %v3158
        %v3160 = vmul.f32 %v3126, 1.442695
        %v3161 = vpow.pop %v3160
        %v3162 = vmul.f32 %v3127, 1.442695
        %v3163 = vpow.pop %v3162
        %v3164 = vmul.f32 %v3128, 1.442695
        %v3165 = vpow.pop %v3164
        %v3166 = vmul.f32 %v3129, 1.442695
        %v3167 = vpow.pop %v3166
        %v3168 = vmul.f32 %v3130, 1.442695
        %v3169 = vpow.pop %v3168
        %v3170 = vmul.f32 %v3131, 1.442695
        %v3171 = vpow.pop %v3170
        %v3172 = vmul.f32 %v3132, 1.442695
        %v3173 = vpow.pop %v3172
        %v3174 = vmul.f32 %v3133, 1.442695
        %v3175 = vpow.pop %v3174
        %v3176 = vmul.f32 %v3134, 1.442695
        %v3177 = vpow.pop %v3176
        %v3178 = vmul.f32 %v3135, 1.442695
        %v3179 = vpow.pop %v3178
        %v3180 = vmul.f32 %v3136, 1.442695
        %v3181 = vpow.pop %v3180
        %v3182 = vmul.f32 %v3137, 1.442695
        %v3183 = vpow.pop %v3182
        %v3184 = vmul.f32 %v3138, 1.442695
        %v3185 = vpow.pop %v3184
        %v3186 = vmul.f32 %v3139, 1.442695
        %v3187 = vpow.pop %v3186
        %v3188 = vmul.f32 %v3140, 1.442695
        %v3189 = vpow.pop %v3188
        %v3190 = vmul.f32 %v3141, 1.442695
        %v3191 = vpow.pop %v3190
        %v3192 = vmul.f32 %v3142, 1.442695
        %v3193 = vpow.pop %v3192
        %v3194 = vmul.f32 %v3143, 1.442695
        %v3195 = vpow.pop %v3194
        %v3196 = vmul.f32 %v3144, 1.442695
        %v3197 = vpow.pop %v3196
        %v3198 = vmul.f32 %v3145, 1.442695
        %v3199 = vpow.pop %v3198
        %v3200 = vmul.f32 %v3146, 1.442695
        %v3201 = vpow.pop %v3200
        %v3202 = vmul.f32 %v3147, 1.442695
        %v3203 = vpow.pop %v3202
        %v3204 = vmul.f32 %v3148, 1.442695
        %v3205 = vpow.pop %v3204
        %v3206 = vmul.f32 %v3149, 1.442695
        %v3207 = vpow.pop %v3206
        %v3208 = vmul.f32 %v3150, 1.442695
        %v3209 = vpow.pop %v3208
        %v3210 = vmul.f32 %v3151, 1.442695
        %v3211 = vpow.pop %v3210
        %v3212 = vmul.f32 %v3152, 1.442695
        %v3213 = vpow.pop %v3212
        %v3214 = vmul.f32 %v3153, 1.442695
        %v3215 = vpow.pop %v3214
        %v3216 = vmul.f32 %v3154, 1.442695
        %v3217 = vpow.pop %v3216
        %v3218 = vmul.f32 %v3155, 1.442695
        %v3219 = vpow.pop %v3218
        %v3220 = vstv %s3055
        %v3221 = vmul.f32 %v3220, %v3157
        %v3222 = vmul.f32 %v3220, %v3159
        %v3223 = vmul.f32 %v3220, %v3161
        %v3224 = vmul.f32 %v3220, %v3163
        %v3225 = vmul.f32 %v3220, %v3165
        %v3226 = vmul.f32 %v3220, %v3167
        %v3227 = vmul.f32 %v3220, %v3169
        %v3228 = vmul.f32 %v3220, %v3171
        %v3229 = vmul.f32 %v3220, %v3173
        %v3230 = vmul.f32 %v3220, %v3175
        %v3231 = vmul.f32 %v3220, %v3177
        %v3232 = vmul.f32 %v3220, %v3179
        %v3233 = vmul.f32 %v3220, %v3181
        %v3234 = vmul.f32 %v3220, %v3183
        %v3235 = vmul.f32 %v3220, %v3185
        %v3236 = vmul.f32 %v3220, %v3187
        %v3237 = vmul.f32 %v3220, %v3189
        %v3238 = vmul.f32 %v3220, %v3191
        %v3239 = vmul.f32 %v3220, %v3193
        %v3240 = vmul.f32 %v3220, %v3195
        %v3241 = vmul.f32 %v3220, %v3197
        %v3242 = vmul.f32 %v3220, %v3199
        %v3243 = vmul.f32 %v3220, %v3201
        %v3244 = vmul.f32 %v3220, %v3203
        %v3245 = vmul.f32 %v3220, %v3205
        %v3246 = vmul.f32 %v3220, %v3207
        %v3247 = vmul.f32 %v3220, %v3209
        %v3248 = vmul.f32 %v3220, %v3211
        %v3249 = vmul.f32 %v3220, %v3213
        %v3250 = vmul.f32 %v3220, %v3215
        %v3251 = vmul.f32 %v3220, %v3217
        %v3252 = vmul.f32 %v3220, %v3219
        %3254 = vset.pattern.permute.xlu0 0
        %3255 = vperm.xlu0 %3254, %v3221
        %v3256 = vpop.permute.xlu0 %3255
        %3259 = vset.pattern.permute.xlu0 0
        %3260 = vperm.xlu0 %3259, %v3222
        %v3261 = vpop.permute.xlu0 %3260
        %3264 = vset.pattern.permute.xlu0 0
        %3265 = vperm.xlu0 %3264, %v3223
        %v3266 = vpop.permute.xlu0 %3265
        %3269 = vset.pattern.permute.xlu0 0
        %3270 = vperm.xlu0 %3269, %v3224
        %v3271 = vpop.permute.xlu0 %3270
        %3274 = vset.pattern.permute.xlu0 0
        %3275 = vperm.xlu0 %3274, %v3225
        %v3276 = vpop.permute.xlu0 %3275
        %3279 = vset.pattern.permute.xlu0 0
        %3280 = vperm.xlu0 %3279, %v3226
        %v3281 = vpop.permute.xlu0 %3280
        %3284 = vset.pattern.permute.xlu0 0
        %3285 = vperm.xlu0 %3284, %v3227
        %v3286 = vpop.permute.xlu0 %3285
        %3289 = vset.pattern.permute.xlu0 0
        %3290 = vperm.xlu0 %3289, %v3228
        %v3291 = vpop.permute.xlu0 %3290
        %3294 = vset.pattern.permute.xlu0 0
        %3295 = vperm.xlu0 %3294, %v3229
        %v3296 = vpop.permute.xlu0 %3295
        %3299 = vset.pattern.permute.xlu0 0
        %3300 = vperm.xlu0 %3299, %v3230
        %v3301 = vpop.permute.xlu0 %3300
        %3304 = vset.pattern.permute.xlu0 0
        %3305 = vperm.xlu0 %3304, %v3231
        %v3306 = vpop.permute.xlu0 %3305
        %3309 = vset.pattern.permute.xlu0 0
        %3310 = vperm.xlu0 %3309, %v3232
        %v3311 = vpop.permute.xlu0 %3310
        %3314 = vset.pattern.permute.xlu0 0
        %3315 = vperm.xlu0 %3314, %v3233
        %v3316 = vpop.permute.xlu0 %3315
        %3319 = vset.pattern.permute.xlu0 0
        %3320 = vperm.xlu0 %3319, %v3234
        %v3321 = vpop.permute.xlu0 %3320
        %3324 = vset.pattern.permute.xlu0 0
        %3325 = vperm.xlu0 %3324, %v3235
        %v3326 = vpop.permute.xlu0 %3325
        %3329 = vset.pattern.permute.xlu0 0
        %3330 = vperm.xlu0 %3329, %v3236
        %v3331 = vpop.permute.xlu0 %3330
        %3334 = vset.pattern.permute.xlu0 0
        %3335 = vperm.xlu0 %3334, %v3237
        %v3336 = vpop.permute.xlu0 %3335
        %3339 = vset.pattern.permute.xlu0 0
        %3340 = vperm.xlu0 %3339, %v3238
        %v3341 = vpop.permute.xlu0 %3340
        %3344 = vset.pattern.permute.xlu0 0
        %3345 = vperm.xlu0 %3344, %v3239
        %v3346 = vpop.permute.xlu0 %3345
        %3349 = vset.pattern.permute.xlu0 0
        %3350 = vperm.xlu0 %3349, %v3240
        %v3351 = vpop.permute.xlu0 %3350
        %3354 = vset.pattern.permute.xlu0 0
        %3355 = vperm.xlu0 %3354, %v3241
        %v3356 = vpop.permute.xlu0 %3355
        %3359 = vset.pattern.permute.xlu0 0
        %3360 = vperm.xlu0 %3359, %v3242
        %v3361 = vpop.permute.xlu0 %3360
        %3364 = vset.pattern.permute.xlu0 0
        %3365 = vperm.xlu0 %3364, %v3243
        %v3366 = vpop.permute.xlu0 %3365
        %3369 = vset.pattern.permute.xlu0 0
        %3370 = vperm.xlu0 %3369, %v3244
        %v3371 = vpop.permute.xlu0 %3370
        %3374 = vset.pattern.permute.xlu0 0
        %3375 = vperm.xlu0 %3374, %v3245
        %v3376 = vpop.permute.xlu0 %3375
        %3379 = vset.pattern.permute.xlu0 0
        %3380 = vperm.xlu0 %3379, %v3246
        %v3381 = vpop.permute.xlu0 %3380
        %3384 = vset.pattern.permute.xlu0 0
        %3385 = vperm.xlu0 %3384, %v3247
        %v3386 = vpop.permute.xlu0 %3385
        %3389 = vset.pattern.permute.xlu0 0
        %3390 = vperm.xlu0 %3389, %v3248
        %v3391 = vpop.permute.xlu0 %3390
        %3394 = vset.pattern.permute.xlu0 0
        %3395 = vperm.xlu0 %3394, %v3249
        %v3396 = vpop.permute.xlu0 %3395
        %3399 = vset.pattern.permute.xlu0 0
        %3400 = vperm.xlu0 %3399, %v3250
        %v3401 = vpop.permute.xlu0 %3400
        %3404 = vset.pattern.permute.xlu0 0
        %3405 = vperm.xlu0 %3404, %v3251
        %v3406 = vpop.permute.xlu0 %3405
        %3409 = vset.pattern.permute.xlu0 0
        %3410 = vperm.xlu0 %3409, %v3252
        %v3411 = vpop.permute.xlu0 %3410
        %v3413 = vmul.f32 %v3022, %v3256
        %v3414 = vmul.f32 %v3023, %v3261
        %v3415 = vmul.f32 %v3024, %v3266
        %v3416 = vmul.f32 %v3025, %v3271
        %v3417 = vmul.f32 %v3026, %v3276
        %v3418 = vmul.f32 %v3027, %v3281
        %v3419 = vmul.f32 %v3028, %v3286
        %v3420 = vmul.f32 %v3029, %v3291
        %v3421 = vmul.f32 %v3030, %v3296
        %v3422 = vmul.f32 %v3031, %v3301
        %v3423 = vmul.f32 %v3032, %v3306
        %v3424 = vmul.f32 %v3033, %v3311
        %v3425 = vmul.f32 %v3034, %v3316
        %v3426 = vmul.f32 %v3035, %v3321
        %v3427 = vmul.f32 %v3036, %v3326
        %v3428 = vmul.f32 %v3037, %v3331
        %v3429 = vmul.f32 %v3038, %v3336
        %v3430 = vmul.f32 %v3039, %v3341
        %v3431 = vmul.f32 %v3040, %v3346
        %v3432 = vmul.f32 %v3041, %v3351
        %v3433 = vmul.f32 %v3042, %v3356
        %v3434 = vmul.f32 %v3043, %v3361
        %v3435 = vmul.f32 %v3044, %v3366
        %v3436 = vmul.f32 %v3045, %v3371
        %v3437 = vmul.f32 %v3046, %v3376
        %v3438 = vmul.f32 %v3047, %v3381
        %v3439 = vmul.f32 %v3048, %v3386
        %v3440 = vmul.f32 %v3049, %v3391
        %v3441 = vmul.f32 %v3050, %v3396
        %v3442 = vmul.f32 %v3051, %v3401
        %v3443 = vmul.f32 %v3052, %v3406
        %v3444 = vmul.f32 %v3053, %v3411
        %v3445 = vld [vmem:[%s3] sm:$0xff]
        %v3446 = vld [vmem:[%s3 + $0x8] sm:$0xff]
        %v3447 = vld [vmem:[%s3 + $0x10] sm:$0xff]
        %v3448 = vld [vmem:[%s3 + $0x18] sm:$0xff]
        %v3449 = vld [vmem:[%s3 + $0x20] sm:$0xff]
        %v3450 = vld [vmem:[%s3 + $0x28] sm:$0xff]
        %v3451 = vld [vmem:[%s3 + $0x30] sm:$0xff]
        %v3452 = vld [vmem:[%s3 + $0x38] sm:$0xff]
        %v3453 = vld [vmem:[%s3 + $0x40] sm:$0xff]
        %v3454 = vld [vmem:[%s3 + $0x48] sm:$0xff]
        %v3455 = vld [vmem:[%s3 + $0x50] sm:$0xff]
        %v3456 = vld [vmem:[%s3 + $0x58] sm:$0xff]
        %v3457 = vld [vmem:[%s3 + $0x60] sm:$0xff]
        %v3458 = vld [vmem:[%s3 + $0x68] sm:$0xff]
        %v3459 = vld [vmem:[%s3 + $0x70] sm:$0xff]
        %v3460 = vld [vmem:[%s3 + $0x78] sm:$0xff]
        %3461 = vmatprep.subr.mxu0 0.0
        %3462 = vmatpush1.msra.mxu0 %v3413
        %3463 = vmatprep.subr.mxu0 0.0
        %3464 = vmatpush1.msra.mxu0 %v3414
        %3465 = vmatprep.subr.mxu0 0.0
        %3466 = vmatpush1.msra.mxu0 %v3415
        %3467 = vmatprep.subr.mxu0 0.0
        %3468 = vmatpush1.msra.mxu0 %v3416
        %3469 = vmatprep.subr.mxu0 0.0
        %3470 = vmatpush1.msra.mxu0 %v3417
        %3471 = vmatprep.subr.mxu0 0.0
        %3472 = vmatpush1.msra.mxu0 %v3418
        %3473 = vmatprep.subr.mxu0 0.0
        %3474 = vmatpush1.msra.mxu0 %v3419
        %3475 = vmatprep.subr.mxu0 0.0
        %3476 = vmatpush1.msra.mxu0 %v3420
        %3477 = vmatprep.subr.mxu0 0.0
        %3478 = vmatpush1.msra.mxu0 %v3421
        %3479 = vmatprep.subr.mxu0 0.0
        %3480 = vmatpush1.msra.mxu0 %v3422
        %3481 = vmatprep.subr.mxu0 0.0
        %3482 = vmatpush1.msra.mxu0 %v3423
        %3483 = vmatprep.subr.mxu0 0.0
        %3484 = vmatpush1.msra.mxu0 %v3424
        %3485 = vmatprep.subr.mxu0 0.0
        %3486 = vmatpush1.msra.mxu0 %v3425
        %3487 = vmatprep.subr.mxu0 0.0
        %3488 = vmatpush1.msra.mxu0 %v3426
        %3489 = vmatprep.subr.mxu0 0.0
        %3490 = vmatpush1.msra.mxu0 %v3427
        %3491 = vmatprep.subr.mxu0 0.0
        %3492 = vmatpush1.msra.mxu0 %v3428
        %3493 = vmatprep.subr.mxu0 0.0
        %3494 = vmatpush1.msra.mxu0 %v3429
        %3495 = vmatprep.subr.mxu0 0.0
        %3496 = vmatpush1.msra.mxu0 %v3430
        %3497 = vmatprep.subr.mxu0 0.0
        %3498 = vmatpush1.msra.mxu0 %v3431
        %3499 = vmatprep.subr.mxu0 0.0
        %3500 = vmatpush1.msra.mxu0 %v3432
        %3501 = vmatprep.subr.mxu0 0.0
        %3502 = vmatpush1.msra.mxu0 %v3433
        %3503 = vmatprep.subr.mxu0 0.0
        %3504 = vmatpush1.msra.mxu0 %v3434
        %3505 = vmatprep.subr.mxu0 0.0
        %3506 = vmatpush1.msra.mxu0 %v3435
        %3507 = vmatprep.subr.mxu0 0.0
        %3508 = vmatpush1.msra.mxu0 %v3436
        %3509 = vmatprep.subr.mxu0 0.0
        %3510 = vmatpush1.msra.mxu0 %v3437
        %3511 = vmatprep.subr.mxu0 0.0
        %3512 = vmatpush1.msra.mxu0 %v3438
        %3513 = vmatprep.subr.mxu0 0.0
        %3514 = vmatpush1.msra.mxu0 %v3439
        %3515 = vmatprep.subr.mxu0 0.0
        %3516 = vmatpush1.msra.mxu0 %v3440
        %3517 = vmatprep.subr.mxu0 0.0
        %3518 = vmatpush1.msra.mxu0 %v3441
        %3519 = vmatprep.subr.mxu0 0.0
        %3520 = vmatpush1.msra.mxu0 %v3442
        %3521 = vmatprep.subr.mxu0 0.0
        %3522 = vmatpush1.msra.mxu0 %v3443
        %3523 = vmatprep.subr.mxu0 0.0
        %3524 = vmatpush1.msra.mxu0 %v3444
        %3525 = vmatprep.mubr.f32.mxu0 %v3446
        %3526 = vmatmul.mubr.f32.gmra.mrb[0].mxu0 %v3445
        %v3527 = vpop.f32.mrb[0].mxu0
        %v3528 = vadd.f32 0.0, %v3527
        %v3529 = vpop.f32.mrb[0].mxu0
        %3530 = vmatprep.mubr.f32.mxu0 %v3448
        %3531 = vmatmul.mubr.f32.gmra.mrb[0].mxu0 %v3447
        %v3532 = vpop.f32.mrb[0].mxu0
        %v3533 = vadd.f32 0.0, %v3532
        %v3534 = vpop.f32.mrb[0].mxu0
        %3535 = vmatprep.mubr.f32.mxu0 %v3450
        %3536 = vmatmul.mubr.f32.gmra.mrb[0].mxu0 %v3449
        %v3537 = vpop.f32.mrb[0].mxu0
        %v3538 = vadd.f32 0.0, %v3537
        %v3539 = vpop.f32.mrb[0].mxu0
        %3540 = vmatprep.mubr.f32.mxu0 %v3452
        %3541 = vmatmul.mubr.f32.gmra.mrb[0].mxu0 %v3451
        %v3542 = vpop.f32.mrb[0].mxu0
        %v3543 = vadd.f32 0.0, %v3542
        %v3544 = vpop.f32.mrb[0].mxu0
        %3545 = vmatprep.mubr.f32.mxu0 %v3454
        %3546 = vmatmul.mubr.f32.gmra.mrb[0].mxu0 %v3453
        %v3547 = vpop.f32.mrb[0].mxu0
        %v3548 = vadd.f32 0.0, %v3547
        %v3549 = vpop.f32.mrb[0].mxu0
        %3550 = vmatprep.mubr.f32.mxu0 %v3456
        %3551 = vmatmul.mubr.f32.gmra.mrb[0].mxu0 %v3455
        %v3552 = vpop.f32.mrb[0].mxu0
        %v3553 = vadd.f32 0.0, %v3552
        %v3554 = vpop.f32.mrb[0].mxu0
        %3555 = vmatprep.mubr.f32.mxu0 %v3458
        %3556 = vmatmul.mubr.f32.gmra.mrb[0].mxu0 %v3457
        %v3557 = vpop.f32.mrb[0].mxu0
        %v3558 = vadd.f32 0.0, %v3557
        %v3559 = vpop.f32.mrb[0].mxu0
        %3560 = vmatprep.mubr.f32.mxu0 %v3460
        %3561 = vmatmul.mubr.f32.gmra.mrb[0].mxu0 %v3459
        %v3562 = vpop.f32.mrb[0].mxu0
        %v3563 = vadd.f32 0.0, %v3562
        %v3564 = vpop.f32.mrb[0].mxu0
        %3565 = vdwg.mxu0
        %v3566 = vld [vmem:[%s5] sm:$0xff]
        %v3567 = vld [vmem:[%s5 + $0x8] sm:$0xff]
        %v3568 = vld [vmem:[%s5 + $0x10] sm:$0xff]
        %v3569 = vld [vmem:[%s5 + $0x18] sm:$0xff]
        %v3570 = vld [vmem:[%s5 + $0x20] sm:$0xff]
        %v3571 = vld [vmem:[%s5 + $0x28] sm:$0xff]
        %v3572 = vld [vmem:[%s5 + $0x30] sm:$0xff]
        %v3573 = vld [vmem:[%s5 + $0x38] sm:$0xff]
        %v3574 = vld [vmem:[%s706] sm:$0xff]
        %v3575 = vld [vmem:[%s706 + $0x8] sm:$0xff]
        %v3576 = vld [vmem:[%s706 + $0x10] sm:$0xff]
        %v3577 = vld [vmem:[%s706 + $0x18] sm:$0xff]
        %v3578 = vld [vmem:[%s706 + $0x20] sm:$0xff]
        %v3579 = vld [vmem:[%s706 + $0x28] sm:$0xff]
        %v3580 = vld [vmem:[%s706 + $0x30] sm:$0xff]
        %v3581 = vld [vmem:[%s706 + $0x38] sm:$0xff]
        %v3582 = vld [vmem:[%s706 + $0x40] sm:$0xff]
        %v3583 = vld [vmem:[%s706 + $0x48] sm:$0xff]
        %v3584 = vld [vmem:[%s706 + $0x50] sm:$0xff]
        %v3585 = vld [vmem:[%s706 + $0x58] sm:$0xff]
        %v3586 = vld [vmem:[%s706 + $0x60] sm:$0xff]
        %v3587 = vld [vmem:[%s706 + $0x68] sm:$0xff]
        %v3588 = vld [vmem:[%s706 + $0x70] sm:$0xff]
        %v3589 = vld [vmem:[%s706 + $0x78] sm:$0xff]
        %v3590 = vld [vmem:[%s706 + $0x80] sm:$0xff]
        %v3591 = vld [vmem:[%s706 + $0x88] sm:$0xff]
        %v3592 = vld [vmem:[%s706 + $0x90] sm:$0xff]
        %v3593 = vld [vmem:[%s706 + $0x98] sm:$0xff]
        %v3594 = vld [vmem:[%s706 + $0xa0] sm:$0xff]
        %v3595 = vld [vmem:[%s706 + $0xa8] sm:$0xff]
        %v3596 = vld [vmem:[%s706 + $0xb0] sm:$0xff]
        %v3597 = vld [vmem:[%s706 + $0xb8] sm:$0xff]
        %v3598 = vld [vmem:[%s706 + $0xc0] sm:$0xff]
        %v3599 = vld [vmem:[%s706 + $0xc8] sm:$0xff]
        %v3600 = vld [vmem:[%s706 + $0xd0] sm:$0xff]
        %v3601 = vld [vmem:[%s706 + $0xd8] sm:$0xff]
        %v3602 = vld [vmem:[%s706 + $0xe0] sm:$0xff]
        %v3603 = vld [vmem:[%s706 + $0xe8] sm:$0xff]
        %v3604 = vld [vmem:[%s706 + $0xf0] sm:$0xff]
        %v3605 = vld [vmem:[%s706 + $0xf8] sm:$0xff]
        %v3606 = vld [vmem:[%s706 + $0x100] sm:$0xff]
        %v3607 = vld [vmem:[%s706 + $0x108] sm:$0xff]
        %v3608 = vld [vmem:[%s706 + $0x110] sm:$0xff]
        %v3609 = vld [vmem:[%s706 + $0x118] sm:$0xff]
        %v3610 = vld [vmem:[%s706 + $0x120] sm:$0xff]
        %v3611 = vld [vmem:[%s706 + $0x128] sm:$0xff]
        %v3612 = vld [vmem:[%s706 + $0x130] sm:$0xff]
        %v3613 = vld [vmem:[%s706 + $0x138] sm:$0xff]
        %v3614 = vld [vmem:[%s706 + $0x140] sm:$0xff]
        %v3615 = vld [vmem:[%s706 + $0x148] sm:$0xff]
        %v3616 = vld [vmem:[%s706 + $0x150] sm:$0xff]
        %v3617 = vld [vmem:[%s706 + $0x158] sm:$0xff]
        %v3618 = vld [vmem:[%s706 + $0x160] sm:$0xff]
        %v3619 = vld [vmem:[%s706 + $0x168] sm:$0xff]
        %v3620 = vld [vmem:[%s706 + $0x170] sm:$0xff]
        %v3621 = vld [vmem:[%s706 + $0x178] sm:$0xff]
        %v3622 = vld [vmem:[%s709] sm:$0x1]
        %v3624 = vlaneseq
        %v3625 = vshrl.u32 %v3624, 7
        %v3626 = vsub.s32 0, %v3625
        %v3627 = vrot.slane %v3622, %v3626
        %3629 = vmatprep.subr.mxu0 0.0
        %3630 = vmatpush1.msra.mxu0 %v3574
        %3631 = vmatprep.subr.mxu0 0.0
        %3632 = vmatpush1.msra.mxu0 %v3575
        %3633 = vmatprep.subr.mxu0 0.0
        %3634 = vmatpush1.msra.mxu0 %v3576
        %3635 = vmatprep.subr.mxu0 0.0
        %3636 = vmatpush1.msra.mxu0 %v3577
        %3637 = vmatprep.subr.mxu0 0.0
        %3638 = vmatpush1.msra.mxu0 %v3578
        %3639 = vmatprep.subr.mxu0 0.0
        %3640 = vmatpush1.msra.mxu0 %v3579
        %3641 = vmatprep.subr.mxu0 0.0
        %3642 = vmatpush1.msra.mxu0 %v3580
        %3643 = vmatprep.subr.mxu0 0.0
        %3644 = vmatpush1.msra.mxu0 %v3581
        %3645 = vmatprep.subr.mxu0 0.0
        %3646 = vmatpush1.msra.mxu0 %v3582
        %3647 = vmatprep.subr.mxu0 0.0
        %3648 = vmatpush1.msra.mxu0 %v3583
        %3649 = vmatprep.subr.mxu0 0.0
        %3650 = vmatpush1.msra.mxu0 %v3584
        %3651 = vmatprep.subr.mxu0 0.0
        %3652 = vmatpush1.msra.mxu0 %v3585
        %3653 = vmatprep.subr.mxu0 0.0
        %3654 = vmatpush1.msra.mxu0 %v3586
        %3655 = vmatprep.subr.mxu0 0.0
        %3656 = vmatpush1.msra.mxu0 %v3587
        %3657 = vmatprep.subr.mxu0 0.0
        %3658 = vmatpush1.msra.mxu0 %v3588
        %3659 = vmatprep.subr.mxu0 0.0
        %3660 = vmatpush1.msra.mxu0 %v3589
        %3661 = vmatprep.subr.mxu0 0.0
        %3662 = vmatpush1.msra.mxu0 %v3590
        %3663 = vmatprep.subr.mxu0 0.0
        %3664 = vmatpush1.msra.mxu0 %v3591
        %3665 = vmatprep.subr.mxu0 0.0
        %3666 = vmatpush1.msra.mxu0 %v3592
        %3667 = vmatprep.subr.mxu0 0.0
        %3668 = vmatpush1.msra.mxu0 %v3593
        %3669 = vmatprep.subr.mxu0 0.0
        %3670 = vmatpush1.msra.mxu0 %v3594
        %3671 = vmatprep.subr.mxu0 0.0
        %3672 = vmatpush1.msra.mxu0 %v3595
        %3673 = vmatprep.subr.mxu0 0.0
        %3674 = vmatpush1.msra.mxu0 %v3596
        %3675 = vmatprep.subr.mxu0 0.0
        %3676 = vmatpush1.msra.mxu0 %v3597
        %3677 = vmatprep.subr.mxu0 0.0
        %3678 = vmatpush1.msra.mxu0 %v3598
        %3679 = vmatprep.subr.mxu0 0.0
        %3680 = vmatpush1.msra.mxu0 %v3599
        %3681 = vmatprep.subr.mxu0 0.0
        %3682 = vmatpush1.msra.mxu0 %v3600
        %3683 = vmatprep.subr.mxu0 0.0
        %3684 = vmatpush1.msra.mxu0 %v3601
        %3685 = vmatprep.subr.mxu0 0.0
        %3686 = vmatpush1.msra.mxu0 %v3602
        %3687 = vmatprep.subr.mxu0 0.0
        %3688 = vmatpush1.msra.mxu0 %v3603
        %3689 = vmatprep.subr.mxu0 0.0
        %3690 = vmatpush1.msra.mxu0 %v3604
        %3691 = vmatprep.subr.mxu0 0.0
        %3692 = vmatpush1.msra.mxu0 %v3605
        %3693 = vmatprep.mubr.f32.mxu0 %v3528
        %3694 = vmatmul.mubr.f32.gmra.mrb[0].mxu0 %v1106
        %v3695 = vpop.f32.mrb[0].mxu0
        %v3696 = vadd.f32 %v3627, %v3695
        %v3697 = vpop.f32.mrb[0].mxu0
        %3698 = vmatprep.mubr.f32.mxu0 %v3533
        %3699 = vmatmul.mubr.f32.gmra.mrb[0].mxu0 %v1107
        %v3700 = vpop.f32.mrb[0].mxu0
        %v3701 = vadd.f32 %v3627, %v3700
        %v3702 = vpop.f32.mrb[0].mxu0
        %3703 = vmatprep.mubr.f32.mxu0 %v3538
        %3704 = vmatmul.mubr.f32.gmra.mrb[0].mxu0 %v1108
        %v3705 = vpop.f32.mrb[0].mxu0
        %v3706 = vadd.f32 %v3627, %v3705
        %v3707 = vpop.f32.mrb[0].mxu0
        %3708 = vmatprep.mubr.f32.mxu0 %v3543
        %3709 = vmatmul.mubr.f32.gmra.mrb[0].mxu0 %v1109
        %v3710 = vpop.f32.mrb[0].mxu0
        %v3711 = vadd.f32 %v3627, %v3710
        %v3712 = vpop.f32.mrb[0].mxu0
        %3713 = vmatprep.mubr.f32.mxu0 %v3548
        %3714 = vmatmul.mubr.f32.gmra.mrb[0].mxu0 %v1110
        %v3715 = vpop.f32.mrb[0].mxu0
        %v3716 = vadd.f32 %v3627, %v3715
        %v3717 = vpop.f32.mrb[0].mxu0
        %3718 = vmatprep.mubr.f32.mxu0 %v3553
        %3719 = vmatmul.mubr.f32.gmra.mrb[0].mxu0 %v1111
        %v3720 = vpop.f32.mrb[0].mxu0
        %v3721 = vadd.f32 %v3627, %v3720
        %v3722 = vpop.f32.mrb[0].mxu0
        %3723 = vmatprep.mubr.f32.mxu0 %v3558
        %3724 = vmatmul.mubr.f32.gmra.mrb[0].mxu0 %v1112
        %v3725 = vpop.f32.mrb[0].mxu0
        %v3726 = vadd.f32 %v3627, %v3725
        %v3727 = vpop.f32.mrb[0].mxu0
        %3728 = vmatprep.mubr.f32.mxu0 %v3563
        %3729 = vmatmul.mubr.f32.gmra.mrb[0].mxu0 %v1113
        %v3730 = vpop.f32.mrb[0].mxu0
        %v3731 = vadd.f32 %v3627, %v3730
        %v3732 = vpop.f32.mrb[0].mxu0
        %3733 = vdwg.mxu0
        %3734 = vmatprep.subr.mxu0 0.0
        %3735 = vmatpush1.msra.mxu0 %v3606
        %3736 = vmatprep.subr.mxu0 0.0
        %3737 = vmatpush1.msra.mxu0 %v3607
        %3738 = vmatprep.subr.mxu0 0.0
        %3739 = vmatpush1.msra.mxu0 %v3608
        %3740 = vmatprep.subr.mxu0 0.0
        %3741 = vmatpush1.msra.mxu0 %v3609
        %3742 = vmatprep.subr.mxu0 0.0
        %3743 = vmatpush1.msra.mxu0 %v3610
        %3744 = vmatprep.subr.mxu0 0.0
        %3745 = vmatpush1.msra.mxu0 %v3611
        %3746 = vmatprep.subr.mxu0 0.0
        %3747 = vmatpush1.msra.mxu0 %v3612
        %3748 = vmatprep.subr.mxu0 0.0
        %3749 = vmatpush1.msra.mxu0 %v3613
        %3750 = vmatprep.subr.mxu0 0.0
        %3751 = vmatpush1.msra.mxu0 %v3614
        %3752 = vmatprep.subr.mxu0 0.0
        %3753 = vmatpush1.msra.mxu0 %v3615
        %3754 = vmatprep.subr.mxu0 0.0
        %3755 = vmatpush1.msra.mxu0 %v3616
        %3756 = vmatprep.subr.mxu0 0.0
        %3757 = vmatpush1.msra.mxu0 %v3617
        %3758 = vmatprep.subr.mxu0 0.0
        %3759 = vmatpush1.msra.mxu0 %v3618
        %3760 = vmatprep.subr.mxu0 0.0
        %3761 = vmatpush1.msra.mxu0 %v3619
        %3762 = vmatprep.subr.mxu0 0.0
        %3763 = vmatpush1.msra.mxu0 %v3620
        %3764 = vmatprep.subr.mxu0 0.0
        %3765 = vmatpush1.msra.mxu0 %v3621
        %3766 = vmatprep.subr.mxu0 0.0
        %3767 = vmatpush1.msra.mxu0 0.0
        %3768 = vmatprep.subr.mxu0 0.0
        %3769 = vmatpush1.msra.mxu0 0.0
        %3770 = vmatprep.subr.mxu0 0.0
        %3771 = vmatpush1.msra.mxu0 0.0
        %3772 = vmatprep.subr.mxu0 0.0
        %3773 = vmatpush1.msra.mxu0 0.0
        %3774 = vmatprep.subr.mxu0 0.0
        %3775 = vmatpush1.msra.mxu0 0.0
        %3776 = vmatprep.subr.mxu0 0.0
        %3777 = vmatpush1.msra.mxu0 0.0
        %3778 = vmatprep.subr.mxu0 0.0
        %3779 = vmatpush1.msra.mxu0 0.0
        %3780 = vmatprep.subr.mxu0 0.0
        %3781 = vmatpush1.msra.mxu0 0.0
        %3782 = vmatprep.subr.mxu0 0.0
        %3783 = vmatpush1.msra.mxu0 0.0
        %3784 = vmatprep.subr.mxu0 0.0
        %3785 = vmatpush1.msra.mxu0 0.0
        %3786 = vmatprep.subr.mxu0 0.0
        %3787 = vmatpush1.msra.mxu0 0.0
        %3788 = vmatprep.subr.mxu0 0.0
        %3789 = vmatpush1.msra.mxu0 0.0
        %3790 = vmatprep.subr.mxu0 0.0
        %3791 = vmatpush1.msra.mxu0 0.0
        %3792 = vmatprep.subr.mxu0 0.0
        %3793 = vmatpush1.msra.mxu0 0.0
        %3794 = vmatprep.subr.mxu0 0.0
        %3795 = vmatpush1.msra.mxu0 0.0
        %3796 = vmatprep.subr.mxu0 0.0
        %3797 = vmatpush1.msra.mxu0 0.0
        %3798 = vmatprep.mubr.f32.mxu0 0.0
        %3799 = vmatmul.mubr.f32.gmra.mrb[0].mxu0 %v3566
        %v3800 = vpop.f32.mrb[0].mxu0
        %v3801 = vadd.f32 %v3696, %v3800
        %v3802 = vpop.f32.mrb[0].mxu0
        %3803 = vmatprep.mubr.f32.mxu0 0.0
        %3804 = vmatmul.mubr.f32.gmra.mrb[0].mxu0 %v3567
        %v3805 = vpop.f32.mrb[0].mxu0
        %v3806 = vadd.f32 %v3701, %v3805
        %v3807 = vpop.f32.mrb[0].mxu0
        %3808 = vmatprep.mubr.f32.mxu0 0.0
        %3809 = vmatmul.mubr.f32.gmra.mrb[0].mxu0 %v3568
        %v3810 = vpop.f32.mrb[0].mxu0
        %v3811 = vadd.f32 %v3706, %v3810
        %v3812 = vpop.f32.mrb[0].mxu0
        %3813 = vmatprep.mubr.f32.mxu0 0.0
        %3814 = vmatmul.mubr.f32.gmra.mrb[0].mxu0 %v3569
        %v3815 = vpop.f32.mrb[0].mxu0
        %v3816 = vadd.f32 %v3711, %v3815
        %v3817 = vpop.f32.mrb[0].mxu0
        %3818 = vmatprep.mubr.f32.mxu0 0.0
        %3819 = vmatmul.mubr.f32.gmra.mrb[0].mxu0 %v3570
        %v3820 = vpop.f32.mrb[0].mxu0
        %v3821 = vadd.f32 %v3716, %v3820
        %v3822 = vpop.f32.mrb[0].mxu0
        %3823 = vmatprep.mubr.f32.mxu0 0.0
        %3824 = vmatmul.mubr.f32.gmra.mrb[0].mxu0 %v3571
        %v3825 = vpop.f32.mrb[0].mxu0
        %v3826 = vadd.f32 %v3721, %v3825
        %v3827 = vpop.f32.mrb[0].mxu0
        %3828 = vmatprep.mubr.f32.mxu0 0.0
        %3829 = vmatmul.mubr.f32.gmra.mrb[0].mxu0 %v3572
        %v3830 = vpop.f32.mrb[0].mxu0
        %v3831 = vadd.f32 %v3726, %v3830
        %v3832 = vpop.f32.mrb[0].mxu0
        %3833 = vmatprep.mubr.f32.mxu0 0.0
        %3834 = vmatmul.mubr.f32.gmra.mrb[0].mxu0 %v3573
        %v3835 = vpop.f32.mrb[0].mxu0
        %v3836 = vadd.f32 %v3731, %v3835
        %v3837 = vpop.f32.mrb[0].mxu0
        %3838 = vdwg.mxu0
        %v3839 = vxor.u32 %v3801, 2147483648
        %v3840 = vxor.u32 %v3806, 2147483648
        %v3841 = vxor.u32 %v3811, 2147483648
        %v3842 = vxor.u32 %v3816, 2147483648
        %v3843 = vxor.u32 %v3821, 2147483648
        %v3844 = vxor.u32 %v3826, 2147483648
        %v3845 = vxor.u32 %v3831, 2147483648
        %v3846 = vxor.u32 %v3836, 2147483648
        %v3847 = vmul.f32 %v3839, 1.442695
        %v3848 = vpow.pop %v3847
        %v3849 = vmul.f32 %v3840, 1.442695
        %v3850 = vpow.pop %v3849
        %v3851 = vmul.f32 %v3841, 1.442695
        %v3852 = vpow.pop %v3851
        %v3853 = vmul.f32 %v3842, 1.442695
        %v3854 = vpow.pop %v3853
        %v3855 = vmul.f32 %v3843, 1.442695
        %v3856 = vpow.pop %v3855
        %v3857 = vmul.f32 %v3844, 1.442695
        %v3858 = vpow.pop %v3857
        %v3859 = vmul.f32 %v3845, 1.442695
        %v3860 = vpow.pop %v3859
        %v3861 = vmul.f32 %v3846, 1.442695
        %v3862 = vpow.pop %v3861
        %v3863 = vadd.f32 %v3848, 1.0
        %v3864 = vadd.f32 %v3850, 1.0
        %v3865 = vadd.f32 %v3852, 1.0
        %v3866 = vadd.f32 %v3854, 1.0
        %v3867 = vadd.f32 %v3856, 1.0
        %v3868 = vadd.f32 %v3858, 1.0
        %v3869 = vadd.f32 %v3860, 1.0
        %v3870 = vadd.f32 %v3862, 1.0
        %v3871 = vrcp.pop %v3863
        %v3872 = vmul.f32 1.0, %v3871
        %v3873 = vrcp.pop %v3864
        %v3874 = vmul.f32 1.0, %v3873
        %v3875 = vrcp.pop %v3865
        %v3876 = vmul.f32 1.0, %v3875
        %v3877 = vrcp.pop %v3866
        %v3878 = vmul.f32 1.0, %v3877
        %v3879 = vrcp.pop %v3867
        %v3880 = vmul.f32 1.0, %v3879
        %v3881 = vrcp.pop %v3868
        %v3882 = vmul.f32 1.0, %v3881
        %v3883 = vrcp.pop %v3869
        %v3884 = vmul.f32 1.0, %v3883
        %v3885 = vrcp.pop %v3870
        %v3886 = vmul.f32 1.0, %v3885
        %v3887 = vmul.f32 %v3801, %v3872
        %v3888 = vmul.f32 %v3806, %v3874
        %v3889 = vmul.f32 %v3811, %v3876
        %v3890 = vmul.f32 %v3816, %v3878
        %v3891 = vmul.f32 %v3821, %v3880
        %v3892 = vmul.f32 %v3826, %v3882
        %v3893 = vmul.f32 %v3831, %v3884
        %v3894 = vmul.f32 %v3836, %v3886
        %v3895 = vld [vmem:[%s714] sm:$0xff]
        %v3896 = vld [vmem:[%s714 + $0x8] sm:$0xff]
        %v3897 = vld [vmem:[%s714 + $0x10] sm:$0xff]
        %v3898 = vld [vmem:[%s714 + $0x18] sm:$0xff]
        %v3899 = vld [vmem:[%s714 + $0x20] sm:$0xff]
        %v3900 = vld [vmem:[%s714 + $0x28] sm:$0xff]
        %v3901 = vld [vmem:[%s714 + $0x30] sm:$0xff]
        %v3902 = vld [vmem:[%s714 + $0x38] sm:$0xff]
        %v3903 = vld [vmem:[%s714 + $0x40] sm:$0xff]
        %v3904 = vld [vmem:[%s714 + $0x48] sm:$0xff]
        %v3905 = vld [vmem:[%s714 + $0x50] sm:$0xff]
        %v3906 = vld [vmem:[%s714 + $0x58] sm:$0xff]
        %v3907 = vld [vmem:[%s714 + $0x60] sm:$0xff]
        %v3908 = vld [vmem:[%s714 + $0x68] sm:$0xff]
        %v3909 = vld [vmem:[%s714 + $0x70] sm:$0xff]
        %v3910 = vld [vmem:[%s714 + $0x78] sm:$0xff]
        %v3911 = vld [vmem:[%s717] sm:$0x1]
        %v3913 = vlaneseq
        %v3914 = vshrl.u32 %v3913, 7
        %v3915 = vsub.s32 0, %v3914
        %v3916 = vrot.slane %v3911, %v3915
        %3918 = vmatprep.subr.mxu0 0.0
        %3919 = vmatpush1.msra.mxu0 %v3895
        %3920 = vmatprep.subr.mxu0 0.0
        %3921 = vmatpush1.msra.mxu0 %v3896
        %3922 = vmatprep.subr.mxu0 0.0
        %3923 = vmatpush1.msra.mxu0 %v3897
        %3924 = vmatprep.subr.mxu0 0.0
        %3925 = vmatpush1.msra.mxu0 %v3898
        %3926 = vmatprep.subr.mxu0 0.0
        %3927 = vmatpush1.msra.mxu0 %v3899
        %3928 = vmatprep.subr.mxu0 0.0
        %3929 = vmatpush1.msra.mxu0 %v3900
        %3930 = vmatprep.subr.mxu0 0.0
        %3931 = vmatpush1.msra.mxu0 %v3901
        %3932 = vmatprep.subr.mxu0 0.0
        %3933 = vmatpush1.msra.mxu0 %v3902
        %3934 = vmatprep.subr.mxu0 0.0
        %3935 = vmatpush1.msra.mxu0 %v3903
        %3936 = vmatprep.subr.mxu0 0.0
        %3937 = vmatpush1.msra.mxu0 %v3904
        %3938 = vmatprep.subr.mxu0 0.0
        %3939 = vmatpush1.msra.mxu0 %v3905
        %3940 = vmatprep.subr.mxu0 0.0
        %3941 = vmatpush1.msra.mxu0 %v3906
        %3942 = vmatprep.subr.mxu0 0.0
        %3943 = vmatpush1.msra.mxu0 %v3907
        %3944 = vmatprep.subr.mxu0 0.0
        %3945 = vmatpush1.msra.mxu0 %v3908
        %3946 = vmatprep.subr.mxu0 0.0
        %3947 = vmatpush1.msra.mxu0 %v3909
        %3948 = vmatprep.subr.mxu0 0.0
        %3949 = vmatpush1.msra.mxu0 %v3910
        %3950 = vmatprep.subr.mxu0 0.0
        %3951 = vmatpush1.msra.mxu0 0.0
        %3952 = vmatprep.subr.mxu0 0.0
        %3953 = vmatpush1.msra.mxu0 0.0
        %3954 = vmatprep.subr.mxu0 0.0
        %3955 = vmatpush1.msra.mxu0 0.0
        %3956 = vmatprep.subr.mxu0 0.0
        %3957 = vmatpush1.msra.mxu0 0.0
        %3958 = vmatprep.subr.mxu0 0.0
        %3959 = vmatpush1.msra.mxu0 0.0
        %3960 = vmatprep.subr.mxu0 0.0
        %3961 = vmatpush1.msra.mxu0 0.0
        %3962 = vmatprep.subr.mxu0 0.0
        %3963 = vmatpush1.msra.mxu0 0.0
        %3964 = vmatprep.subr.mxu0 0.0
        %3965 = vmatpush1.msra.mxu0 0.0
        %3966 = vmatprep.subr.mxu0 0.0
        %3967 = vmatpush1.msra.mxu0 0.0
        %3968 = vmatprep.subr.mxu0 0.0
        %3969 = vmatpush1.msra.mxu0 0.0
        %3970 = vmatprep.subr.mxu0 0.0
        %3971 = vmatpush1.msra.mxu0 0.0
        %3972 = vmatprep.subr.mxu0 0.0
        %3973 = vmatpush1.msra.mxu0 0.0
        %3974 = vmatprep.subr.mxu0 0.0
        %3975 = vmatpush1.msra.mxu0 0.0
        %3976 = vmatprep.subr.mxu0 0.0
        %3977 = vmatpush1.msra.mxu0 0.0
        %3978 = vmatprep.subr.mxu0 0.0
        %3979 = vmatpush1.msra.mxu0 0.0
        %3980 = vmatprep.subr.mxu0 0.0
        %3981 = vmatpush1.msra.mxu0 0.0
        %3982 = vmatprep.mubr.f32.mxu0 0.0
        %3983 = vmatmul.mubr.f32.gmra.mrb[0].mxu0 %v3887
        %v3984 = vpop.f32.mrb[0].mxu0
        %v3985 = vadd.f32 %v3916, %v3984
        %v3986 = vpop.f32.mrb[0].mxu0
        %3987 = vmatprep.mubr.f32.mxu0 0.0
        %3988 = vmatmul.mubr.f32.gmra.mrb[0].mxu0 %v3888
        %v3989 = vpop.f32.mrb[0].mxu0
        %v3990 = vadd.f32 %v3916, %v3989
        %v3991 = vpop.f32.mrb[0].mxu0
        %3992 = vmatprep.mubr.f32.mxu0 0.0
        %3993 = vmatmul.mubr.f32.gmra.mrb[0].mxu0 %v3889
        %v3994 = vpop.f32.mrb[0].mxu0
        %v3995 = vadd.f32 %v3916, %v3994
        %v3996 = vpop.f32.mrb[0].mxu0
        %3997 = vmatprep.mubr.f32.mxu0 0.0
        %3998 = vmatmul.mubr.f32.gmra.mrb[0].mxu0 %v3890
        %v3999 = vpop.f32.mrb[0].mxu0
        %v4000 = vadd.f32 %v3916, %v3999
        %v4001 = vpop.f32.mrb[0].mxu0
        %4002 = vmatprep.mubr.f32.mxu0 0.0
        %4003 = vmatmul.mubr.f32.gmra.mrb[0].mxu0 %v3891
        %v4004 = vpop.f32.mrb[0].mxu0
        %v4005 = vadd.f32 %v3916, %v4004
        %v4006 = vpop.f32.mrb[0].mxu0
        %4007 = vmatprep.mubr.f32.mxu0 0.0
        %4008 = vmatmul.mubr.f32.gmra.mrb[0].mxu0 %v3892
        %v4009 = vpop.f32.mrb[0].mxu0
        %v4010 = vadd.f32 %v3916, %v4009
        %v4011 = vpop.f32.mrb[0].mxu0
        %4012 = vmatprep.mubr.f32.mxu0 0.0
        %4013 = vmatmul.mubr.f32.gmra.mrb[0].mxu0 %v3893
        %v4014 = vpop.f32.mrb[0].mxu0
        %v4015 = vadd.f32 %v3916, %v4014
        %v4016 = vpop.f32.mrb[0].mxu0
        %4017 = vmatprep.mubr.f32.mxu0 0.0
        %4018 = vmatmul.mubr.f32.gmra.mrb[0].mxu0 %v3894
        %v4019 = vpop.f32.mrb[0].mxu0
        %v4020 = vadd.f32 %v3916, %v4019
        %v4021 = vpop.f32.mrb[0].mxu0
        %4022 = vdwg.mxu0
        %v4023 = vxor.u32 %v3985, 2147483648
        %v4024 = vxor.u32 %v3990, 2147483648
        %v4025 = vxor.u32 %v3995, 2147483648
        %v4026 = vxor.u32 %v4000, 2147483648
        %v4027 = vxor.u32 %v4005, 2147483648
        %v4028 = vxor.u32 %v4010, 2147483648
        %v4029 = vxor.u32 %v4015, 2147483648
        %v4030 = vxor.u32 %v4020, 2147483648
        %v4031 = vmul.f32 %v4023, 1.442695
        %v4032 = vpow.pop %v4031
        %v4033 = vmul.f32 %v4024, 1.442695
        %v4034 = vpow.pop %v4033
        %v4035 = vmul.f32 %v4025, 1.442695
        %v4036 = vpow.pop %v4035
        %v4037 = vmul.f32 %v4026, 1.442695
        %v4038 = vpow.pop %v4037
        %v4039 = vmul.f32 %v4027, 1.442695
        %v4040 = vpow.pop %v4039
        %v4041 = vmul.f32 %v4028, 1.442695
        %v4042 = vpow.pop %v4041
        %v4043 = vmul.f32 %v4029, 1.442695
        %v4044 = vpow.pop %v4043
        %v4045 = vmul.f32 %v4030, 1.442695
        %v4046 = vpow.pop %v4045
        %v4047 = vadd.f32 %v4032, 1.0
        %v4048 = vadd.f32 %v4034, 1.0
        %v4049 = vadd.f32 %v4036, 1.0
        %v4050 = vadd.f32 %v4038, 1.0
        %v4051 = vadd.f32 %v4040, 1.0
        %v4052 = vadd.f32 %v4042, 1.0
        %v4053 = vadd.f32 %v4044, 1.0
        %v4054 = vadd.f32 %v4046, 1.0
        %v4055 = vrcp.pop %v4047
        %v4056 = vmul.f32 1.0, %v4055
        %v4057 = vrcp.pop %v4048
        %v4058 = vmul.f32 1.0, %v4057
        %v4059 = vrcp.pop %v4049
        %v4060 = vmul.f32 1.0, %v4059
        %v4061 = vrcp.pop %v4050
        %v4062 = vmul.f32 1.0, %v4061
        %v4063 = vrcp.pop %v4051
        %v4064 = vmul.f32 1.0, %v4063
        %v4065 = vrcp.pop %v4052
        %v4066 = vmul.f32 1.0, %v4065
        %v4067 = vrcp.pop %v4053
        %v4068 = vmul.f32 1.0, %v4067
        %v4069 = vrcp.pop %v4054
        %v4070 = vmul.f32 1.0, %v4069
        %v4071 = vmul.f32 %v3985, %v4056
        %v4072 = vmul.f32 %v3990, %v4058
        %v4073 = vmul.f32 %v3995, %v4060
        %v4074 = vmul.f32 %v4000, %v4062
        %v4075 = vmul.f32 %v4005, %v4064
        %v4076 = vmul.f32 %v4010, %v4066
        %v4077 = vmul.f32 %v4015, %v4068
        %v4078 = vmul.f32 %v4020, %v4070
        %v4079 = vadd.f32 %v1106, %v4071
        %v4080 = vadd.f32 %v1107, %v4072
        %v4081 = vadd.f32 %v1108, %v4073
        %v4082 = vadd.f32 %v1109, %v4074
        %v4083 = vadd.f32 %v1110, %v4075
        %v4084 = vadd.f32 %v1111, %v4076
        %v4085 = vadd.f32 %v1112, %v4077
        %v4086 = vadd.f32 %v1113, %v4078
        %v4087 = vadd.f32 %v4079, %v4080
        %v4088 = vadd.f32 %v4087, %v4081
        %v4089 = vadd.f32 %v4088, %v4082
        %v4090 = vrot.slane %v4089, 4
        %v4091 = vadd.f32 %v4089, %v4090
        %v4092 = vrot.slane %v4091, 2
        %v4093 = vadd.f32 %v4091, %v4092
        %v4094 = vrot.slane %v4093, 1
        %v4095 = vadd.f32 %v4093, %v4094
        %v4096 = vrcp.pop 32.0
        %v4097 = vmul.f32 %v4095, %v4096
        %v4098 = vsub.f32 %v4079, %v4097
        %v4099 = vsub.f32 %v4080, %v4097
        %v4100 = vsub.f32 %v4081, %v4097
        %v4101 = vsub.f32 %v4082, %v4097
        %v4102 = vmul.f32 %v4098, %v4098
        %v4103 = vmul.f32 %v4099, %v4099
        %v4104 = vmul.f32 %v4100, %v4100
        %v4105 = vmul.f32 %v4101, %v4101
        %v4106 = vadd.f32 %v4102, %v4103
        %v4107 = vadd.f32 %v4106, %v4104
        %v4108 = vadd.f32 %v4107, %v4105
        %v4109 = vrot.slane %v4108, 4
        %v4110 = vadd.f32 %v4108, %v4109
        %v4111 = vrot.slane %v4110, 2
        %v4112 = vadd.f32 %v4110, %v4111
        %v4113 = vrot.slane %v4112, 1
        %v4114 = vadd.f32 %v4112, %v4113
        %v4115 = vmul.f32 %v4114, %v4096
        %v4116 = vadd.f32 %v4115, 1e-05
        %v4117 = vrsqrt.pop %v4116
        %v4118 = vmul.f32 %v4098, %v4117
        %v4119 = vmul.f32 %v4099, %v4117
        %v4120 = vmul.f32 %v4100, %v4117
        %v4121 = vmul.f32 %v4101, %v4117
        %4122 = vst [vmem:[#allocation2] sm:$0xff] %v4118
        %4123 = vst [vmem:[#allocation2 + $0x8] sm:$0xff] %v4119
        %4124 = vst [vmem:[#allocation2 + $0x10] sm:$0xff] %v4120
        %4125 = vst [vmem:[#allocation2 + $0x18] sm:$0xff] %v4121
        %v4126 = vadd.f32 %v4083, %v4084
        %v4127 = vadd.f32 %v4126, %v4085
        %v4128 = vadd.f32 %v4127, %v4086
        %v4129 = vrot.slane %v4128, 4
        %v4130 = vadd.f32 %v4128, %v4129
        %v4131 = vrot.slane %v4130, 2
        %v4132 = vadd.f32 %v4130, %v4131
        %v4133 = vrot.slane %v4132, 1
        %v4134 = vadd.f32 %v4132, %v4133
        %v4135 = vmul.f32 %v4134, %v4096
        %v4136 = vsub.f32 %v4083, %v4135
        %v4137 = vsub.f32 %v4084, %v4135
        %v4138 = vsub.f32 %v4085, %v4135
        %v4139 = vsub.f32 %v4086, %v4135
        %v4140 = vmul.f32 %v4136, %v4136
        %v4141 = vmul.f32 %v4137, %v4137
        %v4142 = vmul.f32 %v4138, %v4138
        %v4143 = vmul.f32 %v4139, %v4139
        %v4144 = vadd.f32 %v4140, %v4141
        %v4145 = vadd.f32 %v4144, %v4142
        %v4146 = vadd.f32 %v4145, %v4143
        %v4147 = vrot.slane %v4146, 4
        %v4148 = vadd.f32 %v4146, %v4147
        %v4149 = vrot.slane %v4148, 2
        %v4150 = vadd.f32 %v4148, %v4149
        %v4151 = vrot.slane %v4150, 1
        %v4152 = vadd.f32 %v4150, %v4151
        %v4153 = vmul.f32 %v4152, %v4096
        %v4154 = vadd.f32 %v4153, 1e-05
        %v4155 = vrsqrt.pop %v4154
        %v4156 = vmul.f32 %v4136, %v4155
        %v4157 = vmul.f32 %v4137, %v4155
        %v4158 = vmul.f32 %v4138, %v4155
        %v4159 = vmul.f32 %v4139, %v4155
        %4160 = vst [vmem:[#allocation2 + $0x20] sm:$0xff] %v4156
        %4161 = vst [vmem:[#allocation2 + $0x28] sm:$0xff] %v4157
        %4162 = vst [vmem:[#allocation2 + $0x30] sm:$0xff] %v4158
        %4163 = vst [vmem:[#allocation2 + $0x38] sm:$0xff] %v4159
        %v4164 = vld [vmem:[#allocation2] sm:$0xff]
        %v4165 = vld [vmem:[#allocation2 + $0x8] sm:$0xff]
        %v4166 = vld [vmem:[#allocation2 + $0x10] sm:$0xff]
        %v4167 = vld [vmem:[#allocation2 + $0x18] sm:$0xff]
        %v4168 = vld [vmem:[#allocation2 + $0x20] sm:$0xff]
        %v4169 = vld [vmem:[#allocation2 + $0x28] sm:$0xff]
        %v4170 = vld [vmem:[#allocation2 + $0x30] sm:$0xff]
        %v4171 = vld [vmem:[#allocation2 + $0x38] sm:$0xff]
        %4172 = vst [vmem:[%s19] sm:$0xff] %v4164
        %4173 = vst [vmem:[%s19 + $0x8] sm:$0xff] %v4165
        %4174 = vst [vmem:[%s19 + $0x10] sm:$0xff] %v4166
        %4175 = vst [vmem:[%s19 + $0x18] sm:$0xff] %v4167
        %4176 = vst [vmem:[%s19 + $0x20] sm:$0xff] %v4168
        %4177 = vst [vmem:[%s19 + $0x28] sm:$0xff] %v4169
        %4178 = vst [vmem:[%s19 + $0x30] sm:$0xff] %v4170
        %4179 = vst [vmem:[%s19 + $0x38] sm:$0xff] %v4171
        // Predicated region
        $region105: #{_lambda_.2} parent=95 // pred_check
          %p4180 = pneg %p483
        $region106: #{_lambda_.2} parent=95 // pred_check_branch
          %4182 = sbr.rel (%p4180) target = $region108
        $region107: #{_lambda_.2} parent=95 // pred_region
          _
        $region108: #{_lambda_.2} parent=95 // pred_fallthru
          _
        // Predicated region
        $region109: #{_lambda_.2} parent=95 // pred_check
          %p4183 = pneg %p483
        $region110: #{_lambda_.2} parent=95 // pred_check_branch
          %4185 = sbr.rel (%p4183) target = $region112
        $region111: #{_lambda_.2} parent=95 // pred_region
          _
        $region112: #{_lambda_.2} parent=95 // pred_fallthru
          _
      $region96: #{_lambda_.2} parent=5 // pred_fallthru
        _
      %p4186 = scmp.le.s32.totalorder 2, %s26
      // Predicated region
      $region113: #{_lambda_.2} parent=5 // pred_check
        %p4187 = pneg %p4186
      $region114: #{_lambda_.2} parent=5 // pred_check_branch
        %4189 = sbr.rel (%p4187) target = $region116
      $region115: #{_lambda_.2} parent=5 // pred_region
        %s4190 = ssub.s32 %s26, 2
      $region116: #{_lambda_.2} parent=5 // pred_fallthru
        _
    $region6: #{_lambda_.2} parent=1 // loop_footer
      %s30 = sadd.s32 1, %s26
    $region7: #{_lambda_.2} parent=1 // loop_footer_branch
      %25 = sbr.rel target = $region3
    $region8: #{_lambda_.2} parent=1 // loop_exit
      _
    %4191 = vsyncpa [#allocation4], 1
    %s4192 = scalar_lea.sflag [#allocation4], 1
    %4193 = vsyncpa %s4192, 1

</llo_original>
